<compile_context>
chip_gen: v7x
topology: tpu7x:2x2x1
jax: 0.10.0
libtpu: 0.0.40
codegen_flags: <defaults>
</compile_context>

<pallas_src>
import functools

import jax
import jax.numpy as jnp
from jax.experimental import pallas as pl
from jax.experimental.pallas import tpu as pltpu

KSIZE = 11          # Conv1d kernel_size
PAD = 5             # Conv1d padding ("same")
LANE = 128          # TPU lane width; OUTPUT channels are zero-padded to a multiple of this
N_LAYERS = 3


def _fused_conv_kernel(x_ref, w_ref, b_ref, o_ref, pad_ref, *,
                       batch, seq_len, c_in, n_layers):
    """All batch elements through all conv layers, entirely in VMEM.

    x_ref:   (B, L, C)               input block (unpadded channels)
    w_ref:   (n_layers, K, C, CP)    bf16 weights, W[l, k, ci, co] (Cout zero-padded to CP)
    b_ref:   (n_layers, 1, CP)       f32 biases (zero-padded)
    o_ref:   (B, L, CP)              output block (lane-dense; wrapper slices back to C)
    pad_ref: (B, L + 2*PAD, C)       f32 scratch holding the "same"-padded activation
    """
    B, L, C = batch, seq_len, c_in
    CP = w_ref.shape[-1]

    # Zero only the halo rows once; they stay zero for every layer because the interior
    # rows are fully overwritten before each layer's taps are read.
    halo = jnp.zeros((PAD, C), jnp.float32)
    for b in range(B):
        pad_ref[b, 0:PAD, :] = halo
        pad_ref[b, PAD + L:PAD + L + PAD, :] = halo
        pad_ref[b, PAD:PAD + L, :] = x_ref[b].astype(jnp.float32)

    for layer in range(n_layers):
        # f32 accumulator initialized with the broadcast bias.
        acc = jnp.broadcast_to(b_ref[layer], (B * L, CP)).astype(jnp.float32)

        # K accumulating MXU dots; contraction depth = Cin (no channel zero-padding).
        for k in range(KSIZE):
            # (B*L, C) tap slab: per-batch shifted windows, concatenated along SUBLANES
            # (8-row aligned pieces), never along lanes.
            x_k = jnp.concatenate(
                [pad_ref[b, k:k + L, :] for b in range(B)], axis=0)
            acc = acc + jnp.dot(x_k.astype(jnp.bfloat16), w_ref[layer, k],
                                preferred_element_type=jnp.float32)

        if layer + 1 < n_layers:
            # Feed the next layer: overwrite only the interior rows (halo stays zero),
            # keeping just the real C channels (padded output lanes carry zero weights).
            for b in range(B):
                pad_ref[b, PAD:PAD + L, :] = acc[b * L:(b + 1) * L, 0:C]
        else:
            # Final layer: lane-dense (L, 128) store per batch element.
            for b in range(B):
                o_ref[b] = acc[b * L:(b + 1) * L, :].astype(o_ref.dtype)


def prepare_params(params):
    """One-time prep (call at init, NOT per forward):
    torch-layout (Cout, Cin, K) f32 weights -> stacked bf16 (n, K, Cin, CP) with Cout
    zero-padded to the 128-lane width, plus stacked f32 (n, 1, CP) biases."""
    w_list, b_list = [], []
    for w, b in params:
        cout, cin, k = w.shape
        cp = ((cout + LANE - 1) // LANE) * LANE
        wt = jnp.transpose(w, (2, 1, 0))                     # (K, Cin, Cout)
        wt = jnp.pad(wt, ((0, 0), (0, 0), (0, cp - cout)))   # Cout -> CP lanes
        w_list.append(wt.astype(jnp.bfloat16))               # (K, Cin, CP) bf16
        b_list.append(jnp.pad(b, (0, cp - cout)).reshape(1, cp).astype(jnp.float32))
    return jnp.stack(w_list), jnp.stack(b_list)


@jax.jit
def landmark_embedding(x, w_all, b_all):
    """Forward pass of LandmarkEmbedding. x: (B, L, C) channels-last (the module permutes
    to NCL and back around the convs, so channels-last in/out matches its semantics)."""
    B, L, C = x.shape
    n_layers, K, c_in, cp = w_all.shape
    l_pad = L + 2 * PAD

    kernel = functools.partial(
        _fused_conv_kernel, batch=B, seq_len=L, c_in=C, n_layers=n_layers)

    out_padded = pl.pallas_call(
        kernel,
        out_shape=jax.ShapeDtypeStruct((B, L, cp), x.dtype),
        grid_spec=pltpu.PrefetchScalarGridSpec(
            num_scalar_prefetch=0,
            # Single grid step: batch is folded into the block.  At B=2 a parallel batch
            # grid would duplicate the (dominant) weight DMA on both TensorCores and pay
            # per-step overhead for no compute gain.
            grid=(1,),
            in_specs=[
                pl.BlockSpec((B, L, C), lambda i: (0, 0, 0)),
                pl.BlockSpec((n_layers, K, c_in, cp), lambda i: (0, 0, 0, 0)),
                pl.BlockSpec((n_layers, 1, cp), lambda i: (0, 0, 0)),
            ],
            out_specs=pl.BlockSpec((B, L, cp), lambda i: (0, 0, 0)),
            scratch_shapes=[pltpu.VMEM((B, l_pad, C), jnp.float32)],
        ),
        compiler_params=pltpu.CompilerParams(
            dimension_semantics=("arbitrary",)),
    )(x, w_all, b_all)

    return out_padded[:, :, :C]      # drop the lane padding (tiny copy, fuses under jit)


def landmark_embedding_ref(x, params):
    """Pure-JAX f32 reference (mirrors the PyTorch forward semantics)."""
    for (w, b) in params:
        L = x.shape[1]
        x_pad = jnp.pad(x, ((0, 0), (PAD, PAD), (0, 0)))
        taps = jnp.stack([x_pad[:, k:k + L, :] for k in range(KSIZE)], axis=0)  # (K,B,L,Ci)
        x = jnp.einsum("kblc,ock->blo", taps, w) + b[None, None, :]
    return x


def init_params(key, embed_dim):
    """Deterministic init mimicking PyTorch Conv1d default (uniform +-1/sqrt(fan_in))."""
    params = []
    fan_in = embed_dim * KSIZE
    bound = 1.0 / jnp.sqrt(fan_in)
    for _ in range(N_LAYERS):
        kw, kb, key = jax.random.split(key, 3)
        w = jax.random.uniform(kw, (embed_dim, embed_dim, KSIZE),
                               jnp.float32, -bound, bound)
        b = jax.random.uniform(kb, (embed_dim,), jnp.float32, -bound, bound)
        params.append((w, b))
    return params


if __name__ == "__main__":
    embed_dim = 32   # channel / embedding dim
    maxlen = 8       # sequence length
    batch = 2

    key = jax.random.PRNGKey(0)
    kx, kp = jax.random.split(key)
    x = jax.random.normal(kx, (batch, maxlen, embed_dim), jnp.float32)
    params = init_params(kp, embed_dim)

    # One-time parameter prep, hoisted out of the per-call forward (perf review item 1+2).
    w_all, b_all = prepare_params(params)

    out = jax.block_until_ready(landmark_embedding(x, w_all, b_all))
    assert out.shape == (batch, maxlen, embed_dim)

    # (1) Kernel-math check against a reference using the SAME bf16-quantized weights
    #     (isolates the kernel structure from the intentional bf16 weight storage).
    params_q = [(w.astype(jnp.bfloat16).astype(jnp.float32), b) for (w, b) in params]
    ref_q = landmark_embedding_ref(x, params_q)
    assert jnp.allclose(out, ref_q, atol=1e-2, rtol=1e-2), \
        float(jnp.max(jnp.abs(out - ref_q)))

    # (2) Module-level semantics check vs. the exact f32 reference; tolerance covers the
    #     bf16 weight storage + bf16 MXU inputs requested by the perf review.
    ref = landmark_embedding_ref(x, params)
    assert jnp.allclose(out, ref, atol=3e-2, rtol=3e-2), \
        float(jnp.max(jnp.abs(out - ref)))

    print("KERNEL_OK")
</pallas_src>

<mosaic_0001>
module attributes {stable_mosaic.version = 11 : i64} {
  func.func @_fused_conv_kernel(%arg0: i32, %arg1: memref<2x8x32xf32, #tpu.memory_space<vmem>>, %arg2: memref<3x11x32x128xbf16, #tpu.memory_space<vmem>>, %arg3: memref<3x1x128xf32, #tpu.memory_space<vmem>>, %arg4: memref<2x8x128xf32, #tpu.memory_space<vmem>>, %arg5: memref<2x18x32xf32, #tpu.memory_space<vmem>>) attributes {dimension_semantics = [#tpu.dimension_semantics<arbitrary>], iteration_bounds = array<i64: 1>, scalar_prefetch = 0 : i64, scratch_operands = 1 : i64, tpu.core_type = #tpu.core_type<tc>, window_params = [{pipeline_mode = #tpu.pipeline_mode<synchronous>, transform_indices = @transform_0, window_bounds = array<i64: 2, 8, 32>}, {pipeline_mode = #tpu.pipeline_mode<synchronous>, transform_indices = @transform_1, window_bounds = array<i64: 3, 11, 32, 128>}, {pipeline_mode = #tpu.pipeline_mode<synchronous>, transform_indices = @transform_2, window_bounds = array<i64: 3, 1, 128>}, {pipeline_mode = #tpu.pipeline_mode<synchronous>, transform_indices = @transform_3, window_bounds = array<i64: 2, 8, 128>}]} {
    %cst = arith.constant 0.000000e+00 : f32
    %0 = vector.broadcast %cst : f32 to vector<5x32xf32>
    %c0 = arith.constant 0 : index
    %c0_0 = arith.constant 0 : index
    %c0_1 = arith.constant 0 : index
    %1 = vector.load %arg5[%c0, %c0_0, %c0_1] : memref<2x18x32xf32, #tpu.memory_space<vmem>>, vector<1x5x32xf32>
    %2 = vector.shape_cast %1 : vector<1x5x32xf32> to vector<5x32xf32>
    %3 = vector.shape_cast %0 : vector<5x32xf32> to vector<1x5x32xf32>
    tpu.vector_store %arg5[%c0, %c0_0, %c0_1], %3 {strides = array<i32>} : memref<2x18x32xf32, #tpu.memory_space<vmem>>, vector<1x5x32xf32>,
    %c0_2 = arith.constant 0 : index
    %c13 = arith.constant 13 : index
    %c0_3 = arith.constant 0 : index
    %4 = vector.load %arg5[%c0_2, %c13, %c0_3] : memref<2x18x32xf32, #tpu.memory_space<vmem>>, vector<1x5x32xf32>
    %5 = vector.shape_cast %4 : vector<1x5x32xf32> to vector<5x32xf32>
    %6 = vector.shape_cast %0 : vector<5x32xf32> to vector<1x5x32xf32>
    tpu.vector_store %arg5[%c0_2, %c13, %c0_3], %6 {strides = array<i32>} : memref<2x18x32xf32, #tpu.memory_space<vmem>>, vector<1x5x32xf32>,
    %c0_4 = arith.constant 0 : index
    %c0_5 = arith.constant 0 : index
    %c0_6 = arith.constant 0 : index
    %7 = vector.load %arg1[%c0_4, %c0_5, %c0_6] : memref<2x8x32xf32, #tpu.memory_space<vmem>>, vector<1x8x32xf32>
    %8 = vector.shape_cast %7 : vector<1x8x32xf32> to vector<8x32xf32>
    %c0_7 = arith.constant 0 : index
    %c5 = arith.constant 5 : index
    %c0_8 = arith.constant 0 : index
    %9 = vector.load %arg5[%c0_7, %c5, %c0_8] : memref<2x18x32xf32, #tpu.memory_space<vmem>>, vector<1x8x32xf32>
    %10 = vector.shape_cast %9 : vector<1x8x32xf32> to vector<8x32xf32>
    %11 = vector.shape_cast %8 : vector<8x32xf32> to vector<1x8x32xf32>
    tpu.vector_store %arg5[%c0_7, %c5, %c0_8], %11 {strides = array<i32>} : memref<2x18x32xf32, #tpu.memory_space<vmem>>, vector<1x8x32xf32>,
    %c1 = arith.constant 1 : index
    %c0_9 = arith.constant 0 : index
    %c0_10 = arith.constant 0 : index
    %12 = vector.load %arg5[%c1, %c0_9, %c0_10] : memref<2x18x32xf32, #tpu.memory_space<vmem>>, vector<1x5x32xf32>
    %13 = vector.shape_cast %12 : vector<1x5x32xf32> to vector<5x32xf32>
    %14 = vector.shape_cast %0 : vector<5x32xf32> to vector<1x5x32xf32>
    tpu.vector_store %arg5[%c1, %c0_9, %c0_10], %14 {strides = array<i32>} : memref<2x18x32xf32, #tpu.memory_space<vmem>>, vector<1x5x32xf32>,
    %c1_11 = arith.constant 1 : index
    %c13_12 = arith.constant 13 : index
    %c0_13 = arith.constant 0 : index
    %15 = vector.load %arg5[%c1_11, %c13_12, %c0_13] : memref<2x18x32xf32, #tpu.memory_space<vmem>>, vector<1x5x32xf32>
    %16 = vector.shape_cast %15 : vector<1x5x32xf32> to vector<5x32xf32>
    %17 = vector.shape_cast %0 : vector<5x32xf32> to vector<1x5x32xf32>
    tpu.vector_store %arg5[%c1_11, %c13_12, %c0_13], %17 {strides = array<i32>} : memref<2x18x32xf32, #tpu.memory_space<vmem>>, vector<1x5x32xf32>,
    %c1_14 = arith.constant 1 : index
    %c0_15 = arith.constant 0 : index
    %c0_16 = arith.constant 0 : index
    %18 = vector.load %arg1[%c1_14, %c0_15, %c0_16] : memref<2x8x32xf32, #tpu.memory_space<vmem>>, vector<1x8x32xf32>
    %19 = vector.shape_cast %18 : vector<1x8x32xf32> to vector<8x32xf32>
    %c1_17 = arith.constant 1 : index
    %c5_18 = arith.constant 5 : index
    %c0_19 = arith.constant 0 : index
    %20 = vector.load %arg5[%c1_17, %c5_18, %c0_19] : memref<2x18x32xf32, #tpu.memory_space<vmem>>, vector<1x8x32xf32>
    %21 = vector.shape_cast %20 : vector<1x8x32xf32> to vector<8x32xf32>
    %22 = vector.shape_cast %19 : vector<8x32xf32> to vector<1x8x32xf32>
    tpu.vector_store %arg5[%c1_17, %c5_18, %c0_19], %22 {strides = array<i32>} : memref<2x18x32xf32, #tpu.memory_space<vmem>>, vector<1x8x32xf32>,
    %c0_20 = arith.constant 0 : index
    %c0_21 = arith.constant 0 : index
    %c0_22 = arith.constant 0 : index
    %23 = vector.load %arg3[%c0_20, %c0_21, %c0_22] : memref<3x1x128xf32, #tpu.memory_space<vmem>>, vector<1x1x128xf32>
    %24 = vector.shape_cast %23 : vector<1x1x128xf32> to vector<1x128xf32>
    %25 = vector.shape_cast %24 : vector<1x128xf32> to vector<1x128xf32>
    %26 = vector.broadcast %25 : vector<1x128xf32> to vector<16x128xf32>
    %c0_23 = arith.constant 0 : index
    %c0_24 = arith.constant 0 : index
    %c0_25 = arith.constant 0 : index
    %27 = vector.load %arg5[%c0_23, %c0_24, %c0_25] : memref<2x18x32xf32, #tpu.memory_space<vmem>>, vector<1x8x32xf32>
    %28 = vector.shape_cast %27 : vector<1x8x32xf32> to vector<8x32xf32>
    %c1_26 = arith.constant 1 : index
    %c0_27 = arith.constant 0 : index
    %c0_28 = arith.constant 0 : index
    %29 = vector.load %arg5[%c1_26, %c0_27, %c0_28] : memref<2x18x32xf32, #tpu.memory_space<vmem>>, vector<1x8x32xf32>
    %30 = vector.shape_cast %29 : vector<1x8x32xf32> to vector<8x32xf32>
    %31 = tpu.concatenate %28, %30 in 0 : vector<8x32xf32>, vector<8x32xf32> -> vector<16x32xf32>
    %32 = arith.truncf %31 : vector<16x32xf32> to vector<16x32xbf16>
    %c0_29 = arith.constant 0 : index
    %c0_30 = arith.constant 0 : index
    %c0_31 = arith.constant 0 : index
    %c0_32 = arith.constant 0 : index
    %33 = vector.load %arg2[%c0_29, %c0_30, %c0_31, %c0_32] : memref<3x11x32x128xbf16, #tpu.memory_space<vmem>>, vector<1x1x32x128xbf16>
    %34 = vector.shape_cast %33 : vector<1x1x32x128xbf16> to vector<32x128xbf16>
    %cst_33 = arith.constant dense<0.000000e+00> : vector<16x128xf32>
    %35 = tpu.matmul %32, %34, %cst_33 {dimension_numbers = #tpu.dot_dimension_numbers<[1], [0], [0], [1], [0, 0, 1, 1], [], []>} : vector<16x32xbf16>, vector<32x128xbf16>, vector<16x128xf32> -> vector<16x128xf32>
    %36 = arith.addf %26, %35 : vector<16x128xf32>
    %c0_34 = arith.constant 0 : index
    %c1_35 = arith.constant 1 : index
    %c0_36 = arith.constant 0 : index
    %37 = vector.load %arg5[%c0_34, %c1_35, %c0_36] : memref<2x18x32xf32, #tpu.memory_space<vmem>>, vector<1x8x32xf32>
    %38 = vector.shape_cast %37 : vector<1x8x32xf32> to vector<8x32xf32>
    %c1_37 = arith.constant 1 : index
    %c1_38 = arith.constant 1 : index
    %c0_39 = arith.constant 0 : index
    %39 = vector.load %arg5[%c1_37, %c1_38, %c0_39] : memref<2x18x32xf32, #tpu.memory_space<vmem>>, vector<1x8x32xf32>
    %40 = vector.shape_cast %39 : vector<1x8x32xf32> to vector<8x32xf32>
    %41 = tpu.concatenate %38, %40 in 0 : vector<8x32xf32>, vector<8x32xf32> -> vector<16x32xf32>
    %42 = arith.truncf %41 : vector<16x32xf32> to vector<16x32xbf16>
    %c0_40 = arith.constant 0 : index
    %c1_41 = arith.constant 1 : index
    %c0_42 = arith.constant 0 : index
    %c0_43 = arith.constant 0 : index
    %43 = vector.load %arg2[%c0_40, %c1_41, %c0_42, %c0_43] : memref<3x11x32x128xbf16, #tpu.memory_space<vmem>>, vector<1x1x32x128xbf16>
    %44 = vector.shape_cast %43 : vector<1x1x32x128xbf16> to vector<32x128xbf16>
    %cst_44 = arith.constant dense<0.000000e+00> : vector<16x128xf32>
    %45 = tpu.matmul %42, %44, %cst_44 {dimension_numbers = #tpu.dot_dimension_numbers<[1], [0], [0], [1], [0, 0, 1, 1], [], []>} : vector<16x32xbf16>, vector<32x128xbf16>, vector<16x128xf32> -> vector<16x128xf32>
    %46 = arith.addf %36, %45 : vector<16x128xf32>
    %c0_45 = arith.constant 0 : index
    %c2 = arith.constant 2 : index
    %c0_46 = arith.constant 0 : index
    %47 = vector.load %arg5[%c0_45, %c2, %c0_46] : memref<2x18x32xf32, #tpu.memory_space<vmem>>, vector<1x8x32xf32>
    %48 = vector.shape_cast %47 : vector<1x8x32xf32> to vector<8x32xf32>
    %c1_47 = arith.constant 1 : index
    %c2_48 = arith.constant 2 : index
    %c0_49 = arith.constant 0 : index
    %49 = vector.load %arg5[%c1_47, %c2_48, %c0_49] : memref<2x18x32xf32, #tpu.memory_space<vmem>>, vector<1x8x32xf32>
    %50 = vector.shape_cast %49 : vector<1x8x32xf32> to vector<8x32xf32>
    %51 = tpu.concatenate %48, %50 in 0 : vector<8x32xf32>, vector<8x32xf32> -> vector<16x32xf32>
    %52 = arith.truncf %51 : vector<16x32xf32> to vector<16x32xbf16>
    %c0_50 = arith.constant 0 : index
    %c2_51 = arith.constant 2 : index
    %c0_52 = arith.constant 0 : index
    %c0_53 = arith.constant 0 : index
    %53 = vector.load %arg2[%c0_50, %c2_51, %c0_52, %c0_53] : memref<3x11x32x128xbf16, #tpu.memory_space<vmem>>, vector<1x1x32x128xbf16>
    %54 = vector.shape_cast %53 : vector<1x1x32x128xbf16> to vector<32x128xbf16>
    %cst_54 = arith.constant dense<0.000000e+00> : vector<16x128xf32>
    %55 = tpu.matmul %52, %54, %cst_54 {dimension_numbers = #tpu.dot_dimension_numbers<[1], [0], [0], [1], [0, 0, 1, 1], [], []>} : vector<16x32xbf16>, vector<32x128xbf16>, vector<16x128xf32> -> vector<16x128xf32>
    %56 = arith.addf %46, %55 : vector<16x128xf32>
    %c0_55 = arith.constant 0 : index
    %c3 = arith.constant 3 : index
    %c0_56 = arith.constant 0 : index
    %57 = vector.load %arg5[%c0_55, %c3, %c0_56] : memref<2x18x32xf32, #tpu.memory_space<vmem>>, vector<1x8x32xf32>
    %58 = vector.shape_cast %57 : vector<1x8x32xf32> to vector<8x32xf32>
    %c1_57 = arith.constant 1 : index
    %c3_58 = arith.constant 3 : index
    %c0_59 = arith.constant 0 : index
    %59 = vector.load %arg5[%c1_57, %c3_58, %c0_59] : memref<2x18x32xf32, #tpu.memory_space<vmem>>, vector<1x8x32xf32>
    %60 = vector.shape_cast %59 : vector<1x8x32xf32> to vector<8x32xf32>
    %61 = tpu.concatenate %58, %60 in 0 : vector<8x32xf32>, vector<8x32xf32> -> vector<16x32xf32>
    %62 = arith.truncf %61 : vector<16x32xf32> to vector<16x32xbf16>
    %c0_60 = arith.constant 0 : index
    %c3_61 = arith.constant 3 : index
    %c0_62 = arith.constant 0 : index
    %c0_63 = arith.constant 0 : index
    %63 = vector.load %arg2[%c0_60, %c3_61, %c0_62, %c0_63] : memref<3x11x32x128xbf16, #tpu.memory_space<vmem>>, vector<1x1x32x128xbf16>
    %64 = vector.shape_cast %63 : vector<1x1x32x128xbf16> to vector<32x128xbf16>
    %cst_64 = arith.constant dense<0.000000e+00> : vector<16x128xf32>
    %65 = tpu.matmul %62, %64, %cst_64 {dimension_numbers = #tpu.dot_dimension_numbers<[1], [0], [0], [1], [0, 0, 1, 1], [], []>} : vector<16x32xbf16>, vector<32x128xbf16>, vector<16x128xf32> -> vector<16x128xf32>
    %66 = arith.addf %56, %65 : vector<16x128xf32>
    %c0_65 = arith.constant 0 : index
    %c4 = arith.constant 4 : index
    %c0_66 = arith.constant 0 : index
    %67 = vector.load %arg5[%c0_65, %c4, %c0_66] : memref<2x18x32xf32, #tpu.memory_space<vmem>>, vector<1x8x32xf32>
    %68 = vector.shape_cast %67 : vector<1x8x32xf32> to vector<8x32xf32>
    %c1_67 = arith.constant 1 : index
    %c4_68 = arith.constant 4 : index
    %c0_69 = arith.constant 0 : index
    %69 = vector.load %arg5[%c1_67, %c4_68, %c0_69] : memref<2x18x32xf32, #tpu.memory_space<vmem>>, vector<1x8x32xf32>
    %70 = vector.shape_cast %69 : vector<1x8x32xf32> to vector<8x32xf32>
    %71 = tpu.concatenate %68, %70 in 0 : vector<8x32xf32>, vector<8x32xf32> -> vector<16x32xf32>
    %72 = arith.truncf %71 : vector<16x32xf32> to vector<16x32xbf16>
    %c0_70 = arith.constant 0 : index
    %c4_71 = arith.constant 4 : index
    %c0_72 = arith.constant 0 : index
    %c0_73 = arith.constant 0 : index
    %73 = vector.load %arg2[%c0_70, %c4_71, %c0_72, %c0_73] : memref<3x11x32x128xbf16, #tpu.memory_space<vmem>>, vector<1x1x32x128xbf16>
    %74 = vector.shape_cast %73 : vector<1x1x32x128xbf16> to vector<32x128xbf16>
    %cst_74 = arith.constant dense<0.000000e+00> : vector<16x128xf32>
    %75 = tpu.matmul %72, %74, %cst_74 {dimension_numbers = #tpu.dot_dimension_numbers<[1], [0], [0], [1], [0, 0, 1, 1], [], []>} : vector<16x32xbf16>, vector<32x128xbf16>, vector<16x128xf32> -> vector<16x128xf32>
    %76 = arith.addf %66, %75 : vector<16x128xf32>
    %c0_75 = arith.constant 0 : index
    %c5_76 = arith.constant 5 : index
    %c0_77 = arith.constant 0 : index
    %77 = vector.load %arg5[%c0_75, %c5_76, %c0_77] : memref<2x18x32xf32, #tpu.memory_space<vmem>>, vector<1x8x32xf32>
    %78 = vector.shape_cast %77 : vector<1x8x32xf32> to vector<8x32xf32>
    %c1_78 = arith.constant 1 : index
    %c5_79 = arith.constant 5 : index
    %c0_80 = arith.constant 0 : index
    %79 = vector.load %arg5[%c1_78, %c5_79, %c0_80] : memref<2x18x32xf32, #tpu.memory_space<vmem>>, vector<1x8x32xf32>
    %80 = vector.shape_cast %79 : vector<1x8x32xf32> to vector<8x32xf32>
    %81 = tpu.concatenate %78, %80 in 0 : vector<8x32xf32>, vector<8x32xf32> -> vector<16x32xf32>
    %82 = arith.truncf %81 : vector<16x32xf32> to vector<16x32xbf16>
    %c0_81 = arith.constant 0 : index
    %c5_82 = arith.constant 5 : index
    %c0_83 = arith.constant 0 : index
    %c0_84 = arith.constant 0 : index
    %83 = vector.load %arg2[%c0_81, %c5_82, %c0_83, %c0_84] : memref<3x11x32x128xbf16, #tpu.memory_space<vmem>>, vector<1x1x32x128xbf16>
    %84 = vector.shape_cast %83 : vector<1x1x32x128xbf16> to vector<32x128xbf16>
    %cst_85 = arith.constant dense<0.000000e+00> : vector<16x128xf32>
    %85 = tpu.matmul %82, %84, %cst_85 {dimension_numbers = #tpu.dot_dimension_numbers<[1], [0], [0], [1], [0, 0, 1, 1], [], []>} : vector<16x32xbf16>, vector<32x128xbf16>, vector<16x128xf32> -> vector<16x128xf32>
    %86 = arith.addf %76, %85 : vector<16x128xf32>
    %c0_86 = arith.constant 0 : index
    %c6 = arith.constant 6 : index
    %c0_87 = arith.constant 0 : index
    %87 = vector.load %arg5[%c0_86, %c6, %c0_87] : memref<2x18x32xf32, #tpu.memory_space<vmem>>, vector<1x8x32xf32>
    %88 = vector.shape_cast %87 : vector<1x8x32xf32> to vector<8x32xf32>
    %c1_88 = arith.constant 1 : index
    %c6_89 = arith.constant 6 : index
    %c0_90 = arith.constant 0 : index
    %89 = vector.load %arg5[%c1_88, %c6_89, %c0_90] : memref<2x18x32xf32, #tpu.memory_space<vmem>>, vector<1x8x32xf32>
    %90 = vector.shape_cast %89 : vector<1x8x32xf32> to vector<8x32xf32>
    %91 = tpu.concatenate %88, %90 in 0 : vector<8x32xf32>, vector<8x32xf32> -> vector<16x32xf32>
    %92 = arith.truncf %91 : vector<16x32xf32> to vector<16x32xbf16>
    %c0_91 = arith.constant 0 : index
    %c6_92 = arith.constant 6 : index
    %c0_93 = arith.constant 0 : index
    %c0_94 = arith.constant 0 : index
    %93 = vector.load %arg2[%c0_91, %c6_92, %c0_93, %c0_94] : memref<3x11x32x128xbf16, #tpu.memory_space<vmem>>, vector<1x1x32x128xbf16>
    %94 = vector.shape_cast %93 : vector<1x1x32x128xbf16> to vector<32x128xbf16>
    %cst_95 = arith.constant dense<0.000000e+00> : vector<16x128xf32>
    %95 = tpu.matmul %92, %94, %cst_95 {dimension_numbers = #tpu.dot_dimension_numbers<[1], [0], [0], [1], [0, 0, 1, 1], [], []>} : vector<16x32xbf16>, vector<32x128xbf16>, vector<16x128xf32> -> vector<16x128xf32>
    %96 = arith.addf %86, %95 : vector<16x128xf32>
    %c0_96 = arith.constant 0 : index
    %c7 = arith.constant 7 : index
    %c0_97 = arith.constant 0 : index
    %97 = vector.load %arg5[%c0_96, %c7, %c0_97] : memref<2x18x32xf32, #tpu.memory_space<vmem>>, vector<1x8x32xf32>
    %98 = vector.shape_cast %97 : vector<1x8x32xf32> to vector<8x32xf32>
    %c1_98 = arith.constant 1 : index
    %c7_99 = arith.constant 7 : index
    %c0_100 = arith.constant 0 : index
    %99 = vector.load %arg5[%c1_98, %c7_99, %c0_100] : memref<2x18x32xf32, #tpu.memory_space<vmem>>, vector<1x8x32xf32>
    %100 = vector.shape_cast %99 : vector<1x8x32xf32> to vector<8x32xf32>
    %101 = tpu.concatenate %98, %100 in 0 : vector<8x32xf32>, vector<8x32xf32> -> vector<16x32xf32>
    %102 = arith.truncf %101 : vector<16x32xf32> to vector<16x32xbf16>
    %c0_101 = arith.constant 0 : index
    %c7_102 = arith.constant 7 : index
    %c0_103 = arith.constant 0 : index
    %c0_104 = arith.constant 0 : index
    %103 = vector.load %arg2[%c0_101, %c7_102, %c0_103, %c0_104] : memref<3x11x32x128xbf16, #tpu.memory_space<vmem>>, vector<1x1x32x128xbf16>
    %104 = vector.shape_cast %103 : vector<1x1x32x128xbf16> to vector<32x128xbf16>
    %cst_105 = arith.constant dense<0.000000e+00> : vector<16x128xf32>
    %105 = tpu.matmul %102, %104, %cst_105 {dimension_numbers = #tpu.dot_dimension_numbers<[1], [0], [0], [1], [0, 0, 1, 1], [], []>} : vector<16x32xbf16>, vector<32x128xbf16>, vector<16x128xf32> -> vector<16x128xf32>
    %106 = arith.addf %96, %105 : vector<16x128xf32>
    %c0_106 = arith.constant 0 : index
    %c8 = arith.constant 8 : index
    %c0_107 = arith.constant 0 : index
    %107 = vector.load %arg5[%c0_106, %c8, %c0_107] : memref<2x18x32xf32, #tpu.memory_space<vmem>>, vector<1x8x32xf32>
    %108 = vector.shape_cast %107 : vector<1x8x32xf32> to vector<8x32xf32>
    %c1_108 = arith.constant 1 : index
    %c8_109 = arith.constant 8 : index
    %c0_110 = arith.constant 0 : index
    %109 = vector.load %arg5[%c1_108, %c8_109, %c0_110] : memref<2x18x32xf32, #tpu.memory_space<vmem>>, vector<1x8x32xf32>
    %110 = vector.shape_cast %109 : vector<1x8x32xf32> to vector<8x32xf32>
    %111 = tpu.concatenate %108, %110 in 0 : vector<8x32xf32>, vector<8x32xf32> -> vector<16x32xf32>
    %112 = arith.truncf %111 : vector<16x32xf32> to vector<16x32xbf16>
    %c0_111 = arith.constant 0 : index
    %c8_112 = arith.constant 8 : index
    %c0_113 = arith.constant 0 : index
    %c0_114 = arith.constant 0 : index
    %113 = vector.load %arg2[%c0_111, %c8_112, %c0_113, %c0_114] : memref<3x11x32x128xbf16, #tpu.memory_space<vmem>>, vector<1x1x32x128xbf16>
    %114 = vector.shape_cast %113 : vector<1x1x32x128xbf16> to vector<32x128xbf16>
    %cst_115 = arith.constant dense<0.000000e+00> : vector<16x128xf32>
    %115 = tpu.matmul %112, %114, %cst_115 {dimension_numbers = #tpu.dot_dimension_numbers<[1], [0], [0], [1], [0, 0, 1, 1], [], []>} : vector<16x32xbf16>, vector<32x128xbf16>, vector<16x128xf32> -> vector<16x128xf32>
    %116 = arith.addf %106, %115 : vector<16x128xf32>
    %c0_116 = arith.constant 0 : index
    %c9 = arith.constant 9 : index
    %c0_117 = arith.constant 0 : index
    %117 = vector.load %arg5[%c0_116, %c9, %c0_117] : memref<2x18x32xf32, #tpu.memory_space<vmem>>, vector<1x8x32xf32>
    %118 = vector.shape_cast %117 : vector<1x8x32xf32> to vector<8x32xf32>
    %c1_118 = arith.constant 1 : index
    %c9_119 = arith.constant 9 : index
    %c0_120 = arith.constant 0 : index
    %119 = vector.load %arg5[%c1_118, %c9_119, %c0_120] : memref<2x18x32xf32, #tpu.memory_space<vmem>>, vector<1x8x32xf32>
    %120 = vector.shape_cast %119 : vector<1x8x32xf32> to vector<8x32xf32>
    %121 = tpu.concatenate %118, %120 in 0 : vector<8x32xf32>, vector<8x32xf32> -> vector<16x32xf32>
    %122 = arith.truncf %121 : vector<16x32xf32> to vector<16x32xbf16>
    %c0_121 = arith.constant 0 : index
    %c9_122 = arith.constant 9 : index
    %c0_123 = arith.constant 0 : index
    %c0_124 = arith.constant 0 : index
    %123 = vector.load %arg2[%c0_121, %c9_122, %c0_123, %c0_124] : memref<3x11x32x128xbf16, #tpu.memory_space<vmem>>, vector<1x1x32x128xbf16>
    %124 = vector.shape_cast %123 : vector<1x1x32x128xbf16> to vector<32x128xbf16>
    %cst_125 = arith.constant dense<0.000000e+00> : vector<16x128xf32>
    %125 = tpu.matmul %122, %124, %cst_125 {dimension_numbers = #tpu.dot_dimension_numbers<[1], [0], [0], [1], [0, 0, 1, 1], [], []>} : vector<16x32xbf16>, vector<32x128xbf16>, vector<16x128xf32> -> vector<16x128xf32>
    %126 = arith.addf %116, %125 : vector<16x128xf32>
    %c0_126 = arith.constant 0 : index
    %c10 = arith.constant 10 : index
    %c0_127 = arith.constant 0 : index
    %127 = vector.load %arg5[%c0_126, %c10, %c0_127] : memref<2x18x32xf32, #tpu.memory_space<vmem>>, vector<1x8x32xf32>
    %128 = vector.shape_cast %127 : vector<1x8x32xf32> to vector<8x32xf32>
    %c1_128 = arith.constant 1 : index
    %c10_129 = arith.constant 10 : index
    %c0_130 = arith.constant 0 : index
    %129 = vector.load %arg5[%c1_128, %c10_129, %c0_130] : memref<2x18x32xf32, #tpu.memory_space<vmem>>, vector<1x8x32xf32>
    %130 = vector.shape_cast %129 : vector<1x8x32xf32> to vector<8x32xf32>
    %131 = tpu.concatenate %128, %130 in 0 : vector<8x32xf32>, vector<8x32xf32> -> vector<16x32xf32>
    %132 = arith.truncf %131 : vector<16x32xf32> to vector<16x32xbf16>
    %c0_131 = arith.constant 0 : index
    %c10_132 = arith.constant 10 : index
    %c0_133 = arith.constant 0 : index
    %c0_134 = arith.constant 0 : index
    %133 = vector.load %arg2[%c0_131, %c10_132, %c0_133, %c0_134] : memref<3x11x32x128xbf16, #tpu.memory_space<vmem>>, vector<1x1x32x128xbf16>
    %134 = vector.shape_cast %133 : vector<1x1x32x128xbf16> to vector<32x128xbf16>
    %cst_135 = arith.constant dense<0.000000e+00> : vector<16x128xf32>
    %135 = tpu.matmul %132, %134, %cst_135 {dimension_numbers = #tpu.dot_dimension_numbers<[1], [0], [0], [1], [0, 0, 1, 1], [], []>} : vector<16x32xbf16>, vector<32x128xbf16>, vector<16x128xf32> -> vector<16x128xf32>
    %136 = arith.addf %126, %135 : vector<16x128xf32>
    %137 = vector.extract_strided_slice %136 {offsets = [0, 0], sizes = [8, 32], strides = [1, 1]} : vector<16x128xf32> to vector<8x32xf32>
    %c0_136 = arith.constant 0 : index
    %c5_137 = arith.constant 5 : index
    %c0_138 = arith.constant 0 : index
    %138 = vector.load %arg5[%c0_136, %c5_137, %c0_138] : memref<2x18x32xf32, #tpu.memory_space<vmem>>, vector<1x8x32xf32>
    %139 = vector.shape_cast %138 : vector<1x8x32xf32> to vector<8x32xf32>
    %140 = vector.shape_cast %137 : vector<8x32xf32> to vector<1x8x32xf32>
    tpu.vector_store %arg5[%c0_136, %c5_137, %c0_138], %140 {strides = array<i32>} : memref<2x18x32xf32, #tpu.memory_space<vmem>>, vector<1x8x32xf32>,
    %141 = vector.extract_strided_slice %136 {offsets = [8, 0], sizes = [8, 32], strides = [1, 1]} : vector<16x128xf32> to vector<8x32xf32>
    %c1_139 = arith.constant 1 : index
    %c5_140 = arith.constant 5 : index
    %c0_141 = arith.constant 0 : index
    %142 = vector.load %arg5[%c1_139, %c5_140, %c0_141] : memref<2x18x32xf32, #tpu.memory_space<vmem>>, vector<1x8x32xf32>
    %143 = vector.shape_cast %142 : vector<1x8x32xf32> to vector<8x32xf32>
    %144 = vector.shape_cast %141 : vector<8x32xf32> to vector<1x8x32xf32>
    tpu.vector_store %arg5[%c1_139, %c5_140, %c0_141], %144 {strides = array<i32>} : memref<2x18x32xf32, #tpu.memory_space<vmem>>, vector<1x8x32xf32>,
    %c1_142 = arith.constant 1 : index
    %c0_143 = arith.constant 0 : index
    %c0_144 = arith.constant 0 : index
    %145 = vector.load %arg3[%c1_142, %c0_143, %c0_144] : memref<3x1x128xf32, #tpu.memory_space<vmem>>, vector<1x1x128xf32>
    %146 = vector.shape_cast %145 : vector<1x1x128xf32> to vector<1x128xf32>
    %147 = vector.shape_cast %146 : vector<1x128xf32> to vector<1x128xf32>
    %148 = vector.broadcast %147 : vector<1x128xf32> to vector<16x128xf32>
    %c0_145 = arith.constant 0 : index
    %c0_146 = arith.constant 0 : index
    %c0_147 = arith.constant 0 : index
    %149 = vector.load %arg5[%c0_145, %c0_146, %c0_147] : memref<2x18x32xf32, #tpu.memory_space<vmem>>, vector<1x8x32xf32>
    %150 = vector.shape_cast %149 : vector<1x8x32xf32> to vector<8x32xf32>
    %c1_148 = arith.constant 1 : index
    %c0_149 = arith.constant 0 : index
    %c0_150 = arith.constant 0 : index
    %151 = vector.load %arg5[%c1_148, %c0_149, %c0_150] : memref<2x18x32xf32, #tpu.memory_space<vmem>>, vector<1x8x32xf32>
    %152 = vector.shape_cast %151 : vector<1x8x32xf32> to vector<8x32xf32>
    %153 = tpu.concatenate %150, %152 in 0 : vector<8x32xf32>, vector<8x32xf32> -> vector<16x32xf32>
    %154 = arith.truncf %153 : vector<16x32xf32> to vector<16x32xbf16>
    %c1_151 = arith.constant 1 : index
    %c0_152 = arith.constant 0 : index
    %c0_153 = arith.constant 0 : index
    %c0_154 = arith.constant 0 : index
    %155 = vector.load %arg2[%c1_151, %c0_152, %c0_153, %c0_154] : memref<3x11x32x128xbf16, #tpu.memory_space<vmem>>, vector<1x1x32x128xbf16>
    %156 = vector.shape_cast %155 : vector<1x1x32x128xbf16> to vector<32x128xbf16>
    %cst_155 = arith.constant dense<0.000000e+00> : vector<16x128xf32>
    %157 = tpu.matmul %154, %156, %cst_155 {dimension_numbers = #tpu.dot_dimension_numbers<[1], [0], [0], [1], [0, 0, 1, 1], [], []>} : vector<16x32xbf16>, vector<32x128xbf16>, vector<16x128xf32> -> vector<16x128xf32>
    %158 = arith.addf %148, %157 : vector<16x128xf32>
    %c0_156 = arith.constant 0 : index
    %c1_157 = arith.constant 1 : index
    %c0_158 = arith.constant 0 : index
    %159 = vector.load %arg5[%c0_156, %c1_157, %c0_158] : memref<2x18x32xf32, #tpu.memory_space<vmem>>, vector<1x8x32xf32>
    %160 = vector.shape_cast %159 : vector<1x8x32xf32> to vector<8x32xf32>
    %c1_159 = arith.constant 1 : index
    %c1_160 = arith.constant 1 : index
    %c0_161 = arith.constant 0 : index
    %161 = vector.load %arg5[%c1_159, %c1_160, %c0_161] : memref<2x18x32xf32, #tpu.memory_space<vmem>>, vector<1x8x32xf32>
    %162 = vector.shape_cast %161 : vector<1x8x32xf32> to vector<8x32xf32>
    %163 = tpu.concatenate %160, %162 in 0 : vector<8x32xf32>, vector<8x32xf32> -> vector<16x32xf32>
    %164 = arith.truncf %163 : vector<16x32xf32> to vector<16x32xbf16>
    %c1_162 = arith.constant 1 : index
    %c1_163 = arith.constant 1 : index
    %c0_164 = arith.constant 0 : index
    %c0_165 = arith.constant 0 : index
    %165 = vector.load %arg2[%c1_162, %c1_163, %c0_164, %c0_165] : memref<3x11x32x128xbf16, #tpu.memory_space<vmem>>, vector<1x1x32x128xbf16>
    %166 = vector.shape_cast %165 : vector<1x1x32x128xbf16> to vector<32x128xbf16>
    %cst_166 = arith.constant dense<0.000000e+00> : vector<16x128xf32>
    %167 = tpu.matmul %164, %166, %cst_166 {dimension_numbers = #tpu.dot_dimension_numbers<[1], [0], [0], [1], [0, 0, 1, 1], [], []>} : vector<16x32xbf16>, vector<32x128xbf16>, vector<16x128xf32> -> vector<16x128xf32>
    %168 = arith.addf %158, %167 : vector<16x128xf32>
    %c0_167 = arith.constant 0 : index
    %c2_168 = arith.constant 2 : index
    %c0_169 = arith.constant 0 : index
    %169 = vector.load %arg5[%c0_167, %c2_168, %c0_169] : memref<2x18x32xf32, #tpu.memory_space<vmem>>, vector<1x8x32xf32>
    %170 = vector.shape_cast %169 : vector<1x8x32xf32> to vector<8x32xf32>
    %c1_170 = arith.constant 1 : index
    %c2_171 = arith.constant 2 : index
    %c0_172 = arith.constant 0 : index
    %171 = vector.load %arg5[%c1_170, %c2_171, %c0_172] : memref<2x18x32xf32, #tpu.memory_space<vmem>>, vector<1x8x32xf32>
    %172 = vector.shape_cast %171 : vector<1x8x32xf32> to vector<8x32xf32>
    %173 = tpu.concatenate %170, %172 in 0 : vector<8x32xf32>, vector<8x32xf32> -> vector<16x32xf32>
    %174 = arith.truncf %173 : vector<16x32xf32> to vector<16x32xbf16>
    %c1_173 = arith.constant 1 : index
    %c2_174 = arith.constant 2 : index
    %c0_175 = arith.constant 0 : index
    %c0_176 = arith.constant 0 : index
    %175 = vector.load %arg2[%c1_173, %c2_174, %c0_175, %c0_176] : memref<3x11x32x128xbf16, #tpu.memory_space<vmem>>, vector<1x1x32x128xbf16>
    %176 = vector.shape_cast %175 : vector<1x1x32x128xbf16> to vector<32x128xbf16>
    %cst_177 = arith.constant dense<0.000000e+00> : vector<16x128xf32>
    %177 = tpu.matmul %174, %176, %cst_177 {dimension_numbers = #tpu.dot_dimension_numbers<[1], [0], [0], [1], [0, 0, 1, 1], [], []>} : vector<16x32xbf16>, vector<32x128xbf16>, vector<16x128xf32> -> vector<16x128xf32>
    %178 = arith.addf %168, %177 : vector<16x128xf32>
    %c0_178 = arith.constant 0 : index
    %c3_179 = arith.constant 3 : index
    %c0_180 = arith.constant 0 : index
    %179 = vector.load %arg5[%c0_178, %c3_179, %c0_180] : memref<2x18x32xf32, #tpu.memory_space<vmem>>, vector<1x8x32xf32>
    %180 = vector.shape_cast %179 : vector<1x8x32xf32> to vector<8x32xf32>
    %c1_181 = arith.constant 1 : index
    %c3_182 = arith.constant 3 : index
    %c0_183 = arith.constant 0 : index
    %181 = vector.load %arg5[%c1_181, %c3_182, %c0_183] : memref<2x18x32xf32, #tpu.memory_space<vmem>>, vector<1x8x32xf32>
    %182 = vector.shape_cast %181 : vector<1x8x32xf32> to vector<8x32xf32>
    %183 = tpu.concatenate %180, %182 in 0 : vector<8x32xf32>, vector<8x32xf32> -> vector<16x32xf32>
    %184 = arith.truncf %183 : vector<16x32xf32> to vector<16x32xbf16>
    %c1_184 = arith.constant 1 : index
    %c3_185 = arith.constant 3 : index
    %c0_186 = arith.constant 0 : index
    %c0_187 = arith.constant 0 : index
    %185 = vector.load %arg2[%c1_184, %c3_185, %c0_186, %c0_187] : memref<3x11x32x128xbf16, #tpu.memory_space<vmem>>, vector<1x1x32x128xbf16>
    %186 = vector.shape_cast %185 : vector<1x1x32x128xbf16> to vector<32x128xbf16>
    %cst_188 = arith.constant dense<0.000000e+00> : vector<16x128xf32>
    %187 = tpu.matmul %184, %186, %cst_188 {dimension_numbers = #tpu.dot_dimension_numbers<[1], [0], [0], [1], [0, 0, 1, 1], [], []>} : vector<16x32xbf16>, vector<32x128xbf16>, vector<16x128xf32> -> vector<16x128xf32>
    %188 = arith.addf %178, %187 : vector<16x128xf32>
    %c0_189 = arith.constant 0 : index
    %c4_190 = arith.constant 4 : index
    %c0_191 = arith.constant 0 : index
    %189 = vector.load %arg5[%c0_189, %c4_190, %c0_191] : memref<2x18x32xf32, #tpu.memory_space<vmem>>, vector<1x8x32xf32>
    %190 = vector.shape_cast %189 : vector<1x8x32xf32> to vector<8x32xf32>
    %c1_192 = arith.constant 1 : index
    %c4_193 = arith.constant 4 : index
    %c0_194 = arith.constant 0 : index
    %191 = vector.load %arg5[%c1_192, %c4_193, %c0_194] : memref<2x18x32xf32, #tpu.memory_space<vmem>>, vector<1x8x32xf32>
    %192 = vector.shape_cast %191 : vector<1x8x32xf32> to vector<8x32xf32>
    %193 = tpu.concatenate %190, %192 in 0 : vector<8x32xf32>, vector<8x32xf32> -> vector<16x32xf32>
    %194 = arith.truncf %193 : vector<16x32xf32> to vector<16x32xbf16>
    %c1_195 = arith.constant 1 : index
    %c4_196 = arith.constant 4 : index
    %c0_197 = arith.constant 0 : index
    %c0_198 = arith.constant 0 : index
    %195 = vector.load %arg2[%c1_195, %c4_196, %c0_197, %c0_198] : memref<3x11x32x128xbf16, #tpu.memory_space<vmem>>, vector<1x1x32x128xbf16>
    %196 = vector.shape_cast %195 : vector<1x1x32x128xbf16> to vector<32x128xbf16>
    %cst_199 = arith.constant dense<0.000000e+00> : vector<16x128xf32>
    %197 = tpu.matmul %194, %196, %cst_199 {dimension_numbers = #tpu.dot_dimension_numbers<[1], [0], [0], [1], [0, 0, 1, 1], [], []>} : vector<16x32xbf16>, vector<32x128xbf16>, vector<16x128xf32> -> vector<16x128xf32>
    %198 = arith.addf %188, %197 : vector<16x128xf32>
    %c0_200 = arith.constant 0 : index
    %c5_201 = arith.constant 5 : index
    %c0_202 = arith.constant 0 : index
    %199 = vector.load %arg5[%c0_200, %c5_201, %c0_202] : memref<2x18x32xf32, #tpu.memory_space<vmem>>, vector<1x8x32xf32>
    %200 = vector.shape_cast %199 : vector<1x8x32xf32> to vector<8x32xf32>
    %c1_203 = arith.constant 1 : index
    %c5_204 = arith.constant 5 : index
    %c0_205 = arith.constant 0 : index
    %201 = vector.load %arg5[%c1_203, %c5_204, %c0_205] : memref<2x18x32xf32, #tpu.memory_space<vmem>>, vector<1x8x32xf32>
    %202 = vector.shape_cast %201 : vector<1x8x32xf32> to vector<8x32xf32>
    %203 = tpu.concatenate %200, %202 in 0 : vector<8x32xf32>, vector<8x32xf32> -> vector<16x32xf32>
    %204 = arith.truncf %203 : vector<16x32xf32> to vector<16x32xbf16>
    %c1_206 = arith.constant 1 : index
    %c5_207 = arith.constant 5 : index
    %c0_208 = arith.constant 0 : index
    %c0_209 = arith.constant 0 : index
    %205 = vector.load %arg2[%c1_206, %c5_207, %c0_208, %c0_209] : memref<3x11x32x128xbf16, #tpu.memory_space<vmem>>, vector<1x1x32x128xbf16>
    %206 = vector.shape_cast %205 : vector<1x1x32x128xbf16> to vector<32x128xbf16>
    %cst_210 = arith.constant dense<0.000000e+00> : vector<16x128xf32>
    %207 = tpu.matmul %204, %206, %cst_210 {dimension_numbers = #tpu.dot_dimension_numbers<[1], [0], [0], [1], [0, 0, 1, 1], [], []>} : vector<16x32xbf16>, vector<32x128xbf16>, vector<16x128xf32> -> vector<16x128xf32>
    %208 = arith.addf %198, %207 : vector<16x128xf32>
    %c0_211 = arith.constant 0 : index
    %c6_212 = arith.constant 6 : index
    %c0_213 = arith.constant 0 : index
    %209 = vector.load %arg5[%c0_211, %c6_212, %c0_213] : memref<2x18x32xf32, #tpu.memory_space<vmem>>, vector<1x8x32xf32>
    %210 = vector.shape_cast %209 : vector<1x8x32xf32> to vector<8x32xf32>
    %c1_214 = arith.constant 1 : index
    %c6_215 = arith.constant 6 : index
    %c0_216 = arith.constant 0 : index
    %211 = vector.load %arg5[%c1_214, %c6_215, %c0_216] : memref<2x18x32xf32, #tpu.memory_space<vmem>>, vector<1x8x32xf32>
    %212 = vector.shape_cast %211 : vector<1x8x32xf32> to vector<8x32xf32>
    %213 = tpu.concatenate %210, %212 in 0 : vector<8x32xf32>, vector<8x32xf32> -> vector<16x32xf32>
    %214 = arith.truncf %213 : vector<16x32xf32> to vector<16x32xbf16>
    %c1_217 = arith.constant 1 : index
    %c6_218 = arith.constant 6 : index
    %c0_219 = arith.constant 0 : index
    %c0_220 = arith.constant 0 : index
    %215 = vector.load %arg2[%c1_217, %c6_218, %c0_219, %c0_220] : memref<3x11x32x128xbf16, #tpu.memory_space<vmem>>, vector<1x1x32x128xbf16>
    %216 = vector.shape_cast %215 : vector<1x1x32x128xbf16> to vector<32x128xbf16>
    %cst_221 = arith.constant dense<0.000000e+00> : vector<16x128xf32>
    %217 = tpu.matmul %214, %216, %cst_221 {dimension_numbers = #tpu.dot_dimension_numbers<[1], [0], [0], [1], [0, 0, 1, 1], [], []>} : vector<16x32xbf16>, vector<32x128xbf16>, vector<16x128xf32> -> vector<16x128xf32>
    %218 = arith.addf %208, %217 : vector<16x128xf32>
    %c0_222 = arith.constant 0 : index
    %c7_223 = arith.constant 7 : index
    %c0_224 = arith.constant 0 : index
    %219 = vector.load %arg5[%c0_222, %c7_223, %c0_224] : memref<2x18x32xf32, #tpu.memory_space<vmem>>, vector<1x8x32xf32>
    %220 = vector.shape_cast %219 : vector<1x8x32xf32> to vector<8x32xf32>
    %c1_225 = arith.constant 1 : index
    %c7_226 = arith.constant 7 : index
    %c0_227 = arith.constant 0 : index
    %221 = vector.load %arg5[%c1_225, %c7_226, %c0_227] : memref<2x18x32xf32, #tpu.memory_space<vmem>>, vector<1x8x32xf32>
    %222 = vector.shape_cast %221 : vector<1x8x32xf32> to vector<8x32xf32>
    %223 = tpu.concatenate %220, %222 in 0 : vector<8x32xf32>, vector<8x32xf32> -> vector<16x32xf32>
    %224 = arith.truncf %223 : vector<16x32xf32> to vector<16x32xbf16>
    %c1_228 = arith.constant 1 : index
    %c7_229 = arith.constant 7 : index
    %c0_230 = arith.constant 0 : index
    %c0_231 = arith.constant 0 : index
    %225 = vector.load %arg2[%c1_228, %c7_229, %c0_230, %c0_231] : memref<3x11x32x128xbf16, #tpu.memory_space<vmem>>, vector<1x1x32x128xbf16>
    %226 = vector.shape_cast %225 : vector<1x1x32x128xbf16> to vector<32x128xbf16>
    %cst_232 = arith.constant dense<0.000000e+00> : vector<16x128xf32>
    %227 = tpu.matmul %224, %226, %cst_232 {dimension_numbers = #tpu.dot_dimension_numbers<[1], [0], [0], [1], [0, 0, 1, 1], [], []>} : vector<16x32xbf16>, vector<32x128xbf16>, vector<16x128xf32> -> vector<16x128xf32>
    %228 = arith.addf %218, %227 : vector<16x128xf32>
    %c0_233 = arith.constant 0 : index
    %c8_234 = arith.constant 8 : index
    %c0_235 = arith.constant 0 : index
    %229 = vector.load %arg5[%c0_233, %c8_234, %c0_235] : memref<2x18x32xf32, #tpu.memory_space<vmem>>, vector<1x8x32xf32>
    %230 = vector.shape_cast %229 : vector<1x8x32xf32> to vector<8x32xf32>
    %c1_236 = arith.constant 1 : index
    %c8_237 = arith.constant 8 : index
    %c0_238 = arith.constant 0 : index
    %231 = vector.load %arg5[%c1_236, %c8_237, %c0_238] : memref<2x18x32xf32, #tpu.memory_space<vmem>>, vector<1x8x32xf32>
    %232 = vector.shape_cast %231 : vector<1x8x32xf32> to vector<8x32xf32>
    %233 = tpu.concatenate %230, %232 in 0 : vector<8x32xf32>, vector<8x32xf32> -> vector<16x32xf32>
    %234 = arith.truncf %233 : vector<16x32xf32> to vector<16x32xbf16>
    %c1_239 = arith.constant 1 : index
    %c8_240 = arith.constant 8 : index
    %c0_241 = arith.constant 0 : index
    %c0_242 = arith.constant 0 : index
    %235 = vector.load %arg2[%c1_239, %c8_240, %c0_241, %c0_242] : memref<3x11x32x128xbf16, #tpu.memory_space<vmem>>, vector<1x1x32x128xbf16>
    %236 = vector.shape_cast %235 : vector<1x1x32x128xbf16> to vector<32x128xbf16>
    %cst_243 = arith.constant dense<0.000000e+00> : vector<16x128xf32>
    %237 = tpu.matmul %234, %236, %cst_243 {dimension_numbers = #tpu.dot_dimension_numbers<[1], [0], [0], [1], [0, 0, 1, 1], [], []>} : vector<16x32xbf16>, vector<32x128xbf16>, vector<16x128xf32> -> vector<16x128xf32>
    %238 = arith.addf %228, %237 : vector<16x128xf32>
    %c0_244 = arith.constant 0 : index
    %c9_245 = arith.constant 9 : index
    %c0_246 = arith.constant 0 : index
    %239 = vector.load %arg5[%c0_244, %c9_245, %c0_246] : memref<2x18x32xf32, #tpu.memory_space<vmem>>, vector<1x8x32xf32>
    %240 = vector.shape_cast %239 : vector<1x8x32xf32> to vector<8x32xf32>
    %c1_247 = arith.constant 1 : index
    %c9_248 = arith.constant 9 : index
    %c0_249 = arith.constant 0 : index
    %241 = vector.load %arg5[%c1_247, %c9_248, %c0_249] : memref<2x18x32xf32, #tpu.memory_space<vmem>>, vector<1x8x32xf32>
    %242 = vector.shape_cast %241 : vector<1x8x32xf32> to vector<8x32xf32>
    %243 = tpu.concatenate %240, %242 in 0 : vector<8x32xf32>, vector<8x32xf32> -> vector<16x32xf32>
    %244 = arith.truncf %243 : vector<16x32xf32> to vector<16x32xbf16>
    %c1_250 = arith.constant 1 : index
    %c9_251 = arith.constant 9 : index
    %c0_252 = arith.constant 0 : index
    %c0_253 = arith.constant 0 : index
    %245 = vector.load %arg2[%c1_250, %c9_251, %c0_252, %c0_253] : memref<3x11x32x128xbf16, #tpu.memory_space<vmem>>, vector<1x1x32x128xbf16>
    %246 = vector.shape_cast %245 : vector<1x1x32x128xbf16> to vector<32x128xbf16>
    %cst_254 = arith.constant dense<0.000000e+00> : vector<16x128xf32>
    %247 = tpu.matmul %244, %246, %cst_254 {dimension_numbers = #tpu.dot_dimension_numbers<[1], [0], [0], [1], [0, 0, 1, 1], [], []>} : vector<16x32xbf16>, vector<32x128xbf16>, vector<16x128xf32> -> vector<16x128xf32>
    %248 = arith.addf %238, %247 : vector<16x128xf32>
    %c0_255 = arith.constant 0 : index
    %c10_256 = arith.constant 10 : index
    %c0_257 = arith.constant 0 : index
    %249 = vector.load %arg5[%c0_255, %c10_256, %c0_257] : memref<2x18x32xf32, #tpu.memory_space<vmem>>, vector<1x8x32xf32>
    %250 = vector.shape_cast %249 : vector<1x8x32xf32> to vector<8x32xf32>
    %c1_258 = arith.constant 1 : index
    %c10_259 = arith.constant 10 : index
    %c0_260 = arith.constant 0 : index
    %251 = vector.load %arg5[%c1_258, %c10_259, %c0_260] : memref<2x18x32xf32, #tpu.memory_space<vmem>>, vector<1x8x32xf32>
    %252 = vector.shape_cast %251 : vector<1x8x32xf32> to vector<8x32xf32>
    %253 = tpu.concatenate %250, %252 in 0 : vector<8x32xf32>, vector<8x32xf32> -> vector<16x32xf32>
    %254 = arith.truncf %253 : vector<16x32xf32> to vector<16x32xbf16>
    %c1_261 = arith.constant 1 : index
    %c10_262 = arith.constant 10 : index
    %c0_263 = arith.constant 0 : index
    %c0_264 = arith.constant 0 : index
    %255 = vector.load %arg2[%c1_261, %c10_262, %c0_263, %c0_264] : memref<3x11x32x128xbf16, #tpu.memory_space<vmem>>, vector<1x1x32x128xbf16>
    %256 = vector.shape_cast %255 : vector<1x1x32x128xbf16> to vector<32x128xbf16>
    %cst_265 = arith.constant dense<0.000000e+00> : vector<16x128xf32>
    %257 = tpu.matmul %254, %256, %cst_265 {dimension_numbers = #tpu.dot_dimension_numbers<[1], [0], [0], [1], [0, 0, 1, 1], [], []>} : vector<16x32xbf16>, vector<32x128xbf16>, vector<16x128xf32> -> vector<16x128xf32>
    %258 = arith.addf %248, %257 : vector<16x128xf32>
    %259 = vector.extract_strided_slice %258 {offsets = [0, 0], sizes = [8, 32], strides = [1, 1]} : vector<16x128xf32> to vector<8x32xf32>
    %c0_266 = arith.constant 0 : index
    %c5_267 = arith.constant 5 : index
    %c0_268 = arith.constant 0 : index
    %260 = vector.load %arg5[%c0_266, %c5_267, %c0_268] : memref<2x18x32xf32, #tpu.memory_space<vmem>>, vector<1x8x32xf32>
    %261 = vector.shape_cast %260 : vector<1x8x32xf32> to vector<8x32xf32>
    %262 = vector.shape_cast %259 : vector<8x32xf32> to vector<1x8x32xf32>
    tpu.vector_store %arg5[%c0_266, %c5_267, %c0_268], %262 {strides = array<i32>} : memref<2x18x32xf32, #tpu.memory_space<vmem>>, vector<1x8x32xf32>,
    %263 = vector.extract_strided_slice %258 {offsets = [8, 0], sizes = [8, 32], strides = [1, 1]} : vector<16x128xf32> to vector<8x32xf32>
    %c1_269 = arith.constant 1 : index
    %c5_270 = arith.constant 5 : index
    %c0_271 = arith.constant 0 : index
    %264 = vector.load %arg5[%c1_269, %c5_270, %c0_271] : memref<2x18x32xf32, #tpu.memory_space<vmem>>, vector<1x8x32xf32>
    %265 = vector.shape_cast %264 : vector<1x8x32xf32> to vector<8x32xf32>
    %266 = vector.shape_cast %263 : vector<8x32xf32> to vector<1x8x32xf32>
    tpu.vector_store %arg5[%c1_269, %c5_270, %c0_271], %266 {strides = array<i32>} : memref<2x18x32xf32, #tpu.memory_space<vmem>>, vector<1x8x32xf32>,
    %c2_272 = arith.constant 2 : index
    %c0_273 = arith.constant 0 : index
    %c0_274 = arith.constant 0 : index
    %267 = vector.load %arg3[%c2_272, %c0_273, %c0_274] : memref<3x1x128xf32, #tpu.memory_space<vmem>>, vector<1x1x128xf32>
    %268 = vector.shape_cast %267 : vector<1x1x128xf32> to vector<1x128xf32>
    %269 = vector.shape_cast %268 : vector<1x128xf32> to vector<1x128xf32>
    %270 = vector.broadcast %269 : vector<1x128xf32> to vector<16x128xf32>
    %c0_275 = arith.constant 0 : index
    %c0_276 = arith.constant 0 : index
    %c0_277 = arith.constant 0 : index
    %271 = vector.load %arg5[%c0_275, %c0_276, %c0_277] : memref<2x18x32xf32, #tpu.memory_space<vmem>>, vector<1x8x32xf32>
    %272 = vector.shape_cast %271 : vector<1x8x32xf32> to vector<8x32xf32>
    %c1_278 = arith.constant 1 : index
    %c0_279 = arith.constant 0 : index
    %c0_280 = arith.constant 0 : index
    %273 = vector.load %arg5[%c1_278, %c0_279, %c0_280] : memref<2x18x32xf32, #tpu.memory_space<vmem>>, vector<1x8x32xf32>
    %274 = vector.shape_cast %273 : vector<1x8x32xf32> to vector<8x32xf32>
    %275 = tpu.concatenate %272, %274 in 0 : vector<8x32xf32>, vector<8x32xf32> -> vector<16x32xf32>
    %276 = arith.truncf %275 : vector<16x32xf32> to vector<16x32xbf16>
    %c2_281 = arith.constant 2 : index
    %c0_282 = arith.constant 0 : index
    %c0_283 = arith.constant 0 : index
    %c0_284 = arith.constant 0 : index
    %277 = vector.load %arg2[%c2_281, %c0_282, %c0_283, %c0_284] : memref<3x11x32x128xbf16, #tpu.memory_space<vmem>>, vector<1x1x32x128xbf16>
    %278 = vector.shape_cast %277 : vector<1x1x32x128xbf16> to vector<32x128xbf16>
    %cst_285 = arith.constant dense<0.000000e+00> : vector<16x128xf32>
    %279 = tpu.matmul %276, %278, %cst_285 {dimension_numbers = #tpu.dot_dimension_numbers<[1], [0], [0], [1], [0, 0, 1, 1], [], []>} : vector<16x32xbf16>, vector<32x128xbf16>, vector<16x128xf32> -> vector<16x128xf32>
    %280 = arith.addf %270, %279 : vector<16x128xf32>
    %c0_286 = arith.constant 0 : index
    %c1_287 = arith.constant 1 : index
    %c0_288 = arith.constant 0 : index
    %281 = vector.load %arg5[%c0_286, %c1_287, %c0_288] : memref<2x18x32xf32, #tpu.memory_space<vmem>>, vector<1x8x32xf32>
    %282 = vector.shape_cast %281 : vector<1x8x32xf32> to vector<8x32xf32>
    %c1_289 = arith.constant 1 : index
    %c1_290 = arith.constant 1 : index
    %c0_291 = arith.constant 0 : index
    %283 = vector.load %arg5[%c1_289, %c1_290, %c0_291] : memref<2x18x32xf32, #tpu.memory_space<vmem>>, vector<1x8x32xf32>
    %284 = vector.shape_cast %283 : vector<1x8x32xf32> to vector<8x32xf32>
    %285 = tpu.concatenate %282, %284 in 0 : vector<8x32xf32>, vector<8x32xf32> -> vector<16x32xf32>
    %286 = arith.truncf %285 : vector<16x32xf32> to vector<16x32xbf16>
    %c2_292 = arith.constant 2 : index
    %c1_293 = arith.constant 1 : index
    %c0_294 = arith.constant 0 : index
    %c0_295 = arith.constant 0 : index
    %287 = vector.load %arg2[%c2_292, %c1_293, %c0_294, %c0_295] : memref<3x11x32x128xbf16, #tpu.memory_space<vmem>>, vector<1x1x32x128xbf16>
    %288 = vector.shape_cast %287 : vector<1x1x32x128xbf16> to vector<32x128xbf16>
    %cst_296 = arith.constant dense<0.000000e+00> : vector<16x128xf32>
    %289 = tpu.matmul %286, %288, %cst_296 {dimension_numbers = #tpu.dot_dimension_numbers<[1], [0], [0], [1], [0, 0, 1, 1], [], []>} : vector<16x32xbf16>, vector<32x128xbf16>, vector<16x128xf32> -> vector<16x128xf32>
    %290 = arith.addf %280, %289 : vector<16x128xf32>
    %c0_297 = arith.constant 0 : index
    %c2_298 = arith.constant 2 : index
    %c0_299 = arith.constant 0 : index
    %291 = vector.load %arg5[%c0_297, %c2_298, %c0_299] : memref<2x18x32xf32, #tpu.memory_space<vmem>>, vector<1x8x32xf32>
    %292 = vector.shape_cast %291 : vector<1x8x32xf32> to vector<8x32xf32>
    %c1_300 = arith.constant 1 : index
    %c2_301 = arith.constant 2 : index
    %c0_302 = arith.constant 0 : index
    %293 = vector.load %arg5[%c1_300, %c2_301, %c0_302] : memref<2x18x32xf32, #tpu.memory_space<vmem>>, vector<1x8x32xf32>
    %294 = vector.shape_cast %293 : vector<1x8x32xf32> to vector<8x32xf32>
    %295 = tpu.concatenate %292, %294 in 0 : vector<8x32xf32>, vector<8x32xf32> -> vector<16x32xf32>
    %296 = arith.truncf %295 : vector<16x32xf32> to vector<16x32xbf16>
    %c2_303 = arith.constant 2 : index
    %c2_304 = arith.constant 2 : index
    %c0_305 = arith.constant 0 : index
    %c0_306 = arith.constant 0 : index
    %297 = vector.load %arg2[%c2_303, %c2_304, %c0_305, %c0_306] : memref<3x11x32x128xbf16, #tpu.memory_space<vmem>>, vector<1x1x32x128xbf16>
    %298 = vector.shape_cast %297 : vector<1x1x32x128xbf16> to vector<32x128xbf16>
    %cst_307 = arith.constant dense<0.000000e+00> : vector<16x128xf32>
    %299 = tpu.matmul %296, %298, %cst_307 {dimension_numbers = #tpu.dot_dimension_numbers<[1], [0], [0], [1], [0, 0, 1, 1], [], []>} : vector<16x32xbf16>, vector<32x128xbf16>, vector<16x128xf32> -> vector<16x128xf32>
    %300 = arith.addf %290, %299 : vector<16x128xf32>
    %c0_308 = arith.constant 0 : index
    %c3_309 = arith.constant 3 : index
    %c0_310 = arith.constant 0 : index
    %301 = vector.load %arg5[%c0_308, %c3_309, %c0_310] : memref<2x18x32xf32, #tpu.memory_space<vmem>>, vector<1x8x32xf32>
    %302 = vector.shape_cast %301 : vector<1x8x32xf32> to vector<8x32xf32>
    %c1_311 = arith.constant 1 : index
    %c3_312 = arith.constant 3 : index
    %c0_313 = arith.constant 0 : index
    %303 = vector.load %arg5[%c1_311, %c3_312, %c0_313] : memref<2x18x32xf32, #tpu.memory_space<vmem>>, vector<1x8x32xf32>
    %304 = vector.shape_cast %303 : vector<1x8x32xf32> to vector<8x32xf32>
    %305 = tpu.concatenate %302, %304 in 0 : vector<8x32xf32>, vector<8x32xf32> -> vector<16x32xf32>
    %306 = arith.truncf %305 : vector<16x32xf32> to vector<16x32xbf16>
    %c2_314 = arith.constant 2 : index
    %c3_315 = arith.constant 3 : index
    %c0_316 = arith.constant 0 : index
    %c0_317 = arith.constant 0 : index
    %307 = vector.load %arg2[%c2_314, %c3_315, %c0_316, %c0_317] : memref<3x11x32x128xbf16, #tpu.memory_space<vmem>>, vector<1x1x32x128xbf16>
    %308 = vector.shape_cast %307 : vector<1x1x32x128xbf16> to vector<32x128xbf16>
    %cst_318 = arith.constant dense<0.000000e+00> : vector<16x128xf32>
    %309 = tpu.matmul %306, %308, %cst_318 {dimension_numbers = #tpu.dot_dimension_numbers<[1], [0], [0], [1], [0, 0, 1, 1], [], []>} : vector<16x32xbf16>, vector<32x128xbf16>, vector<16x128xf32> -> vector<16x128xf32>
    %310 = arith.addf %300, %309 : vector<16x128xf32>
    %c0_319 = arith.constant 0 : index
    %c4_320 = arith.constant 4 : index
    %c0_321 = arith.constant 0 : index
    %311 = vector.load %arg5[%c0_319, %c4_320, %c0_321] : memref<2x18x32xf32, #tpu.memory_space<vmem>>, vector<1x8x32xf32>
    %312 = vector.shape_cast %311 : vector<1x8x32xf32> to vector<8x32xf32>
    %c1_322 = arith.constant 1 : index
    %c4_323 = arith.constant 4 : index
    %c0_324 = arith.constant 0 : index
    %313 = vector.load %arg5[%c1_322, %c4_323, %c0_324] : memref<2x18x32xf32, #tpu.memory_space<vmem>>, vector<1x8x32xf32>
    %314 = vector.shape_cast %313 : vector<1x8x32xf32> to vector<8x32xf32>
    %315 = tpu.concatenate %312, %314 in 0 : vector<8x32xf32>, vector<8x32xf32> -> vector<16x32xf32>
    %316 = arith.truncf %315 : vector<16x32xf32> to vector<16x32xbf16>
    %c2_325 = arith.constant 2 : index
    %c4_326 = arith.constant 4 : index
    %c0_327 = arith.constant 0 : index
    %c0_328 = arith.constant 0 : index
    %317 = vector.load %arg2[%c2_325, %c4_326, %c0_327, %c0_328] : memref<3x11x32x128xbf16, #tpu.memory_space<vmem>>, vector<1x1x32x128xbf16>
    %318 = vector.shape_cast %317 : vector<1x1x32x128xbf16> to vector<32x128xbf16>
    %cst_329 = arith.constant dense<0.000000e+00> : vector<16x128xf32>
    %319 = tpu.matmul %316, %318, %cst_329 {dimension_numbers = #tpu.dot_dimension_numbers<[1], [0], [0], [1], [0, 0, 1, 1], [], []>} : vector<16x32xbf16>, vector<32x128xbf16>, vector<16x128xf32> -> vector<16x128xf32>
    %320 = arith.addf %310, %319 : vector<16x128xf32>
    %c0_330 = arith.constant 0 : index
    %c5_331 = arith.constant 5 : index
    %c0_332 = arith.constant 0 : index
    %321 = vector.load %arg5[%c0_330, %c5_331, %c0_332] : memref<2x18x32xf32, #tpu.memory_space<vmem>>, vector<1x8x32xf32>
    %322 = vector.shape_cast %321 : vector<1x8x32xf32> to vector<8x32xf32>
    %c1_333 = arith.constant 1 : index
    %c5_334 = arith.constant 5 : index
    %c0_335 = arith.constant 0 : index
    %323 = vector.load %arg5[%c1_333, %c5_334, %c0_335] : memref<2x18x32xf32, #tpu.memory_space<vmem>>, vector<1x8x32xf32>
    %324 = vector.shape_cast %323 : vector<1x8x32xf32> to vector<8x32xf32>
    %325 = tpu.concatenate %322, %324 in 0 : vector<8x32xf32>, vector<8x32xf32> -> vector<16x32xf32>
    %326 = arith.truncf %325 : vector<16x32xf32> to vector<16x32xbf16>
    %c2_336 = arith.constant 2 : index
    %c5_337 = arith.constant 5 : index
    %c0_338 = arith.constant 0 : index
    %c0_339 = arith.constant 0 : index
    %327 = vector.load %arg2[%c2_336, %c5_337, %c0_338, %c0_339] : memref<3x11x32x128xbf16, #tpu.memory_space<vmem>>, vector<1x1x32x128xbf16>
    %328 = vector.shape_cast %327 : vector<1x1x32x128xbf16> to vector<32x128xbf16>
    %cst_340 = arith.constant dense<0.000000e+00> : vector<16x128xf32>
    %329 = tpu.matmul %326, %328, %cst_340 {dimension_numbers = #tpu.dot_dimension_numbers<[1], [0], [0], [1], [0, 0, 1, 1], [], []>} : vector<16x32xbf16>, vector<32x128xbf16>, vector<16x128xf32> -> vector<16x128xf32>
    %330 = arith.addf %320, %329 : vector<16x128xf32>
    %c0_341 = arith.constant 0 : index
    %c6_342 = arith.constant 6 : index
    %c0_343 = arith.constant 0 : index
    %331 = vector.load %arg5[%c0_341, %c6_342, %c0_343] : memref<2x18x32xf32, #tpu.memory_space<vmem>>, vector<1x8x32xf32>
    %332 = vector.shape_cast %331 : vector<1x8x32xf32> to vector<8x32xf32>
    %c1_344 = arith.constant 1 : index
    %c6_345 = arith.constant 6 : index
    %c0_346 = arith.constant 0 : index
    %333 = vector.load %arg5[%c1_344, %c6_345, %c0_346] : memref<2x18x32xf32, #tpu.memory_space<vmem>>, vector<1x8x32xf32>
    %334 = vector.shape_cast %333 : vector<1x8x32xf32> to vector<8x32xf32>
    %335 = tpu.concatenate %332, %334 in 0 : vector<8x32xf32>, vector<8x32xf32> -> vector<16x32xf32>
    %336 = arith.truncf %335 : vector<16x32xf32> to vector<16x32xbf16>
    %c2_347 = arith.constant 2 : index
    %c6_348 = arith.constant 6 : index
    %c0_349 = arith.constant 0 : index
    %c0_350 = arith.constant 0 : index
    %337 = vector.load %arg2[%c2_347, %c6_348, %c0_349, %c0_350] : memref<3x11x32x128xbf16, #tpu.memory_space<vmem>>, vector<1x1x32x128xbf16>
    %338 = vector.shape_cast %337 : vector<1x1x32x128xbf16> to vector<32x128xbf16>
    %cst_351 = arith.constant dense<0.000000e+00> : vector<16x128xf32>
    %339 = tpu.matmul %336, %338, %cst_351 {dimension_numbers = #tpu.dot_dimension_numbers<[1], [0], [0], [1], [0, 0, 1, 1], [], []>} : vector<16x32xbf16>, vector<32x128xbf16>, vector<16x128xf32> -> vector<16x128xf32>
    %340 = arith.addf %330, %339 : vector<16x128xf32>
    %c0_352 = arith.constant 0 : index
    %c7_353 = arith.constant 7 : index
    %c0_354 = arith.constant 0 : index
    %341 = vector.load %arg5[%c0_352, %c7_353, %c0_354] : memref<2x18x32xf32, #tpu.memory_space<vmem>>, vector<1x8x32xf32>
    %342 = vector.shape_cast %341 : vector<1x8x32xf32> to vector<8x32xf32>
    %c1_355 = arith.constant 1 : index
    %c7_356 = arith.constant 7 : index
    %c0_357 = arith.constant 0 : index
    %343 = vector.load %arg5[%c1_355, %c7_356, %c0_357] : memref<2x18x32xf32, #tpu.memory_space<vmem>>, vector<1x8x32xf32>
    %344 = vector.shape_cast %343 : vector<1x8x32xf32> to vector<8x32xf32>
    %345 = tpu.concatenate %342, %344 in 0 : vector<8x32xf32>, vector<8x32xf32> -> vector<16x32xf32>
    %346 = arith.truncf %345 : vector<16x32xf32> to vector<16x32xbf16>
    %c2_358 = arith.constant 2 : index
    %c7_359 = arith.constant 7 : index
    %c0_360 = arith.constant 0 : index
    %c0_361 = arith.constant 0 : index
    %347 = vector.load %arg2[%c2_358, %c7_359, %c0_360, %c0_361] : memref<3x11x32x128xbf16, #tpu.memory_space<vmem>>, vector<1x1x32x128xbf16>
    %348 = vector.shape_cast %347 : vector<1x1x32x128xbf16> to vector<32x128xbf16>
    %cst_362 = arith.constant dense<0.000000e+00> : vector<16x128xf32>
    %349 = tpu.matmul %346, %348, %cst_362 {dimension_numbers = #tpu.dot_dimension_numbers<[1], [0], [0], [1], [0, 0, 1, 1], [], []>} : vector<16x32xbf16>, vector<32x128xbf16>, vector<16x128xf32> -> vector<16x128xf32>
    %350 = arith.addf %340, %349 : vector<16x128xf32>
    %c0_363 = arith.constant 0 : index
    %c8_364 = arith.constant 8 : index
    %c0_365 = arith.constant 0 : index
    %351 = vector.load %arg5[%c0_363, %c8_364, %c0_365] : memref<2x18x32xf32, #tpu.memory_space<vmem>>, vector<1x8x32xf32>
    %352 = vector.shape_cast %351 : vector<1x8x32xf32> to vector<8x32xf32>
    %c1_366 = arith.constant 1 : index
    %c8_367 = arith.constant 8 : index
    %c0_368 = arith.constant 0 : index
    %353 = vector.load %arg5[%c1_366, %c8_367, %c0_368] : memref<2x18x32xf32, #tpu.memory_space<vmem>>, vector<1x8x32xf32>
    %354 = vector.shape_cast %353 : vector<1x8x32xf32> to vector<8x32xf32>
    %355 = tpu.concatenate %352, %354 in 0 : vector<8x32xf32>, vector<8x32xf32> -> vector<16x32xf32>
    %356 = arith.truncf %355 : vector<16x32xf32> to vector<16x32xbf16>
    %c2_369 = arith.constant 2 : index
    %c8_370 = arith.constant 8 : index
    %c0_371 = arith.constant 0 : index
    %c0_372 = arith.constant 0 : index
    %357 = vector.load %arg2[%c2_369, %c8_370, %c0_371, %c0_372] : memref<3x11x32x128xbf16, #tpu.memory_space<vmem>>, vector<1x1x32x128xbf16>
    %358 = vector.shape_cast %357 : vector<1x1x32x128xbf16> to vector<32x128xbf16>
    %cst_373 = arith.constant dense<0.000000e+00> : vector<16x128xf32>
    %359 = tpu.matmul %356, %358, %cst_373 {dimension_numbers = #tpu.dot_dimension_numbers<[1], [0], [0], [1], [0, 0, 1, 1], [], []>} : vector<16x32xbf16>, vector<32x128xbf16>, vector<16x128xf32> -> vector<16x128xf32>
    %360 = arith.addf %350, %359 : vector<16x128xf32>
    %c0_374 = arith.constant 0 : index
    %c9_375 = arith.constant 9 : index
    %c0_376 = arith.constant 0 : index
    %361 = vector.load %arg5[%c0_374, %c9_375, %c0_376] : memref<2x18x32xf32, #tpu.memory_space<vmem>>, vector<1x8x32xf32>
    %362 = vector.shape_cast %361 : vector<1x8x32xf32> to vector<8x32xf32>
    %c1_377 = arith.constant 1 : index
    %c9_378 = arith.constant 9 : index
    %c0_379 = arith.constant 0 : index
    %363 = vector.load %arg5[%c1_377, %c9_378, %c0_379] : memref<2x18x32xf32, #tpu.memory_space<vmem>>, vector<1x8x32xf32>
    %364 = vector.shape_cast %363 : vector<1x8x32xf32> to vector<8x32xf32>
    %365 = tpu.concatenate %362, %364 in 0 : vector<8x32xf32>, vector<8x32xf32> -> vector<16x32xf32>
    %366 = arith.truncf %365 : vector<16x32xf32> to vector<16x32xbf16>
    %c2_380 = arith.constant 2 : index
    %c9_381 = arith.constant 9 : index
    %c0_382 = arith.constant 0 : index
    %c0_383 = arith.constant 0 : index
    %367 = vector.load %arg2[%c2_380, %c9_381, %c0_382, %c0_383] : memref<3x11x32x128xbf16, #tpu.memory_space<vmem>>, vector<1x1x32x128xbf16>
    %368 = vector.shape_cast %367 : vector<1x1x32x128xbf16> to vector<32x128xbf16>
    %cst_384 = arith.constant dense<0.000000e+00> : vector<16x128xf32>
    %369 = tpu.matmul %366, %368, %cst_384 {dimension_numbers = #tpu.dot_dimension_numbers<[1], [0], [0], [1], [0, 0, 1, 1], [], []>} : vector<16x32xbf16>, vector<32x128xbf16>, vector<16x128xf32> -> vector<16x128xf32>
    %370 = arith.addf %360, %369 : vector<16x128xf32>
    %c0_385 = arith.constant 0 : index
    %c10_386 = arith.constant 10 : index
    %c0_387 = arith.constant 0 : index
    %371 = vector.load %arg5[%c0_385, %c10_386, %c0_387] : memref<2x18x32xf32, #tpu.memory_space<vmem>>, vector<1x8x32xf32>
    %372 = vector.shape_cast %371 : vector<1x8x32xf32> to vector<8x32xf32>
    %c1_388 = arith.constant 1 : index
    %c10_389 = arith.constant 10 : index
    %c0_390 = arith.constant 0 : index
    %373 = vector.load %arg5[%c1_388, %c10_389, %c0_390] : memref<2x18x32xf32, #tpu.memory_space<vmem>>, vector<1x8x32xf32>
    %374 = vector.shape_cast %373 : vector<1x8x32xf32> to vector<8x32xf32>
    %375 = tpu.concatenate %372, %374 in 0 : vector<8x32xf32>, vector<8x32xf32> -> vector<16x32xf32>
    %376 = arith.truncf %375 : vector<16x32xf32> to vector<16x32xbf16>
    %c2_391 = arith.constant 2 : index
    %c10_392 = arith.constant 10 : index
    %c0_393 = arith.constant 0 : index
    %c0_394 = arith.constant 0 : index
    %377 = vector.load %arg2[%c2_391, %c10_392, %c0_393, %c0_394] : memref<3x11x32x128xbf16, #tpu.memory_space<vmem>>, vector<1x1x32x128xbf16>
    %378 = vector.shape_cast %377 : vector<1x1x32x128xbf16> to vector<32x128xbf16>
    %cst_395 = arith.constant dense<0.000000e+00> : vector<16x128xf32>
    %379 = tpu.matmul %376, %378, %cst_395 {dimension_numbers = #tpu.dot_dimension_numbers<[1], [0], [0], [1], [0, 0, 1, 1], [], []>} : vector<16x32xbf16>, vector<32x128xbf16>, vector<16x128xf32> -> vector<16x128xf32>
    %380 = arith.addf %370, %379 : vector<16x128xf32>
    %381 = vector.extract_strided_slice %380 {offsets = [0, 0], sizes = [8, 128], strides = [1, 1]} : vector<16x128xf32> to vector<8x128xf32>
    %c0_396 = arith.constant 0 : index
    %c0_397 = arith.constant 0 : index
    %c0_398 = arith.constant 0 : index
    %382 = vector.load %arg4[%c0_396, %c0_397, %c0_398] : memref<2x8x128xf32, #tpu.memory_space<vmem>>, vector<1x8x128xf32>
    %383 = vector.shape_cast %382 : vector<1x8x128xf32> to vector<8x128xf32>
    %384 = vector.shape_cast %381 : vector<8x128xf32> to vector<1x8x128xf32>
    tpu.vector_store %arg4[%c0_396, %c0_397, %c0_398], %384 {strides = array<i32>} : memref<2x8x128xf32, #tpu.memory_space<vmem>>, vector<1x8x128xf32>,
    %385 = vector.extract_strided_slice %380 {offsets = [8, 0], sizes = [8, 128], strides = [1, 1]} : vector<16x128xf32> to vector<8x128xf32>
    %c1_399 = arith.constant 1 : index
    %c0_400 = arith.constant 0 : index
    %c0_401 = arith.constant 0 : index
    %386 = vector.load %arg4[%c1_399, %c0_400, %c0_401] : memref<2x8x128xf32, #tpu.memory_space<vmem>>, vector<1x8x128xf32>
    %387 = vector.shape_cast %386 : vector<1x8x128xf32> to vector<8x128xf32>
    %388 = vector.shape_cast %385 : vector<8x128xf32> to vector<1x8x128xf32>
    tpu.vector_store %arg4[%c1_399, %c0_400, %c0_401], %388 {strides = array<i32>} : memref<2x8x128xf32, #tpu.memory_space<vmem>>, vector<1x8x128xf32>,
    return
  }
  func.func @transform_0(%arg0: i32) -> (i32, i32, i32) {
    %c0_i32 = arith.constant 0 : i32
    %c0_i32_0 = arith.constant 0 : i32
    %c0_i32_1 = arith.constant 0 : i32
    %c0_i32_2 = arith.constant 0 : i32
    return %c0_i32, %c0_i32_0, %c0_i32_1 : i32, i32, i32
  }
  func.func @transform_1(%arg0: i32) -> (i32, i32, i32, i32) {
    %c0_i32 = arith.constant 0 : i32
    %c0_i32_0 = arith.constant 0 : i32
    %c0_i32_1 = arith.constant 0 : i32
    %c0_i32_2 = arith.constant 0 : i32
    %c0_i32_3 = arith.constant 0 : i32
    return %c0_i32, %c0_i32_0, %c0_i32_1, %c0_i32_2 : i32, i32, i32, i32
  }
  func.func @transform_2(%arg0: i32) -> (i32, i32, i32) {
    %c0_i32 = arith.constant 0 : i32
    %c0_i32_0 = arith.constant 0 : i32
    %c0_i32_1 = arith.constant 0 : i32
    %c0_i32_2 = arith.constant 0 : i32
    return %c0_i32, %c0_i32_0, %c0_i32_1 : i32, i32, i32
  }
  func.func @transform_3(%arg0: i32) -> (i32, i32, i32) {
    %c0_i32 = arith.constant 0 : i32
    %c0_i32_0 = arith.constant 0 : i32
    %c0_i32_1 = arith.constant 0 : i32
    %c0_i32_2 = arith.constant 0 : i32
    return %c0_i32, %c0_i32_0, %c0_i32_1 : i32, i32, i32
  }
}

</mosaic_0001>

<llo_original>
// kernel: landmark_embedding.1
$region0: #{landmark_embedding.1}
  #allocation0 [shape = 'u32[]', space=smem, size = 0x4, offset = 0x4, fixed_abs, tag = 'smem constant byte address 0x4 - core index']
  #allocation1 [shape = 'u32[144,128]{1,0:T(1,128)}', space=vmem, size = 0x12000, scoped, tag = 'internal scratch']
  #allocation2 [shape = 'f32[2,18,32]{2,1,0:T(8,128)}', space=vmem, size = 0x6000, scoped, tag = 'scratch operand']
  %s0 = inlined_call_operand.hbm [shape: f32[2,8,32], index: 0, kind: input, shape index: {}]
  %s1 = inlined_call_operand.hbm [shape: bf16[3,11,32,128], index: 1, kind: input, shape index: {}]
  %s2 = inlined_call_operand.vmem [shape: f32[3,1,128], index: 2, kind: input, shape index: {}]
  %s3 = inlined_call_operand.hbm [shape: f32[2,8,128], index: 3, kind: output, shape index: {}]
  %s4 = sld [smem:[#allocation0]]
  $region30: #{landmark_embedding.1} parent=0
    _
  %s6 = ssub.s32 1, %s4
  %s7 = scalar_select 0, %s6, %s4
  $region1: #{landmark_embedding.1} parent=0
    #allocation3 [shape = 'u8[8192]{0}', space=vmem, size = 0x2000, scoped, tag = 'input window, operand 0, single buffered']
    #allocation4 [shape = 's32[1]{0}', space=sflag, size = 0x4, scoped, tag = 'scoped memory for landmark_embedding.1']
    #allocation5 [shape = 's32[1]{0}', space=sflag, size = 0x4, scoped, tag = 'scoped memory for landmark_embedding.1']
    #allocation6 [shape = 'u8[270336]{0}', space=vmem, size = 0x42000, scoped, tag = 'input window, operand 1, single buffered']
    #allocation7 [shape = 's32[1]{0}', space=sflag, size = 0x4, scoped, tag = 'scoped memory for landmark_embedding.1']
    #allocation8 [shape = 'u8[8192]{0}', space=vmem, size = 0x2000, scoped, tag = 'output window, operand 0, single buffered']
    %8 = vsyncpa [#allocation4], 0
    %9 = vsyncpa [#allocation7], 0
    %10 = vsyncpa [#allocation5], 0
    // Predicated region
    $region2: #{landmark_embedding.1} parent=1 // pred_check
      _
    $region3: #{landmark_embedding.1} parent=1 // pred_check_branch
      %12 = sbr.rel (0) target = $region5
    $region4: #{landmark_embedding.1} parent=1 // pred_region
      %s14 = ssub.s32 256, 256
      %15 = vsyncadd [#allocation4], %s14
      %s16 = sshll.u32 [#allocation3], 4
      %s17 = int_to_ptr.vmem [resolvable:$true] %s16
      %22 = dma.hbm_to_vmem [thread:$0]  %s0, 256, %s17, [#allocation4], 128, 128, 8
    $region5: #{landmark_embedding.1} parent=1 // pred_fallthru
      _
    // Predicated region
    $region6: #{landmark_embedding.1} parent=1 // pred_check
      _
    $region7: #{landmark_embedding.1} parent=1 // pred_check_branch
      %24 = sbr.rel (0) target = $region9
    $region8: #{landmark_embedding.1} parent=1 // pred_region
      %s26 = ssub.s32 8448, 8448
      %27 = vsyncadd [#allocation7], %s26
      %s28 = sshll.u32 [#allocation6], 4
      %s29 = int_to_ptr.vmem [resolvable:$true] %s28
      %34 = dma.hbm_to_vmem [thread:$0]  %s1, 8448, %s29, [#allocation7], 64, 64, 4
    $region9: #{landmark_embedding.1} parent=1 // pred_fallthru
      _
    // Predicated region
    $region10: #{landmark_embedding.1} parent=1 // pred_check
      _
    $region11: #{landmark_embedding.1} parent=1 // pred_check_branch
      %36 = sbr.rel (0) target = $region13
    $region12: #{landmark_embedding.1} parent=1 // pred_region
      _
    $region13: #{landmark_embedding.1} parent=1 // pred_fallthru
      _
    // Predicated region
    $region14: #{landmark_embedding.1} parent=1 // pred_check
      _
    $region15: #{landmark_embedding.1} parent=1 // pred_check_branch
      %38 = sbr.rel (0) target = $region17
    $region16: #{landmark_embedding.1} parent=1 // pred_region
      %39 = dma.done [#allocation4], 256
    $region17: #{landmark_embedding.1} parent=1 // pred_fallthru
      _
    // Predicated region
    $region18: #{landmark_embedding.1} parent=1 // pred_check
      _
    $region19: #{landmark_embedding.1} parent=1 // pred_check_branch
      %41 = sbr.rel (0) target = $region21
    $region20: #{landmark_embedding.1} parent=1 // pred_region
      %42 = dma.done [#allocation7], 8448
    $region21: #{landmark_embedding.1} parent=1 // pred_fallthru
      _
    %vm44 = vcmask 258048
    %45 = vst.msk [vmem:[#allocation2] sm:$0x1f] %vm44, 0.0
    %46 = vst.msk [vmem:[#allocation2 + $0xd] sm:$0x1f] %vm44, 0.0
    %v47 = vld [vmem:[#allocation3] sm:$0xff]
    %vm48 = vcmask 261120
    %49 = vst.msk [vmem:[#allocation2 + $0x5] sm:$0xff] %vm48, %v47
    %s50 = scalar_lea.vmem [#allocation2], 24
    %51 = vst.msk [vmem:[%s50] sm:$0x1f] %vm44, 0.0
    %52 = vst.msk [vmem:[%s50 + $0xd] sm:$0x1f] %vm44, 0.0
    %s53 = scalar_lea.vmem [#allocation3], 8
    %v54 = vld [vmem:[%s53] sm:$0xff]
    %55 = vst.msk [vmem:[%s50 + $0x5] sm:$0xff] %vm48, %v54
    %v56 = vld [vmem:[%s2] sm:$0x1]
    %v58 = vlaneseq
    %v59 = vshrl.u32 %v58, 7
    %v60 = vsub.s32 0, %v59
    %v61 = vrot.slane %v56, %v60
    %v63 = vld [vmem:[#allocation2] sm:$0xff]
    %v64 = vld [vmem:[%s50] sm:$0xff]
    %v65 = vpack.c.bf16 %v64, %v63
    %v66 = vld [vmem:[#allocation6] sm:$0xf]
    %v67 = vld [vmem:[#allocation6 + $0x4] sm:$0xf]
    %v68 = vld [vmem:[#allocation6 + $0x8] sm:$0xf]
    %v69 = vld [vmem:[#allocation6 + $0xc] sm:$0xf]
    %v74 = vunpack.c.l.b16 %v66
    %v75 = vunpack.c.l.b16 %v67
    %v76 = vunpack.c.l.b16 %v68
    %v77 = vunpack.c.l.b16 %v69
    %v78 = vpack.c.b16 %v75, %v74
    %v79 = vpack.c.b16 %v77, %v76
    %v83 = vsel %vm48, %v65, 0
    %85 = vmatprep.subr.bf16.mxu0 0
    %86 = vmatpush1.bf16.msra.mxu0 %v78
    %87 = vmatprep.subr.bf16.mxu0 0
    %88 = vmatpush1.bf16.msra.mxu0 %v79
    %89 = vmatprep.subr.bf16.mxu0 0
    %90 = vmatpush1.bf16.msra.mxu0 0
    %91 = vmatprep.subr.bf16.mxu0 0
    %92 = vmatpush1.bf16.msra.mxu0 0
    %93 = vmatprep.subr.bf16.mxu0 0
    %94 = vmatpush1.bf16.msra.mxu0 0
    %95 = vmatprep.subr.bf16.mxu0 0
    %96 = vmatpush1.bf16.msra.mxu0 0
    %97 = vmatprep.subr.bf16.mxu0 0
    %98 = vmatpush1.bf16.msra.mxu0 0
    %99 = vmatprep.subr.bf16.mxu0 0
    %100 = vmatpush1.bf16.msra.mxu0 0
    %101 = vmatprep.subr.bf16.mxu0 0
    %102 = vmatpush1.bf16.msra.mxu0 0
    %103 = vmatprep.subr.bf16.mxu0 0
    %104 = vmatpush1.bf16.msra.mxu0 0
    %105 = vmatprep.subr.bf16.mxu0 0
    %106 = vmatpush1.bf16.msra.mxu0 0
    %107 = vmatprep.subr.bf16.mxu0 0
    %108 = vmatpush1.bf16.msra.mxu0 0
    %109 = vmatprep.subr.bf16.mxu0 0
    %110 = vmatpush1.bf16.msra.mxu0 0
    %111 = vmatprep.subr.bf16.mxu0 0
    %112 = vmatpush1.bf16.msra.mxu0 0
    %113 = vmatprep.subr.bf16.mxu0 0
    %114 = vmatpush1.bf16.msra.mxu0 0
    %115 = vmatprep.subr.bf16.mxu0 0
    %116 = vmatpush1.bf16.msra.mxu0 0
    %117 = vmatprep.mubr.bf16.mxu0 0
    %118 = vmatmul.mubr.bf16.gmra.mrb[0].mxu0 %v83
    %v119 = vpop.f32.mrb[0].mxu0
    %v120 = vadd.f32 0.0, %v119
    %v121 = vpop.f32.mrb[0].mxu0
    %v122 = vpop.f32.mrb[0].mxu0
    %v123 = vadd.f32 0.0, %v122
    %v124 = vpop.f32.mrb[0].mxu0
    %125 = vdwg.mxu0
    %v126 = vadd.f32 %v61, %v120
    %v127 = vadd.f32 %v61, %v123
    %v128 = vld [vmem:[#allocation2 + $0x1] sm:$0xff]
    %v129 = vld [vmem:[%s50 + $0x1] sm:$0xff]
    %v130 = vpack.c.bf16 %v129, %v128
    %s131 = scalar_lea.vmem [#allocation6], 16
    %v132 = vld [vmem:[%s131] sm:$0xf]
    %v133 = vld [vmem:[%s131 + $0x4] sm:$0xf]
    %v134 = vld [vmem:[%s131 + $0x8] sm:$0xf]
    %v135 = vld [vmem:[%s131 + $0xc] sm:$0xf]
    %v140 = vunpack.c.l.b16 %v132
    %v141 = vunpack.c.l.b16 %v133
    %v142 = vunpack.c.l.b16 %v134
    %v143 = vunpack.c.l.b16 %v135
    %v144 = vpack.c.b16 %v141, %v140
    %v145 = vpack.c.b16 %v143, %v142
    %v149 = vsel %vm48, %v130, 0
    %151 = vmatprep.subr.bf16.mxu0 0
    %152 = vmatpush1.bf16.msra.mxu0 %v144
    %153 = vmatprep.subr.bf16.mxu0 0
    %154 = vmatpush1.bf16.msra.mxu0 %v145
    %155 = vmatprep.subr.bf16.mxu0 0
    %156 = vmatpush1.bf16.msra.mxu0 0
    %157 = vmatprep.subr.bf16.mxu0 0
    %158 = vmatpush1.bf16.msra.mxu0 0
    %159 = vmatprep.subr.bf16.mxu0 0
    %160 = vmatpush1.bf16.msra.mxu0 0
    %161 = vmatprep.subr.bf16.mxu0 0
    %162 = vmatpush1.bf16.msra.mxu0 0
    %163 = vmatprep.subr.bf16.mxu0 0
    %164 = vmatpush1.bf16.msra.mxu0 0
    %165 = vmatprep.subr.bf16.mxu0 0
    %166 = vmatpush1.bf16.msra.mxu0 0
    %167 = vmatprep.subr.bf16.mxu0 0
    %168 = vmatpush1.bf16.msra.mxu0 0
    %169 = vmatprep.subr.bf16.mxu0 0
    %170 = vmatpush1.bf16.msra.mxu0 0
    %171 = vmatprep.subr.bf16.mxu0 0
    %172 = vmatpush1.bf16.msra.mxu0 0
    %173 = vmatprep.subr.bf16.mxu0 0
    %174 = vmatpush1.bf16.msra.mxu0 0
    %175 = vmatprep.subr.bf16.mxu0 0
    %176 = vmatpush1.bf16.msra.mxu0 0
    %177 = vmatprep.subr.bf16.mxu0 0
    %178 = vmatpush1.bf16.msra.mxu0 0
    %179 = vmatprep.subr.bf16.mxu0 0
    %180 = vmatpush1.bf16.msra.mxu0 0
    %181 = vmatprep.subr.bf16.mxu0 0
    %182 = vmatpush1.bf16.msra.mxu0 0
    %183 = vmatprep.mubr.bf16.mxu0 0
    %184 = vmatmul.mubr.bf16.gmra.mrb[0].mxu0 %v149
    %v185 = vpop.f32.mrb[0].mxu0
    %v186 = vadd.f32 0.0, %v185
    %v187 = vpop.f32.mrb[0].mxu0
    %v188 = vpop.f32.mrb[0].mxu0
    %v189 = vadd.f32 0.0, %v188
    %v190 = vpop.f32.mrb[0].mxu0
    %191 = vdwg.mxu0
    %v192 = vadd.f32 %v126, %v186
    %v193 = vadd.f32 %v127, %v189
    %v194 = vld [vmem:[#allocation2 + $0x2] sm:$0xff]
    %v195 = vld [vmem:[%s50 + $0x2] sm:$0xff]
    %v196 = vpack.c.bf16 %v195, %v194
    %s197 = scalar_lea.vmem [#allocation6], 32
    %v198 = vld [vmem:[%s197] sm:$0xf]
    %v199 = vld [vmem:[%s197 + $0x4] sm:$0xf]
    %v200 = vld [vmem:[%s197 + $0x8] sm:$0xf]
    %v201 = vld [vmem:[%s197 + $0xc] sm:$0xf]
    %v206 = vunpack.c.l.b16 %v198
    %v207 = vunpack.c.l.b16 %v199
    %v208 = vunpack.c.l.b16 %v200
    %v209 = vunpack.c.l.b16 %v201
    %v210 = vpack.c.b16 %v207, %v206
    %v211 = vpack.c.b16 %v209, %v208
    %v215 = vsel %vm48, %v196, 0
    %217 = vmatprep.subr.bf16.mxu0 0
    %218 = vmatpush1.bf16.msra.mxu0 %v210
    %219 = vmatprep.subr.bf16.mxu0 0
    %220 = vmatpush1.bf16.msra.mxu0 %v211
    %221 = vmatprep.subr.bf16.mxu0 0
    %222 = vmatpush1.bf16.msra.mxu0 0
    %223 = vmatprep.subr.bf16.mxu0 0
    %224 = vmatpush1.bf16.msra.mxu0 0
    %225 = vmatprep.subr.bf16.mxu0 0
    %226 = vmatpush1.bf16.msra.mxu0 0
    %227 = vmatprep.subr.bf16.mxu0 0
    %228 = vmatpush1.bf16.msra.mxu0 0
    %229 = vmatprep.subr.bf16.mxu0 0
    %230 = vmatpush1.bf16.msra.mxu0 0
    %231 = vmatprep.subr.bf16.mxu0 0
    %232 = vmatpush1.bf16.msra.mxu0 0
    %233 = vmatprep.subr.bf16.mxu0 0
    %234 = vmatpush1.bf16.msra.mxu0 0
    %235 = vmatprep.subr.bf16.mxu0 0
    %236 = vmatpush1.bf16.msra.mxu0 0
    %237 = vmatprep.subr.bf16.mxu0 0
    %238 = vmatpush1.bf16.msra.mxu0 0
    %239 = vmatprep.subr.bf16.mxu0 0
    %240 = vmatpush1.bf16.msra.mxu0 0
    %241 = vmatprep.subr.bf16.mxu0 0
    %242 = vmatpush1.bf16.msra.mxu0 0
    %243 = vmatprep.subr.bf16.mxu0 0
    %244 = vmatpush1.bf16.msra.mxu0 0
    %245 = vmatprep.subr.bf16.mxu0 0
    %246 = vmatpush1.bf16.msra.mxu0 0
    %247 = vmatprep.subr.bf16.mxu0 0
    %248 = vmatpush1.bf16.msra.mxu0 0
    %249 = vmatprep.mubr.bf16.mxu0 0
    %250 = vmatmul.mubr.bf16.gmra.mrb[0].mxu0 %v215
    %v251 = vpop.f32.mrb[0].mxu0
    %v252 = vadd.f32 0.0, %v251
    %v253 = vpop.f32.mrb[0].mxu0
    %v254 = vpop.f32.mrb[0].mxu0
    %v255 = vadd.f32 0.0, %v254
    %v256 = vpop.f32.mrb[0].mxu0
    %257 = vdwg.mxu0
    %v258 = vadd.f32 %v192, %v252
    %v259 = vadd.f32 %v193, %v255
    %v260 = vld [vmem:[#allocation2 + $0x3] sm:$0xff]
    %v261 = vld [vmem:[%s50 + $0x3] sm:$0xff]
    %v262 = vpack.c.bf16 %v261, %v260
    %s263 = scalar_lea.vmem [#allocation6], 48
    %v264 = vld [vmem:[%s263] sm:$0xf]
    %v265 = vld [vmem:[%s263 + $0x4] sm:$0xf]
    %v266 = vld [vmem:[%s263 + $0x8] sm:$0xf]
    %v267 = vld [vmem:[%s263 + $0xc] sm:$0xf]
    %v272 = vunpack.c.l.b16 %v264
    %v273 = vunpack.c.l.b16 %v265
    %v274 = vunpack.c.l.b16 %v266
    %v275 = vunpack.c.l.b16 %v267
    %v276 = vpack.c.b16 %v273, %v272
    %v277 = vpack.c.b16 %v275, %v274
    %v281 = vsel %vm48, %v262, 0
    %283 = vmatprep.subr.bf16.mxu0 0
    %284 = vmatpush1.bf16.msra.mxu0 %v276
    %285 = vmatprep.subr.bf16.mxu0 0
    %286 = vmatpush1.bf16.msra.mxu0 %v277
    %287 = vmatprep.subr.bf16.mxu0 0
    %288 = vmatpush1.bf16.msra.mxu0 0
    %289 = vmatprep.subr.bf16.mxu0 0
    %290 = vmatpush1.bf16.msra.mxu0 0
    %291 = vmatprep.subr.bf16.mxu0 0
    %292 = vmatpush1.bf16.msra.mxu0 0
    %293 = vmatprep.subr.bf16.mxu0 0
    %294 = vmatpush1.bf16.msra.mxu0 0
    %295 = vmatprep.subr.bf16.mxu0 0
    %296 = vmatpush1.bf16.msra.mxu0 0
    %297 = vmatprep.subr.bf16.mxu0 0
    %298 = vmatpush1.bf16.msra.mxu0 0
    %299 = vmatprep.subr.bf16.mxu0 0
    %300 = vmatpush1.bf16.msra.mxu0 0
    %301 = vmatprep.subr.bf16.mxu0 0
    %302 = vmatpush1.bf16.msra.mxu0 0
    %303 = vmatprep.subr.bf16.mxu0 0
    %304 = vmatpush1.bf16.msra.mxu0 0
    %305 = vmatprep.subr.bf16.mxu0 0
    %306 = vmatpush1.bf16.msra.mxu0 0
    %307 = vmatprep.subr.bf16.mxu0 0
    %308 = vmatpush1.bf16.msra.mxu0 0
    %309 = vmatprep.subr.bf16.mxu0 0
    %310 = vmatpush1.bf16.msra.mxu0 0
    %311 = vmatprep.subr.bf16.mxu0 0
    %312 = vmatpush1.bf16.msra.mxu0 0
    %313 = vmatprep.subr.bf16.mxu0 0
    %314 = vmatpush1.bf16.msra.mxu0 0
    %315 = vmatprep.mubr.bf16.mxu0 0
    %316 = vmatmul.mubr.bf16.gmra.mrb[0].mxu0 %v281
    %v317 = vpop.f32.mrb[0].mxu0
    %v318 = vadd.f32 0.0, %v317
    %v319 = vpop.f32.mrb[0].mxu0
    %v320 = vpop.f32.mrb[0].mxu0
    %v321 = vadd.f32 0.0, %v320
    %v322 = vpop.f32.mrb[0].mxu0
    %323 = vdwg.mxu0
    %v324 = vadd.f32 %v258, %v318
    %v325 = vadd.f32 %v259, %v321
    %v326 = vld [vmem:[#allocation2 + $0x4] sm:$0xff]
    %v327 = vld [vmem:[%s50 + $0x4] sm:$0xff]
    %v328 = vpack.c.bf16 %v327, %v326
    %s329 = scalar_lea.vmem [#allocation6], 64
    %v330 = vld [vmem:[%s329] sm:$0xf]
    %v331 = vld [vmem:[%s329 + $0x4] sm:$0xf]
    %v332 = vld [vmem:[%s329 + $0x8] sm:$0xf]
    %v333 = vld [vmem:[%s329 + $0xc] sm:$0xf]
    %v338 = vunpack.c.l.b16 %v330
    %v339 = vunpack.c.l.b16 %v331
    %v340 = vunpack.c.l.b16 %v332
    %v341 = vunpack.c.l.b16 %v333
    %v342 = vpack.c.b16 %v339, %v338
    %v343 = vpack.c.b16 %v341, %v340
    %v347 = vsel %vm48, %v328, 0
    %349 = vmatprep.subr.bf16.mxu0 0
    %350 = vmatpush1.bf16.msra.mxu0 %v342
    %351 = vmatprep.subr.bf16.mxu0 0
    %352 = vmatpush1.bf16.msra.mxu0 %v343
    %353 = vmatprep.subr.bf16.mxu0 0
    %354 = vmatpush1.bf16.msra.mxu0 0
    %355 = vmatprep.subr.bf16.mxu0 0
    %356 = vmatpush1.bf16.msra.mxu0 0
    %357 = vmatprep.subr.bf16.mxu0 0
    %358 = vmatpush1.bf16.msra.mxu0 0
    %359 = vmatprep.subr.bf16.mxu0 0
    %360 = vmatpush1.bf16.msra.mxu0 0
    %361 = vmatprep.subr.bf16.mxu0 0
    %362 = vmatpush1.bf16.msra.mxu0 0
    %363 = vmatprep.subr.bf16.mxu0 0
    %364 = vmatpush1.bf16.msra.mxu0 0
    %365 = vmatprep.subr.bf16.mxu0 0
    %366 = vmatpush1.bf16.msra.mxu0 0
    %367 = vmatprep.subr.bf16.mxu0 0
    %368 = vmatpush1.bf16.msra.mxu0 0
    %369 = vmatprep.subr.bf16.mxu0 0
    %370 = vmatpush1.bf16.msra.mxu0 0
    %371 = vmatprep.subr.bf16.mxu0 0
    %372 = vmatpush1.bf16.msra.mxu0 0
    %373 = vmatprep.subr.bf16.mxu0 0
    %374 = vmatpush1.bf16.msra.mxu0 0
    %375 = vmatprep.subr.bf16.mxu0 0
    %376 = vmatpush1.bf16.msra.mxu0 0
    %377 = vmatprep.subr.bf16.mxu0 0
    %378 = vmatpush1.bf16.msra.mxu0 0
    %379 = vmatprep.subr.bf16.mxu0 0
    %380 = vmatpush1.bf16.msra.mxu0 0
    %381 = vmatprep.mubr.bf16.mxu0 0
    %382 = vmatmul.mubr.bf16.gmra.mrb[0].mxu0 %v347
    %v383 = vpop.f32.mrb[0].mxu0
    %v384 = vadd.f32 0.0, %v383
    %v385 = vpop.f32.mrb[0].mxu0
    %v386 = vpop.f32.mrb[0].mxu0
    %v387 = vadd.f32 0.0, %v386
    %v388 = vpop.f32.mrb[0].mxu0
    %389 = vdwg.mxu0
    %v390 = vadd.f32 %v324, %v384
    %v391 = vadd.f32 %v325, %v387
    %v392 = vld [vmem:[#allocation2 + $0x5] sm:$0xff]
    %v393 = vld [vmem:[%s50 + $0x5] sm:$0xff]
    %v394 = vpack.c.bf16 %v393, %v392
    %s395 = scalar_lea.vmem [#allocation6], 80
    %v396 = vld [vmem:[%s395] sm:$0xf]
    %v397 = vld [vmem:[%s395 + $0x4] sm:$0xf]
    %v398 = vld [vmem:[%s395 + $0x8] sm:$0xf]
    %v399 = vld [vmem:[%s395 + $0xc] sm:$0xf]
    %v404 = vunpack.c.l.b16 %v396
    %v405 = vunpack.c.l.b16 %v397
    %v406 = vunpack.c.l.b16 %v398
    %v407 = vunpack.c.l.b16 %v399
    %v408 = vpack.c.b16 %v405, %v404
    %v409 = vpack.c.b16 %v407, %v406
    %v413 = vsel %vm48, %v394, 0
    %415 = vmatprep.subr.bf16.mxu0 0
    %416 = vmatpush1.bf16.msra.mxu0 %v408
    %417 = vmatprep.subr.bf16.mxu0 0
    %418 = vmatpush1.bf16.msra.mxu0 %v409
    %419 = vmatprep.subr.bf16.mxu0 0
    %420 = vmatpush1.bf16.msra.mxu0 0
    %421 = vmatprep.subr.bf16.mxu0 0
    %422 = vmatpush1.bf16.msra.mxu0 0
    %423 = vmatprep.subr.bf16.mxu0 0
    %424 = vmatpush1.bf16.msra.mxu0 0
    %425 = vmatprep.subr.bf16.mxu0 0
    %426 = vmatpush1.bf16.msra.mxu0 0
    %427 = vmatprep.subr.bf16.mxu0 0
    %428 = vmatpush1.bf16.msra.mxu0 0
    %429 = vmatprep.subr.bf16.mxu0 0
    %430 = vmatpush1.bf16.msra.mxu0 0
    %431 = vmatprep.subr.bf16.mxu0 0
    %432 = vmatpush1.bf16.msra.mxu0 0
    %433 = vmatprep.subr.bf16.mxu0 0
    %434 = vmatpush1.bf16.msra.mxu0 0
    %435 = vmatprep.subr.bf16.mxu0 0
    %436 = vmatpush1.bf16.msra.mxu0 0
    %437 = vmatprep.subr.bf16.mxu0 0
    %438 = vmatpush1.bf16.msra.mxu0 0
    %439 = vmatprep.subr.bf16.mxu0 0
    %440 = vmatpush1.bf16.msra.mxu0 0
    %441 = vmatprep.subr.bf16.mxu0 0
    %442 = vmatpush1.bf16.msra.mxu0 0
    %443 = vmatprep.subr.bf16.mxu0 0
    %444 = vmatpush1.bf16.msra.mxu0 0
    %445 = vmatprep.subr.bf16.mxu0 0
    %446 = vmatpush1.bf16.msra.mxu0 0
    %447 = vmatprep.mubr.bf16.mxu0 0
    %448 = vmatmul.mubr.bf16.gmra.mrb[0].mxu0 %v413
    %v449 = vpop.f32.mrb[0].mxu0
    %v450 = vadd.f32 0.0, %v449
    %v451 = vpop.f32.mrb[0].mxu0
    %v452 = vpop.f32.mrb[0].mxu0
    %v453 = vadd.f32 0.0, %v452
    %v454 = vpop.f32.mrb[0].mxu0
    %455 = vdwg.mxu0
    %v456 = vadd.f32 %v390, %v450
    %v457 = vadd.f32 %v391, %v453
    %v458 = vld [vmem:[#allocation2 + $0x6] sm:$0xff]
    %v459 = vld [vmem:[%s50 + $0x6] sm:$0xff]
    %v460 = vpack.c.bf16 %v459, %v458
    %s461 = scalar_lea.vmem [#allocation6], 96
    %v462 = vld [vmem:[%s461] sm:$0xf]
    %v463 = vld [vmem:[%s461 + $0x4] sm:$0xf]
    %v464 = vld [vmem:[%s461 + $0x8] sm:$0xf]
    %v465 = vld [vmem:[%s461 + $0xc] sm:$0xf]
    %v470 = vunpack.c.l.b16 %v462
    %v471 = vunpack.c.l.b16 %v463
    %v472 = vunpack.c.l.b16 %v464
    %v473 = vunpack.c.l.b16 %v465
    %v474 = vpack.c.b16 %v471, %v470
    %v475 = vpack.c.b16 %v473, %v472
    %v479 = vsel %vm48, %v460, 0
    %481 = vmatprep.subr.bf16.mxu0 0
    %482 = vmatpush1.bf16.msra.mxu0 %v474
    %483 = vmatprep.subr.bf16.mxu0 0
    %484 = vmatpush1.bf16.msra.mxu0 %v475
    %485 = vmatprep.subr.bf16.mxu0 0
    %486 = vmatpush1.bf16.msra.mxu0 0
    %487 = vmatprep.subr.bf16.mxu0 0
    %488 = vmatpush1.bf16.msra.mxu0 0
    %489 = vmatprep.subr.bf16.mxu0 0
    %490 = vmatpush1.bf16.msra.mxu0 0
    %491 = vmatprep.subr.bf16.mxu0 0
    %492 = vmatpush1.bf16.msra.mxu0 0
    %493 = vmatprep.subr.bf16.mxu0 0
    %494 = vmatpush1.bf16.msra.mxu0 0
    %495 = vmatprep.subr.bf16.mxu0 0
    %496 = vmatpush1.bf16.msra.mxu0 0
    %497 = vmatprep.subr.bf16.mxu0 0
    %498 = vmatpush1.bf16.msra.mxu0 0
    %499 = vmatprep.subr.bf16.mxu0 0
    %500 = vmatpush1.bf16.msra.mxu0 0
    %501 = vmatprep.subr.bf16.mxu0 0
    %502 = vmatpush1.bf16.msra.mxu0 0
    %503 = vmatprep.subr.bf16.mxu0 0
    %504 = vmatpush1.bf16.msra.mxu0 0
    %505 = vmatprep.subr.bf16.mxu0 0
    %506 = vmatpush1.bf16.msra.mxu0 0
    %507 = vmatprep.subr.bf16.mxu0 0
    %508 = vmatpush1.bf16.msra.mxu0 0
    %509 = vmatprep.subr.bf16.mxu0 0
    %510 = vmatpush1.bf16.msra.mxu0 0
    %511 = vmatprep.subr.bf16.mxu0 0
    %512 = vmatpush1.bf16.msra.mxu0 0
    %513 = vmatprep.mubr.bf16.mxu0 0
    %514 = vmatmul.mubr.bf16.gmra.mrb[0].mxu0 %v479
    %v515 = vpop.f32.mrb[0].mxu0
    %v516 = vadd.f32 0.0, %v515
    %v517 = vpop.f32.mrb[0].mxu0
    %v518 = vpop.f32.mrb[0].mxu0
    %v519 = vadd.f32 0.0, %v518
    %v520 = vpop.f32.mrb[0].mxu0
    %521 = vdwg.mxu0
    %v522 = vadd.f32 %v456, %v516
    %v523 = vadd.f32 %v457, %v519
    %v524 = vld [vmem:[#allocation2 + $0x7] sm:$0xff]
    %v525 = vld [vmem:[%s50 + $0x7] sm:$0xff]
    %v526 = vpack.c.bf16 %v525, %v524
    %s527 = scalar_lea.vmem [#allocation6], 112
    %v528 = vld [vmem:[%s527] sm:$0xf]
    %v529 = vld [vmem:[%s527 + $0x4] sm:$0xf]
    %v530 = vld [vmem:[%s527 + $0x8] sm:$0xf]
    %v531 = vld [vmem:[%s527 + $0xc] sm:$0xf]
    %v536 = vunpack.c.l.b16 %v528
    %v537 = vunpack.c.l.b16 %v529
    %v538 = vunpack.c.l.b16 %v530
    %v539 = vunpack.c.l.b16 %v531
    %v540 = vpack.c.b16 %v537, %v536
    %v541 = vpack.c.b16 %v539, %v538
    %v545 = vsel %vm48, %v526, 0
    %547 = vmatprep.subr.bf16.mxu0 0
    %548 = vmatpush1.bf16.msra.mxu0 %v540
    %549 = vmatprep.subr.bf16.mxu0 0
    %550 = vmatpush1.bf16.msra.mxu0 %v541
    %551 = vmatprep.subr.bf16.mxu0 0
    %552 = vmatpush1.bf16.msra.mxu0 0
    %553 = vmatprep.subr.bf16.mxu0 0
    %554 = vmatpush1.bf16.msra.mxu0 0
    %555 = vmatprep.subr.bf16.mxu0 0
    %556 = vmatpush1.bf16.msra.mxu0 0
    %557 = vmatprep.subr.bf16.mxu0 0
    %558 = vmatpush1.bf16.msra.mxu0 0
    %559 = vmatprep.subr.bf16.mxu0 0
    %560 = vmatpush1.bf16.msra.mxu0 0
    %561 = vmatprep.subr.bf16.mxu0 0
    %562 = vmatpush1.bf16.msra.mxu0 0
    %563 = vmatprep.subr.bf16.mxu0 0
    %564 = vmatpush1.bf16.msra.mxu0 0
    %565 = vmatprep.subr.bf16.mxu0 0
    %566 = vmatpush1.bf16.msra.mxu0 0
    %567 = vmatprep.subr.bf16.mxu0 0
    %568 = vmatpush1.bf16.msra.mxu0 0
    %569 = vmatprep.subr.bf16.mxu0 0
    %570 = vmatpush1.bf16.msra.mxu0 0
    %571 = vmatprep.subr.bf16.mxu0 0
    %572 = vmatpush1.bf16.msra.mxu0 0
    %573 = vmatprep.subr.bf16.mxu0 0
    %574 = vmatpush1.bf16.msra.mxu0 0
    %575 = vmatprep.subr.bf16.mxu0 0
    %576 = vmatpush1.bf16.msra.mxu0 0
    %577 = vmatprep.subr.bf16.mxu0 0
    %578 = vmatpush1.bf16.msra.mxu0 0
    %579 = vmatprep.mubr.bf16.mxu0 0
    %580 = vmatmul.mubr.bf16.gmra.mrb[0].mxu0 %v545
    %v581 = vpop.f32.mrb[0].mxu0
    %v582 = vadd.f32 0.0, %v581
    %v583 = vpop.f32.mrb[0].mxu0
    %v584 = vpop.f32.mrb[0].mxu0
    %v585 = vadd.f32 0.0, %v584
    %v586 = vpop.f32.mrb[0].mxu0
    %587 = vdwg.mxu0
    %v588 = vadd.f32 %v522, %v582
    %v589 = vadd.f32 %v523, %v585
    %v590 = vld [vmem:[#allocation2 + $0x8] sm:$0xff]
    %v591 = vld [vmem:[%s50 + $0x8] sm:$0xff]
    %v592 = vpack.c.bf16 %v591, %v590
    %s593 = scalar_lea.vmem [#allocation6], 128
    %v594 = vld [vmem:[%s593] sm:$0xf]
    %v595 = vld [vmem:[%s593 + $0x4] sm:$0xf]
    %v596 = vld [vmem:[%s593 + $0x8] sm:$0xf]
    %v597 = vld [vmem:[%s593 + $0xc] sm:$0xf]
    %v602 = vunpack.c.l.b16 %v594
    %v603 = vunpack.c.l.b16 %v595
    %v604 = vunpack.c.l.b16 %v596
    %v605 = vunpack.c.l.b16 %v597
    %v606 = vpack.c.b16 %v603, %v602
    %v607 = vpack.c.b16 %v605, %v604
    %v611 = vsel %vm48, %v592, 0
    %613 = vmatprep.subr.bf16.mxu0 0
    %614 = vmatpush1.bf16.msra.mxu0 %v606
    %615 = vmatprep.subr.bf16.mxu0 0
    %616 = vmatpush1.bf16.msra.mxu0 %v607
    %617 = vmatprep.subr.bf16.mxu0 0
    %618 = vmatpush1.bf16.msra.mxu0 0
    %619 = vmatprep.subr.bf16.mxu0 0
    %620 = vmatpush1.bf16.msra.mxu0 0
    %621 = vmatprep.subr.bf16.mxu0 0
    %622 = vmatpush1.bf16.msra.mxu0 0
    %623 = vmatprep.subr.bf16.mxu0 0
    %624 = vmatpush1.bf16.msra.mxu0 0
    %625 = vmatprep.subr.bf16.mxu0 0
    %626 = vmatpush1.bf16.msra.mxu0 0
    %627 = vmatprep.subr.bf16.mxu0 0
    %628 = vmatpush1.bf16.msra.mxu0 0
    %629 = vmatprep.subr.bf16.mxu0 0
    %630 = vmatpush1.bf16.msra.mxu0 0
    %631 = vmatprep.subr.bf16.mxu0 0
    %632 = vmatpush1.bf16.msra.mxu0 0
    %633 = vmatprep.subr.bf16.mxu0 0
    %634 = vmatpush1.bf16.msra.mxu0 0
    %635 = vmatprep.subr.bf16.mxu0 0
    %636 = vmatpush1.bf16.msra.mxu0 0
    %637 = vmatprep.subr.bf16.mxu0 0
    %638 = vmatpush1.bf16.msra.mxu0 0
    %639 = vmatprep.subr.bf16.mxu0 0
    %640 = vmatpush1.bf16.msra.mxu0 0
    %641 = vmatprep.subr.bf16.mxu0 0
    %642 = vmatpush1.bf16.msra.mxu0 0
    %643 = vmatprep.subr.bf16.mxu0 0
    %644 = vmatpush1.bf16.msra.mxu0 0
    %645 = vmatprep.mubr.bf16.mxu0 0
    %646 = vmatmul.mubr.bf16.gmra.mrb[0].mxu0 %v611
    %v647 = vpop.f32.mrb[0].mxu0
    %v648 = vadd.f32 0.0, %v647
    %v649 = vpop.f32.mrb[0].mxu0
    %v650 = vpop.f32.mrb[0].mxu0
    %v651 = vadd.f32 0.0, %v650
    %v652 = vpop.f32.mrb[0].mxu0
    %653 = vdwg.mxu0
    %v654 = vadd.f32 %v588, %v648
    %v655 = vadd.f32 %v589, %v651
    %v656 = vld [vmem:[#allocation2 + $0x9] sm:$0xff]
    %v657 = vld [vmem:[%s50 + $0x9] sm:$0xff]
    %v658 = vpack.c.bf16 %v657, %v656
    %s659 = scalar_lea.vmem [#allocation6], 144
    %v660 = vld [vmem:[%s659] sm:$0xf]
    %v661 = vld [vmem:[%s659 + $0x4] sm:$0xf]
    %v662 = vld [vmem:[%s659 + $0x8] sm:$0xf]
    %v663 = vld [vmem:[%s659 + $0xc] sm:$0xf]
    %v668 = vunpack.c.l.b16 %v660
    %v669 = vunpack.c.l.b16 %v661
    %v670 = vunpack.c.l.b16 %v662
    %v671 = vunpack.c.l.b16 %v663
    %v672 = vpack.c.b16 %v669, %v668
    %v673 = vpack.c.b16 %v671, %v670
    %v677 = vsel %vm48, %v658, 0
    %679 = vmatprep.subr.bf16.mxu0 0
    %680 = vmatpush1.bf16.msra.mxu0 %v672
    %681 = vmatprep.subr.bf16.mxu0 0
    %682 = vmatpush1.bf16.msra.mxu0 %v673
    %683 = vmatprep.subr.bf16.mxu0 0
    %684 = vmatpush1.bf16.msra.mxu0 0
    %685 = vmatprep.subr.bf16.mxu0 0
    %686 = vmatpush1.bf16.msra.mxu0 0
    %687 = vmatprep.subr.bf16.mxu0 0
    %688 = vmatpush1.bf16.msra.mxu0 0
    %689 = vmatprep.subr.bf16.mxu0 0
    %690 = vmatpush1.bf16.msra.mxu0 0
    %691 = vmatprep.subr.bf16.mxu0 0
    %692 = vmatpush1.bf16.msra.mxu0 0
    %693 = vmatprep.subr.bf16.mxu0 0
    %694 = vmatpush1.bf16.msra.mxu0 0
    %695 = vmatprep.subr.bf16.mxu0 0
    %696 = vmatpush1.bf16.msra.mxu0 0
    %697 = vmatprep.subr.bf16.mxu0 0
    %698 = vmatpush1.bf16.msra.mxu0 0
    %699 = vmatprep.subr.bf16.mxu0 0
    %700 = vmatpush1.bf16.msra.mxu0 0
    %701 = vmatprep.subr.bf16.mxu0 0
    %702 = vmatpush1.bf16.msra.mxu0 0
    %703 = vmatprep.subr.bf16.mxu0 0
    %704 = vmatpush1.bf16.msra.mxu0 0
    %705 = vmatprep.subr.bf16.mxu0 0
    %706 = vmatpush1.bf16.msra.mxu0 0
    %707 = vmatprep.subr.bf16.mxu0 0
    %708 = vmatpush1.bf16.msra.mxu0 0
    %709 = vmatprep.subr.bf16.mxu0 0
    %710 = vmatpush1.bf16.msra.mxu0 0
    %711 = vmatprep.mubr.bf16.mxu0 0
    %712 = vmatmul.mubr.bf16.gmra.mrb[0].mxu0 %v677
    %v713 = vpop.f32.mrb[0].mxu0
    %v714 = vadd.f32 0.0, %v713
    %v715 = vpop.f32.mrb[0].mxu0
    %v716 = vpop.f32.mrb[0].mxu0
    %v717 = vadd.f32 0.0, %v716
    %v718 = vpop.f32.mrb[0].mxu0
    %719 = vdwg.mxu0
    %v720 = vadd.f32 %v654, %v714
    %v721 = vadd.f32 %v655, %v717
    %v722 = vld [vmem:[#allocation2 + $0xa] sm:$0xff]
    %v723 = vld [vmem:[%s50 + $0xa] sm:$0xff]
    %v724 = vpack.c.bf16 %v723, %v722
    %s725 = scalar_lea.vmem [#allocation6], 160
    %v726 = vld [vmem:[%s725] sm:$0xf]
    %v727 = vld [vmem:[%s725 + $0x4] sm:$0xf]
    %v728 = vld [vmem:[%s725 + $0x8] sm:$0xf]
    %v729 = vld [vmem:[%s725 + $0xc] sm:$0xf]
    %v734 = vunpack.c.l.b16 %v726
    %v735 = vunpack.c.l.b16 %v727
    %v736 = vunpack.c.l.b16 %v728
    %v737 = vunpack.c.l.b16 %v729
    %v738 = vpack.c.b16 %v735, %v734
    %v739 = vpack.c.b16 %v737, %v736
    %v743 = vsel %vm48, %v724, 0
    %745 = vmatprep.subr.bf16.mxu0 0
    %746 = vmatpush1.bf16.msra.mxu0 %v738
    %747 = vmatprep.subr.bf16.mxu0 0
    %748 = vmatpush1.bf16.msra.mxu0 %v739
    %749 = vmatprep.subr.bf16.mxu0 0
    %750 = vmatpush1.bf16.msra.mxu0 0
    %751 = vmatprep.subr.bf16.mxu0 0
    %752 = vmatpush1.bf16.msra.mxu0 0
    %753 = vmatprep.subr.bf16.mxu0 0
    %754 = vmatpush1.bf16.msra.mxu0 0
    %755 = vmatprep.subr.bf16.mxu0 0
    %756 = vmatpush1.bf16.msra.mxu0 0
    %757 = vmatprep.subr.bf16.mxu0 0
    %758 = vmatpush1.bf16.msra.mxu0 0
    %759 = vmatprep.subr.bf16.mxu0 0
    %760 = vmatpush1.bf16.msra.mxu0 0
    %761 = vmatprep.subr.bf16.mxu0 0
    %762 = vmatpush1.bf16.msra.mxu0 0
    %763 = vmatprep.subr.bf16.mxu0 0
    %764 = vmatpush1.bf16.msra.mxu0 0
    %765 = vmatprep.subr.bf16.mxu0 0
    %766 = vmatpush1.bf16.msra.mxu0 0
    %767 = vmatprep.subr.bf16.mxu0 0
    %768 = vmatpush1.bf16.msra.mxu0 0
    %769 = vmatprep.subr.bf16.mxu0 0
    %770 = vmatpush1.bf16.msra.mxu0 0
    %771 = vmatprep.subr.bf16.mxu0 0
    %772 = vmatpush1.bf16.msra.mxu0 0
    %773 = vmatprep.subr.bf16.mxu0 0
    %774 = vmatpush1.bf16.msra.mxu0 0
    %775 = vmatprep.subr.bf16.mxu0 0
    %776 = vmatpush1.bf16.msra.mxu0 0
    %777 = vmatprep.mubr.bf16.mxu0 0
    %778 = vmatmul.mubr.bf16.gmra.mrb[0].mxu0 %v743
    %v779 = vpop.f32.mrb[0].mxu0
    %v780 = vadd.f32 0.0, %v779
    %v781 = vpop.f32.mrb[0].mxu0
    %v782 = vpop.f32.mrb[0].mxu0
    %v783 = vadd.f32 0.0, %v782
    %v784 = vpop.f32.mrb[0].mxu0
    %785 = vdwg.mxu0
    %v786 = vadd.f32 %v720, %v780
    %v787 = vadd.f32 %v721, %v783
    %788 = vst.msk [vmem:[#allocation2 + $0x5] sm:$0xff] %vm48, %v786
    %789 = vst.msk [vmem:[%s50 + $0x5] sm:$0xff] %vm48, %v787
    %s790 = scalar_lea.vmem %s2, 1
    %v791 = vld [vmem:[%s790] sm:$0x1]
    %v793 = vlaneseq
    %v794 = vshrl.u32 %v793, 7
    %v795 = vsub.s32 0, %v794
    %v796 = vrot.slane %v791, %v795
    %v798 = vld [vmem:[#allocation2] sm:$0xff]
    %v799 = vld [vmem:[%s50] sm:$0xff]
    %v800 = vpack.c.bf16 %v799, %v798
    %s801 = scalar_lea.vmem [#allocation6], 176
    %v802 = vld [vmem:[%s801] sm:$0xf]
    %v803 = vld [vmem:[%s801 + $0x4] sm:$0xf]
    %v804 = vld [vmem:[%s801 + $0x8] sm:$0xf]
    %v805 = vld [vmem:[%s801 + $0xc] sm:$0xf]
    %v810 = vunpack.c.l.b16 %v802
    %v811 = vunpack.c.l.b16 %v803
    %v812 = vunpack.c.l.b16 %v804
    %v813 = vunpack.c.l.b16 %v805
    %v814 = vpack.c.b16 %v811, %v810
    %v815 = vpack.c.b16 %v813, %v812
    %v819 = vsel %vm48, %v800, 0
    %821 = vmatprep.subr.bf16.mxu0 0
    %822 = vmatpush1.bf16.msra.mxu0 %v814
    %823 = vmatprep.subr.bf16.mxu0 0
    %824 = vmatpush1.bf16.msra.mxu0 %v815
    %825 = vmatprep.subr.bf16.mxu0 0
    %826 = vmatpush1.bf16.msra.mxu0 0
    %827 = vmatprep.subr.bf16.mxu0 0
    %828 = vmatpush1.bf16.msra.mxu0 0
    %829 = vmatprep.subr.bf16.mxu0 0
    %830 = vmatpush1.bf16.msra.mxu0 0
    %831 = vmatprep.subr.bf16.mxu0 0
    %832 = vmatpush1.bf16.msra.mxu0 0
    %833 = vmatprep.subr.bf16.mxu0 0
    %834 = vmatpush1.bf16.msra.mxu0 0
    %835 = vmatprep.subr.bf16.mxu0 0
    %836 = vmatpush1.bf16.msra.mxu0 0
    %837 = vmatprep.subr.bf16.mxu0 0
    %838 = vmatpush1.bf16.msra.mxu0 0
    %839 = vmatprep.subr.bf16.mxu0 0
    %840 = vmatpush1.bf16.msra.mxu0 0
    %841 = vmatprep.subr.bf16.mxu0 0
    %842 = vmatpush1.bf16.msra.mxu0 0
    %843 = vmatprep.subr.bf16.mxu0 0
    %844 = vmatpush1.bf16.msra.mxu0 0
    %845 = vmatprep.subr.bf16.mxu0 0
    %846 = vmatpush1.bf16.msra.mxu0 0
    %847 = vmatprep.subr.bf16.mxu0 0
    %848 = vmatpush1.bf16.msra.mxu0 0
    %849 = vmatprep.subr.bf16.mxu0 0
    %850 = vmatpush1.bf16.msra.mxu0 0
    %851 = vmatprep.subr.bf16.mxu0 0
    %852 = vmatpush1.bf16.msra.mxu0 0
    %853 = vmatprep.mubr.bf16.mxu0 0
    %854 = vmatmul.mubr.bf16.gmra.mrb[0].mxu0 %v819
    %v855 = vpop.f32.mrb[0].mxu0
    %v856 = vadd.f32 0.0, %v855
    %v857 = vpop.f32.mrb[0].mxu0
    %v858 = vpop.f32.mrb[0].mxu0
    %v859 = vadd.f32 0.0, %v858
    %v860 = vpop.f32.mrb[0].mxu0
    %861 = vdwg.mxu0
    %v862 = vadd.f32 %v796, %v856
    %v863 = vadd.f32 %v796, %v859
    %v864 = vld [vmem:[#allocation2 + $0x1] sm:$0xff]
    %v865 = vld [vmem:[%s50 + $0x1] sm:$0xff]
    %v866 = vpack.c.bf16 %v865, %v864
    %s867 = scalar_lea.vmem [#allocation6], 192
    %v868 = vld [vmem:[%s867] sm:$0xf]
    %v869 = vld [vmem:[%s867 + $0x4] sm:$0xf]
    %v870 = vld [vmem:[%s867 + $0x8] sm:$0xf]
    %v871 = vld [vmem:[%s867 + $0xc] sm:$0xf]
    %v876 = vunpack.c.l.b16 %v868
    %v877 = vunpack.c.l.b16 %v869
    %v878 = vunpack.c.l.b16 %v870
    %v879 = vunpack.c.l.b16 %v871
    %v880 = vpack.c.b16 %v877, %v876
    %v881 = vpack.c.b16 %v879, %v878
    %v885 = vsel %vm48, %v866, 0
    %887 = vmatprep.subr.bf16.mxu0 0
    %888 = vmatpush1.bf16.msra.mxu0 %v880
    %889 = vmatprep.subr.bf16.mxu0 0
    %890 = vmatpush1.bf16.msra.mxu0 %v881
    %891 = vmatprep.subr.bf16.mxu0 0
    %892 = vmatpush1.bf16.msra.mxu0 0
    %893 = vmatprep.subr.bf16.mxu0 0
    %894 = vmatpush1.bf16.msra.mxu0 0
    %895 = vmatprep.subr.bf16.mxu0 0
    %896 = vmatpush1.bf16.msra.mxu0 0
    %897 = vmatprep.subr.bf16.mxu0 0
    %898 = vmatpush1.bf16.msra.mxu0 0
    %899 = vmatprep.subr.bf16.mxu0 0
    %900 = vmatpush1.bf16.msra.mxu0 0
    %901 = vmatprep.subr.bf16.mxu0 0
    %902 = vmatpush1.bf16.msra.mxu0 0
    %903 = vmatprep.subr.bf16.mxu0 0
    %904 = vmatpush1.bf16.msra.mxu0 0
    %905 = vmatprep.subr.bf16.mxu0 0
    %906 = vmatpush1.bf16.msra.mxu0 0
    %907 = vmatprep.subr.bf16.mxu0 0
    %908 = vmatpush1.bf16.msra.mxu0 0
    %909 = vmatprep.subr.bf16.mxu0 0
    %910 = vmatpush1.bf16.msra.mxu0 0
    %911 = vmatprep.subr.bf16.mxu0 0
    %912 = vmatpush1.bf16.msra.mxu0 0
    %913 = vmatprep.subr.bf16.mxu0 0
    %914 = vmatpush1.bf16.msra.mxu0 0
    %915 = vmatprep.subr.bf16.mxu0 0
    %916 = vmatpush1.bf16.msra.mxu0 0
    %917 = vmatprep.subr.bf16.mxu0 0
    %918 = vmatpush1.bf16.msra.mxu0 0
    %919 = vmatprep.mubr.bf16.mxu0 0
    %920 = vmatmul.mubr.bf16.gmra.mrb[0].mxu0 %v885
    %v921 = vpop.f32.mrb[0].mxu0
    %v922 = vadd.f32 0.0, %v921
    %v923 = vpop.f32.mrb[0].mxu0
    %v924 = vpop.f32.mrb[0].mxu0
    %v925 = vadd.f32 0.0, %v924
    %v926 = vpop.f32.mrb[0].mxu0
    %927 = vdwg.mxu0
    %v928 = vadd.f32 %v862, %v922
    %v929 = vadd.f32 %v863, %v925
    %v930 = vld [vmem:[#allocation2 + $0x2] sm:$0xff]
    %v931 = vld [vmem:[%s50 + $0x2] sm:$0xff]
    %v932 = vpack.c.bf16 %v931, %v930
    %s933 = scalar_lea.vmem [#allocation6], 208
    %v934 = vld [vmem:[%s933] sm:$0xf]
    %v935 = vld [vmem:[%s933 + $0x4] sm:$0xf]
    %v936 = vld [vmem:[%s933 + $0x8] sm:$0xf]
    %v937 = vld [vmem:[%s933 + $0xc] sm:$0xf]
    %v942 = vunpack.c.l.b16 %v934
    %v943 = vunpack.c.l.b16 %v935
    %v944 = vunpack.c.l.b16 %v936
    %v945 = vunpack.c.l.b16 %v937
    %v946 = vpack.c.b16 %v943, %v942
    %v947 = vpack.c.b16 %v945, %v944
    %v951 = vsel %vm48, %v932, 0
    %953 = vmatprep.subr.bf16.mxu0 0
    %954 = vmatpush1.bf16.msra.mxu0 %v946
    %955 = vmatprep.subr.bf16.mxu0 0
    %956 = vmatpush1.bf16.msra.mxu0 %v947
    %957 = vmatprep.subr.bf16.mxu0 0
    %958 = vmatpush1.bf16.msra.mxu0 0
    %959 = vmatprep.subr.bf16.mxu0 0
    %960 = vmatpush1.bf16.msra.mxu0 0
    %961 = vmatprep.subr.bf16.mxu0 0
    %962 = vmatpush1.bf16.msra.mxu0 0
    %963 = vmatprep.subr.bf16.mxu0 0
    %964 = vmatpush1.bf16.msra.mxu0 0
    %965 = vmatprep.subr.bf16.mxu0 0
    %966 = vmatpush1.bf16.msra.mxu0 0
    %967 = vmatprep.subr.bf16.mxu0 0
    %968 = vmatpush1.bf16.msra.mxu0 0
    %969 = vmatprep.subr.bf16.mxu0 0
    %970 = vmatpush1.bf16.msra.mxu0 0
    %971 = vmatprep.subr.bf16.mxu0 0
    %972 = vmatpush1.bf16.msra.mxu0 0
    %973 = vmatprep.subr.bf16.mxu0 0
    %974 = vmatpush1.bf16.msra.mxu0 0
    %975 = vmatprep.subr.bf16.mxu0 0
    %976 = vmatpush1.bf16.msra.mxu0 0
    %977 = vmatprep.subr.bf16.mxu0 0
    %978 = vmatpush1.bf16.msra.mxu0 0
    %979 = vmatprep.subr.bf16.mxu0 0
    %980 = vmatpush1.bf16.msra.mxu0 0
    %981 = vmatprep.subr.bf16.mxu0 0
    %982 = vmatpush1.bf16.msra.mxu0 0
    %983 = vmatprep.subr.bf16.mxu0 0
    %984 = vmatpush1.bf16.msra.mxu0 0
    %985 = vmatprep.mubr.bf16.mxu0 0
    %986 = vmatmul.mubr.bf16.gmra.mrb[0].mxu0 %v951
    %v987 = vpop.f32.mrb[0].mxu0
    %v988 = vadd.f32 0.0, %v987
    %v989 = vpop.f32.mrb[0].mxu0
    %v990 = vpop.f32.mrb[0].mxu0
    %v991 = vadd.f32 0.0, %v990
    %v992 = vpop.f32.mrb[0].mxu0
    %993 = vdwg.mxu0
    %v994 = vadd.f32 %v928, %v988
    %v995 = vadd.f32 %v929, %v991
    %v996 = vld [vmem:[#allocation2 + $0x3] sm:$0xff]
    %v997 = vld [vmem:[%s50 + $0x3] sm:$0xff]
    %v998 = vpack.c.bf16 %v997, %v996
    %s999 = scalar_lea.vmem [#allocation6], 224
    %v1000 = vld [vmem:[%s999] sm:$0xf]
    %v1001 = vld [vmem:[%s999 + $0x4] sm:$0xf]
    %v1002 = vld [vmem:[%s999 + $0x8] sm:$0xf]
    %v1003 = vld [vmem:[%s999 + $0xc] sm:$0xf]
    %v1008 = vunpack.c.l.b16 %v1000
    %v1009 = vunpack.c.l.b16 %v1001
    %v1010 = vunpack.c.l.b16 %v1002
    %v1011 = vunpack.c.l.b16 %v1003
    %v1012 = vpack.c.b16 %v1009, %v1008
    %v1013 = vpack.c.b16 %v1011, %v1010
    %v1017 = vsel %vm48, %v998, 0
    %1019 = vmatprep.subr.bf16.mxu0 0
    %1020 = vmatpush1.bf16.msra.mxu0 %v1012
    %1021 = vmatprep.subr.bf16.mxu0 0
    %1022 = vmatpush1.bf16.msra.mxu0 %v1013
    %1023 = vmatprep.subr.bf16.mxu0 0
    %1024 = vmatpush1.bf16.msra.mxu0 0
    %1025 = vmatprep.subr.bf16.mxu0 0
    %1026 = vmatpush1.bf16.msra.mxu0 0
    %1027 = vmatprep.subr.bf16.mxu0 0
    %1028 = vmatpush1.bf16.msra.mxu0 0
    %1029 = vmatprep.subr.bf16.mxu0 0
    %1030 = vmatpush1.bf16.msra.mxu0 0
    %1031 = vmatprep.subr.bf16.mxu0 0
    %1032 = vmatpush1.bf16.msra.mxu0 0
    %1033 = vmatprep.subr.bf16.mxu0 0
    %1034 = vmatpush1.bf16.msra.mxu0 0
    %1035 = vmatprep.subr.bf16.mxu0 0
    %1036 = vmatpush1.bf16.msra.mxu0 0
    %1037 = vmatprep.subr.bf16.mxu0 0
    %1038 = vmatpush1.bf16.msra.mxu0 0
    %1039 = vmatprep.subr.bf16.mxu0 0
    %1040 = vmatpush1.bf16.msra.mxu0 0
    %1041 = vmatprep.subr.bf16.mxu0 0
    %1042 = vmatpush1.bf16.msra.mxu0 0
    %1043 = vmatprep.subr.bf16.mxu0 0
    %1044 = vmatpush1.bf16.msra.mxu0 0
    %1045 = vmatprep.subr.bf16.mxu0 0
    %1046 = vmatpush1.bf16.msra.mxu0 0
    %1047 = vmatprep.subr.bf16.mxu0 0
    %1048 = vmatpush1.bf16.msra.mxu0 0
    %1049 = vmatprep.subr.bf16.mxu0 0
    %1050 = vmatpush1.bf16.msra.mxu0 0
    %1051 = vmatprep.mubr.bf16.mxu0 0
    %1052 = vmatmul.mubr.bf16.gmra.mrb[0].mxu0 %v1017
    %v1053 = vpop.f32.mrb[0].mxu0
    %v1054 = vadd.f32 0.0, %v1053
    %v1055 = vpop.f32.mrb[0].mxu0
    %v1056 = vpop.f32.mrb[0].mxu0
    %v1057 = vadd.f32 0.0, %v1056
    %v1058 = vpop.f32.mrb[0].mxu0
    %1059 = vdwg.mxu0
    %v1060 = vadd.f32 %v994, %v1054
    %v1061 = vadd.f32 %v995, %v1057
    %v1062 = vld [vmem:[#allocation2 + $0x4] sm:$0xff]
    %v1063 = vld [vmem:[%s50 + $0x4] sm:$0xff]
    %v1064 = vpack.c.bf16 %v1063, %v1062
    %s1065 = scalar_lea.vmem [#allocation6], 240
    %v1066 = vld [vmem:[%s1065] sm:$0xf]
    %v1067 = vld [vmem:[%s1065 + $0x4] sm:$0xf]
    %v1068 = vld [vmem:[%s1065 + $0x8] sm:$0xf]
    %v1069 = vld [vmem:[%s1065 + $0xc] sm:$0xf]
    %v1074 = vunpack.c.l.b16 %v1066
    %v1075 = vunpack.c.l.b16 %v1067
    %v1076 = vunpack.c.l.b16 %v1068
    %v1077 = vunpack.c.l.b16 %v1069
    %v1078 = vpack.c.b16 %v1075, %v1074
    %v1079 = vpack.c.b16 %v1077, %v1076
    %v1083 = vsel %vm48, %v1064, 0
    %1085 = vmatprep.subr.bf16.mxu0 0
    %1086 = vmatpush1.bf16.msra.mxu0 %v1078
    %1087 = vmatprep.subr.bf16.mxu0 0
    %1088 = vmatpush1.bf16.msra.mxu0 %v1079
    %1089 = vmatprep.subr.bf16.mxu0 0
    %1090 = vmatpush1.bf16.msra.mxu0 0
    %1091 = vmatprep.subr.bf16.mxu0 0
    %1092 = vmatpush1.bf16.msra.mxu0 0
    %1093 = vmatprep.subr.bf16.mxu0 0
    %1094 = vmatpush1.bf16.msra.mxu0 0
    %1095 = vmatprep.subr.bf16.mxu0 0
    %1096 = vmatpush1.bf16.msra.mxu0 0
    %1097 = vmatprep.subr.bf16.mxu0 0
    %1098 = vmatpush1.bf16.msra.mxu0 0
    %1099 = vmatprep.subr.bf16.mxu0 0
    %1100 = vmatpush1.bf16.msra.mxu0 0
    %1101 = vmatprep.subr.bf16.mxu0 0
    %1102 = vmatpush1.bf16.msra.mxu0 0
    %1103 = vmatprep.subr.bf16.mxu0 0
    %1104 = vmatpush1.bf16.msra.mxu0 0
    %1105 = vmatprep.subr.bf16.mxu0 0
    %1106 = vmatpush1.bf16.msra.mxu0 0
    %1107 = vmatprep.subr.bf16.mxu0 0
    %1108 = vmatpush1.bf16.msra.mxu0 0
    %1109 = vmatprep.subr.bf16.mxu0 0
    %1110 = vmatpush1.bf16.msra.mxu0 0
    %1111 = vmatprep.subr.bf16.mxu0 0
    %1112 = vmatpush1.bf16.msra.mxu0 0
    %1113 = vmatprep.subr.bf16.mxu0 0
    %1114 = vmatpush1.bf16.msra.mxu0 0
    %1115 = vmatprep.subr.bf16.mxu0 0
    %1116 = vmatpush1.bf16.msra.mxu0 0
    %1117 = vmatprep.mubr.bf16.mxu0 0
    %1118 = vmatmul.mubr.bf16.gmra.mrb[0].mxu0 %v1083
    %v1119 = vpop.f32.mrb[0].mxu0
    %v1120 = vadd.f32 0.0, %v1119
    %v1121 = vpop.f32.mrb[0].mxu0
    %v1122 = vpop.f32.mrb[0].mxu0
    %v1123 = vadd.f32 0.0, %v1122
    %v1124 = vpop.f32.mrb[0].mxu0
    %1125 = vdwg.mxu0
    %v1126 = vadd.f32 %v1060, %v1120
    %v1127 = vadd.f32 %v1061, %v1123
    %v1128 = vld [vmem:[#allocation2 + $0x5] sm:$0xff]
    %v1129 = vld [vmem:[%s50 + $0x5] sm:$0xff]
    %v1130 = vpack.c.bf16 %v1129, %v1128
    %s1131 = scalar_lea.vmem [#allocation6], 256
    %v1132 = vld [vmem:[%s1131] sm:$0xf]
    %v1133 = vld [vmem:[%s1131 + $0x4] sm:$0xf]
    %v1134 = vld [vmem:[%s1131 + $0x8] sm:$0xf]
    %v1135 = vld [vmem:[%s1131 + $0xc] sm:$0xf]
    %v1140 = vunpack.c.l.b16 %v1132
    %v1141 = vunpack.c.l.b16 %v1133
    %v1142 = vunpack.c.l.b16 %v1134
    %v1143 = vunpack.c.l.b16 %v1135
    %v1144 = vpack.c.b16 %v1141, %v1140
    %v1145 = vpack.c.b16 %v1143, %v1142
    %v1149 = vsel %vm48, %v1130, 0
    %1151 = vmatprep.subr.bf16.mxu0 0
    %1152 = vmatpush1.bf16.msra.mxu0 %v1144
    %1153 = vmatprep.subr.bf16.mxu0 0
    %1154 = vmatpush1.bf16.msra.mxu0 %v1145
    %1155 = vmatprep.subr.bf16.mxu0 0
    %1156 = vmatpush1.bf16.msra.mxu0 0
    %1157 = vmatprep.subr.bf16.mxu0 0
    %1158 = vmatpush1.bf16.msra.mxu0 0
    %1159 = vmatprep.subr.bf16.mxu0 0
    %1160 = vmatpush1.bf16.msra.mxu0 0
    %1161 = vmatprep.subr.bf16.mxu0 0
    %1162 = vmatpush1.bf16.msra.mxu0 0
    %1163 = vmatprep.subr.bf16.mxu0 0
    %1164 = vmatpush1.bf16.msra.mxu0 0
    %1165 = vmatprep.subr.bf16.mxu0 0
    %1166 = vmatpush1.bf16.msra.mxu0 0
    %1167 = vmatprep.subr.bf16.mxu0 0
    %1168 = vmatpush1.bf16.msra.mxu0 0
    %1169 = vmatprep.subr.bf16.mxu0 0
    %1170 = vmatpush1.bf16.msra.mxu0 0
    %1171 = vmatprep.subr.bf16.mxu0 0
    %1172 = vmatpush1.bf16.msra.mxu0 0
    %1173 = vmatprep.subr.bf16.mxu0 0
    %1174 = vmatpush1.bf16.msra.mxu0 0
    %1175 = vmatprep.subr.bf16.mxu0 0
    %1176 = vmatpush1.bf16.msra.mxu0 0
    %1177 = vmatprep.subr.bf16.mxu0 0
    %1178 = vmatpush1.bf16.msra.mxu0 0
    %1179 = vmatprep.subr.bf16.mxu0 0
    %1180 = vmatpush1.bf16.msra.mxu0 0
    %1181 = vmatprep.subr.bf16.mxu0 0
    %1182 = vmatpush1.bf16.msra.mxu0 0
    %1183 = vmatprep.mubr.bf16.mxu0 0
    %1184 = vmatmul.mubr.bf16.gmra.mrb[0].mxu0 %v1149
    %v1185 = vpop.f32.mrb[0].mxu0
    %v1186 = vadd.f32 0.0, %v1185
    %v1187 = vpop.f32.mrb[0].mxu0
    %v1188 = vpop.f32.mrb[0].mxu0
    %v1189 = vadd.f32 0.0, %v1188
    %v1190 = vpop.f32.mrb[0].mxu0
    %1191 = vdwg.mxu0
    %v1192 = vadd.f32 %v1126, %v1186
    %v1193 = vadd.f32 %v1127, %v1189
    %v1194 = vld [vmem:[#allocation2 + $0x6] sm:$0xff]
    %v1195 = vld [vmem:[%s50 + $0x6] sm:$0xff]
    %v1196 = vpack.c.bf16 %v1195, %v1194
    %s1197 = scalar_lea.vmem [#allocation6], 272
    %v1198 = vld [vmem:[%s1197] sm:$0xf]
    %v1199 = vld [vmem:[%s1197 + $0x4] sm:$0xf]
    %v1200 = vld [vmem:[%s1197 + $0x8] sm:$0xf]
    %v1201 = vld [vmem:[%s1197 + $0xc] sm:$0xf]
    %v1206 = vunpack.c.l.b16 %v1198
    %v1207 = vunpack.c.l.b16 %v1199
    %v1208 = vunpack.c.l.b16 %v1200
    %v1209 = vunpack.c.l.b16 %v1201
    %v1210 = vpack.c.b16 %v1207, %v1206
    %v1211 = vpack.c.b16 %v1209, %v1208
    %v1215 = vsel %vm48, %v1196, 0
    %1217 = vmatprep.subr.bf16.mxu0 0
    %1218 = vmatpush1.bf16.msra.mxu0 %v1210
    %1219 = vmatprep.subr.bf16.mxu0 0
    %1220 = vmatpush1.bf16.msra.mxu0 %v1211
    %1221 = vmatprep.subr.bf16.mxu0 0
    %1222 = vmatpush1.bf16.msra.mxu0 0
    %1223 = vmatprep.subr.bf16.mxu0 0
    %1224 = vmatpush1.bf16.msra.mxu0 0
    %1225 = vmatprep.subr.bf16.mxu0 0
    %1226 = vmatpush1.bf16.msra.mxu0 0
    %1227 = vmatprep.subr.bf16.mxu0 0
    %1228 = vmatpush1.bf16.msra.mxu0 0
    %1229 = vmatprep.subr.bf16.mxu0 0
    %1230 = vmatpush1.bf16.msra.mxu0 0
    %1231 = vmatprep.subr.bf16.mxu0 0
    %1232 = vmatpush1.bf16.msra.mxu0 0
    %1233 = vmatprep.subr.bf16.mxu0 0
    %1234 = vmatpush1.bf16.msra.mxu0 0
    %1235 = vmatprep.subr.bf16.mxu0 0
    %1236 = vmatpush1.bf16.msra.mxu0 0
    %1237 = vmatprep.subr.bf16.mxu0 0
    %1238 = vmatpush1.bf16.msra.mxu0 0
    %1239 = vmatprep.subr.bf16.mxu0 0
    %1240 = vmatpush1.bf16.msra.mxu0 0
    %1241 = vmatprep.subr.bf16.mxu0 0
    %1242 = vmatpush1.bf16.msra.mxu0 0
    %1243 = vmatprep.subr.bf16.mxu0 0
    %1244 = vmatpush1.bf16.msra.mxu0 0
    %1245 = vmatprep.subr.bf16.mxu0 0
    %1246 = vmatpush1.bf16.msra.mxu0 0
    %1247 = vmatprep.subr.bf16.mxu0 0
    %1248 = vmatpush1.bf16.msra.mxu0 0
    %1249 = vmatprep.mubr.bf16.mxu0 0
    %1250 = vmatmul.mubr.bf16.gmra.mrb[0].mxu0 %v1215
    %v1251 = vpop.f32.mrb[0].mxu0
    %v1252 = vadd.f32 0.0, %v1251
    %v1253 = vpop.f32.mrb[0].mxu0
    %v1254 = vpop.f32.mrb[0].mxu0
    %v1255 = vadd.f32 0.0, %v1254
    %v1256 = vpop.f32.mrb[0].mxu0
    %1257 = vdwg.mxu0
    %v1258 = vadd.f32 %v1192, %v1252
    %v1259 = vadd.f32 %v1193, %v1255
    %v1260 = vld [vmem:[#allocation2 + $0x7] sm:$0xff]
    %v1261 = vld [vmem:[%s50 + $0x7] sm:$0xff]
    %v1262 = vpack.c.bf16 %v1261, %v1260
    %s1263 = scalar_lea.vmem [#allocation6], 288
    %v1264 = vld [vmem:[%s1263] sm:$0xf]
    %v1265 = vld [vmem:[%s1263 + $0x4] sm:$0xf]
    %v1266 = vld [vmem:[%s1263 + $0x8] sm:$0xf]
    %v1267 = vld [vmem:[%s1263 + $0xc] sm:$0xf]
    %v1272 = vunpack.c.l.b16 %v1264
    %v1273 = vunpack.c.l.b16 %v1265
    %v1274 = vunpack.c.l.b16 %v1266
    %v1275 = vunpack.c.l.b16 %v1267
    %v1276 = vpack.c.b16 %v1273, %v1272
    %v1277 = vpack.c.b16 %v1275, %v1274
    %v1281 = vsel %vm48, %v1262, 0
    %1283 = vmatprep.subr.bf16.mxu0 0
    %1284 = vmatpush1.bf16.msra.mxu0 %v1276
    %1285 = vmatprep.subr.bf16.mxu0 0
    %1286 = vmatpush1.bf16.msra.mxu0 %v1277
    %1287 = vmatprep.subr.bf16.mxu0 0
    %1288 = vmatpush1.bf16.msra.mxu0 0
    %1289 = vmatprep.subr.bf16.mxu0 0
    %1290 = vmatpush1.bf16.msra.mxu0 0
    %1291 = vmatprep.subr.bf16.mxu0 0
    %1292 = vmatpush1.bf16.msra.mxu0 0
    %1293 = vmatprep.subr.bf16.mxu0 0
    %1294 = vmatpush1.bf16.msra.mxu0 0
    %1295 = vmatprep.subr.bf16.mxu0 0
    %1296 = vmatpush1.bf16.msra.mxu0 0
    %1297 = vmatprep.subr.bf16.mxu0 0
    %1298 = vmatpush1.bf16.msra.mxu0 0
    %1299 = vmatprep.subr.bf16.mxu0 0
    %1300 = vmatpush1.bf16.msra.mxu0 0
    %1301 = vmatprep.subr.bf16.mxu0 0
    %1302 = vmatpush1.bf16.msra.mxu0 0
    %1303 = vmatprep.subr.bf16.mxu0 0
    %1304 = vmatpush1.bf16.msra.mxu0 0
    %1305 = vmatprep.subr.bf16.mxu0 0
    %1306 = vmatpush1.bf16.msra.mxu0 0
    %1307 = vmatprep.subr.bf16.mxu0 0
    %1308 = vmatpush1.bf16.msra.mxu0 0
    %1309 = vmatprep.subr.bf16.mxu0 0
    %1310 = vmatpush1.bf16.msra.mxu0 0
    %1311 = vmatprep.subr.bf16.mxu0 0
    %1312 = vmatpush1.bf16.msra.mxu0 0
    %1313 = vmatprep.subr.bf16.mxu0 0
    %1314 = vmatpush1.bf16.msra.mxu0 0
    %1315 = vmatprep.mubr.bf16.mxu0 0
    %1316 = vmatmul.mubr.bf16.gmra.mrb[0].mxu0 %v1281
    %v1317 = vpop.f32.mrb[0].mxu0
    %v1318 = vadd.f32 0.0, %v1317
    %v1319 = vpop.f32.mrb[0].mxu0
    %v1320 = vpop.f32.mrb[0].mxu0
    %v1321 = vadd.f32 0.0, %v1320
    %v1322 = vpop.f32.mrb[0].mxu0
    %1323 = vdwg.mxu0
    %v1324 = vadd.f32 %v1258, %v1318
    %v1325 = vadd.f32 %v1259, %v1321
    %v1326 = vld [vmem:[#allocation2 + $0x8] sm:$0xff]
    %v1327 = vld [vmem:[%s50 + $0x8] sm:$0xff]
    %v1328 = vpack.c.bf16 %v1327, %v1326
    %s1329 = scalar_lea.vmem [#allocation6], 304
    %v1330 = vld [vmem:[%s1329] sm:$0xf]
    %v1331 = vld [vmem:[%s1329 + $0x4] sm:$0xf]
    %v1332 = vld [vmem:[%s1329 + $0x8] sm:$0xf]
    %v1333 = vld [vmem:[%s1329 + $0xc] sm:$0xf]
    %v1338 = vunpack.c.l.b16 %v1330
    %v1339 = vunpack.c.l.b16 %v1331
    %v1340 = vunpack.c.l.b16 %v1332
    %v1341 = vunpack.c.l.b16 %v1333
    %v1342 = vpack.c.b16 %v1339, %v1338
    %v1343 = vpack.c.b16 %v1341, %v1340
    %v1347 = vsel %vm48, %v1328, 0
    %1349 = vmatprep.subr.bf16.mxu0 0
    %1350 = vmatpush1.bf16.msra.mxu0 %v1342
    %1351 = vmatprep.subr.bf16.mxu0 0
    %1352 = vmatpush1.bf16.msra.mxu0 %v1343
    %1353 = vmatprep.subr.bf16.mxu0 0
    %1354 = vmatpush1.bf16.msra.mxu0 0
    %1355 = vmatprep.subr.bf16.mxu0 0
    %1356 = vmatpush1.bf16.msra.mxu0 0
    %1357 = vmatprep.subr.bf16.mxu0 0
    %1358 = vmatpush1.bf16.msra.mxu0 0
    %1359 = vmatprep.subr.bf16.mxu0 0
    %1360 = vmatpush1.bf16.msra.mxu0 0
    %1361 = vmatprep.subr.bf16.mxu0 0
    %1362 = vmatpush1.bf16.msra.mxu0 0
    %1363 = vmatprep.subr.bf16.mxu0 0
    %1364 = vmatpush1.bf16.msra.mxu0 0
    %1365 = vmatprep.subr.bf16.mxu0 0
    %1366 = vmatpush1.bf16.msra.mxu0 0
    %1367 = vmatprep.subr.bf16.mxu0 0
    %1368 = vmatpush1.bf16.msra.mxu0 0
    %1369 = vmatprep.subr.bf16.mxu0 0
    %1370 = vmatpush1.bf16.msra.mxu0 0
    %1371 = vmatprep.subr.bf16.mxu0 0
    %1372 = vmatpush1.bf16.msra.mxu0 0
    %1373 = vmatprep.subr.bf16.mxu0 0
    %1374 = vmatpush1.bf16.msra.mxu0 0
    %1375 = vmatprep.subr.bf16.mxu0 0
    %1376 = vmatpush1.bf16.msra.mxu0 0
    %1377 = vmatprep.subr.bf16.mxu0 0
    %1378 = vmatpush1.bf16.msra.mxu0 0
    %1379 = vmatprep.subr.bf16.mxu0 0
    %1380 = vmatpush1.bf16.msra.mxu0 0
    %1381 = vmatprep.mubr.bf16.mxu0 0
    %1382 = vmatmul.mubr.bf16.gmra.mrb[0].mxu0 %v1347
    %v1383 = vpop.f32.mrb[0].mxu0
    %v1384 = vadd.f32 0.0, %v1383
    %v1385 = vpop.f32.mrb[0].mxu0
    %v1386 = vpop.f32.mrb[0].mxu0
    %v1387 = vadd.f32 0.0, %v1386
    %v1388 = vpop.f32.mrb[0].mxu0
    %1389 = vdwg.mxu0
    %v1390 = vadd.f32 %v1324, %v1384
    %v1391 = vadd.f32 %v1325, %v1387
    %v1392 = vld [vmem:[#allocation2 + $0x9] sm:$0xff]
    %v1393 = vld [vmem:[%s50 + $0x9] sm:$0xff]
    %v1394 = vpack.c.bf16 %v1393, %v1392
    %s1395 = scalar_lea.vmem [#allocation6], 320
    %v1396 = vld [vmem:[%s1395] sm:$0xf]
    %v1397 = vld [vmem:[%s1395 + $0x4] sm:$0xf]
    %v1398 = vld [vmem:[%s1395 + $0x8] sm:$0xf]
    %v1399 = vld [vmem:[%s1395 + $0xc] sm:$0xf]
    %v1404 = vunpack.c.l.b16 %v1396
    %v1405 = vunpack.c.l.b16 %v1397
    %v1406 = vunpack.c.l.b16 %v1398
    %v1407 = vunpack.c.l.b16 %v1399
    %v1408 = vpack.c.b16 %v1405, %v1404
    %v1409 = vpack.c.b16 %v1407, %v1406
    %v1413 = vsel %vm48, %v1394, 0
    %1415 = vmatprep.subr.bf16.mxu0 0
    %1416 = vmatpush1.bf16.msra.mxu0 %v1408
    %1417 = vmatprep.subr.bf16.mxu0 0
    %1418 = vmatpush1.bf16.msra.mxu0 %v1409
    %1419 = vmatprep.subr.bf16.mxu0 0
    %1420 = vmatpush1.bf16.msra.mxu0 0
    %1421 = vmatprep.subr.bf16.mxu0 0
    %1422 = vmatpush1.bf16.msra.mxu0 0
    %1423 = vmatprep.subr.bf16.mxu0 0
    %1424 = vmatpush1.bf16.msra.mxu0 0
    %1425 = vmatprep.subr.bf16.mxu0 0
    %1426 = vmatpush1.bf16.msra.mxu0 0
    %1427 = vmatprep.subr.bf16.mxu0 0
    %1428 = vmatpush1.bf16.msra.mxu0 0
    %1429 = vmatprep.subr.bf16.mxu0 0
    %1430 = vmatpush1.bf16.msra.mxu0 0
    %1431 = vmatprep.subr.bf16.mxu0 0
    %1432 = vmatpush1.bf16.msra.mxu0 0
    %1433 = vmatprep.subr.bf16.mxu0 0
    %1434 = vmatpush1.bf16.msra.mxu0 0
    %1435 = vmatprep.subr.bf16.mxu0 0
    %1436 = vmatpush1.bf16.msra.mxu0 0
    %1437 = vmatprep.subr.bf16.mxu0 0
    %1438 = vmatpush1.bf16.msra.mxu0 0
    %1439 = vmatprep.subr.bf16.mxu0 0
    %1440 = vmatpush1.bf16.msra.mxu0 0
    %1441 = vmatprep.subr.bf16.mxu0 0
    %1442 = vmatpush1.bf16.msra.mxu0 0
    %1443 = vmatprep.subr.bf16.mxu0 0
    %1444 = vmatpush1.bf16.msra.mxu0 0
    %1445 = vmatprep.subr.bf16.mxu0 0
    %1446 = vmatpush1.bf16.msra.mxu0 0
    %1447 = vmatprep.mubr.bf16.mxu0 0
    %1448 = vmatmul.mubr.bf16.gmra.mrb[0].mxu0 %v1413
    %v1449 = vpop.f32.mrb[0].mxu0
    %v1450 = vadd.f32 0.0, %v1449
    %v1451 = vpop.f32.mrb[0].mxu0
    %v1452 = vpop.f32.mrb[0].mxu0
    %v1453 = vadd.f32 0.0, %v1452
    %v1454 = vpop.f32.mrb[0].mxu0
    %1455 = vdwg.mxu0
    %v1456 = vadd.f32 %v1390, %v1450
    %v1457 = vadd.f32 %v1391, %v1453
    %v1458 = vld [vmem:[#allocation2 + $0xa] sm:$0xff]
    %v1459 = vld [vmem:[%s50 + $0xa] sm:$0xff]
    %v1460 = vpack.c.bf16 %v1459, %v1458
    %s1461 = scalar_lea.vmem [#allocation6], 336
    %v1462 = vld [vmem:[%s1461] sm:$0xf]
    %v1463 = vld [vmem:[%s1461 + $0x4] sm:$0xf]
    %v1464 = vld [vmem:[%s1461 + $0x8] sm:$0xf]
    %v1465 = vld [vmem:[%s1461 + $0xc] sm:$0xf]
    %v1470 = vunpack.c.l.b16 %v1462
    %v1471 = vunpack.c.l.b16 %v1463
    %v1472 = vunpack.c.l.b16 %v1464
    %v1473 = vunpack.c.l.b16 %v1465
    %v1474 = vpack.c.b16 %v1471, %v1470
    %v1475 = vpack.c.b16 %v1473, %v1472
    %v1479 = vsel %vm48, %v1460, 0
    %1481 = vmatprep.subr.bf16.mxu0 0
    %1482 = vmatpush1.bf16.msra.mxu0 %v1474
    %1483 = vmatprep.subr.bf16.mxu0 0
    %1484 = vmatpush1.bf16.msra.mxu0 %v1475
    %1485 = vmatprep.subr.bf16.mxu0 0
    %1486 = vmatpush1.bf16.msra.mxu0 0
    %1487 = vmatprep.subr.bf16.mxu0 0
    %1488 = vmatpush1.bf16.msra.mxu0 0
    %1489 = vmatprep.subr.bf16.mxu0 0
    %1490 = vmatpush1.bf16.msra.mxu0 0
    %1491 = vmatprep.subr.bf16.mxu0 0
    %1492 = vmatpush1.bf16.msra.mxu0 0
    %1493 = vmatprep.subr.bf16.mxu0 0
    %1494 = vmatpush1.bf16.msra.mxu0 0
    %1495 = vmatprep.subr.bf16.mxu0 0
    %1496 = vmatpush1.bf16.msra.mxu0 0
    %1497 = vmatprep.subr.bf16.mxu0 0
    %1498 = vmatpush1.bf16.msra.mxu0 0
    %1499 = vmatprep.subr.bf16.mxu0 0
    %1500 = vmatpush1.bf16.msra.mxu0 0
    %1501 = vmatprep.subr.bf16.mxu0 0
    %1502 = vmatpush1.bf16.msra.mxu0 0
    %1503 = vmatprep.subr.bf16.mxu0 0
    %1504 = vmatpush1.bf16.msra.mxu0 0
    %1505 = vmatprep.subr.bf16.mxu0 0
    %1506 = vmatpush1.bf16.msra.mxu0 0
    %1507 = vmatprep.subr.bf16.mxu0 0
    %1508 = vmatpush1.bf16.msra.mxu0 0
    %1509 = vmatprep.subr.bf16.mxu0 0
    %1510 = vmatpush1.bf16.msra.mxu0 0
    %1511 = vmatprep.subr.bf16.mxu0 0
    %1512 = vmatpush1.bf16.msra.mxu0 0
    %1513 = vmatprep.mubr.bf16.mxu0 0
    %1514 = vmatmul.mubr.bf16.gmra.mrb[0].mxu0 %v1479
    %v1515 = vpop.f32.mrb[0].mxu0
    %v1516 = vadd.f32 0.0, %v1515
    %v1517 = vpop.f32.mrb[0].mxu0
    %v1518 = vpop.f32.mrb[0].mxu0
    %v1519 = vadd.f32 0.0, %v1518
    %v1520 = vpop.f32.mrb[0].mxu0
    %1521 = vdwg.mxu0
    %v1522 = vadd.f32 %v1456, %v1516
    %v1523 = vadd.f32 %v1457, %v1519
    %1524 = vst.msk [vmem:[#allocation2 + $0x5] sm:$0xff] %vm48, %v1522
    %1525 = vst.msk [vmem:[%s50 + $0x5] sm:$0xff] %vm48, %v1523
    %s1526 = scalar_lea.vmem %s2, 2
    %v1527 = vld [vmem:[%s1526] sm:$0x1]
    %v1529 = vlaneseq
    %v1530 = vshrl.u32 %v1529, 7
    %v1531 = vsub.s32 0, %v1530
    %v1532 = vrot.slane %v1527, %v1531
    %v1534 = vld [vmem:[#allocation2] sm:$0xff]
    %v1535 = vld [vmem:[%s50] sm:$0xff]
    %v1536 = vpack.c.bf16 %v1535, %v1534
    %s1537 = scalar_lea.vmem [#allocation6], 352
    %v1538 = vld [vmem:[%s1537] sm:$0xf]
    %v1539 = vld [vmem:[%s1537 + $0x4] sm:$0xf]
    %v1540 = vld [vmem:[%s1537 + $0x8] sm:$0xf]
    %v1541 = vld [vmem:[%s1537 + $0xc] sm:$0xf]
    %v1546 = vunpack.c.l.b16 %v1538
    %v1547 = vunpack.c.l.b16 %v1539
    %v1548 = vunpack.c.l.b16 %v1540
    %v1549 = vunpack.c.l.b16 %v1541
    %v1550 = vpack.c.b16 %v1547, %v1546
    %v1551 = vpack.c.b16 %v1549, %v1548
    %v1555 = vsel %vm48, %v1536, 0
    %1557 = vmatprep.subr.bf16.mxu0 0
    %1558 = vmatpush1.bf16.msra.mxu0 %v1550
    %1559 = vmatprep.subr.bf16.mxu0 0
    %1560 = vmatpush1.bf16.msra.mxu0 %v1551
    %1561 = vmatprep.subr.bf16.mxu0 0
    %1562 = vmatpush1.bf16.msra.mxu0 0
    %1563 = vmatprep.subr.bf16.mxu0 0
    %1564 = vmatpush1.bf16.msra.mxu0 0
    %1565 = vmatprep.subr.bf16.mxu0 0
    %1566 = vmatpush1.bf16.msra.mxu0 0
    %1567 = vmatprep.subr.bf16.mxu0 0
    %1568 = vmatpush1.bf16.msra.mxu0 0
    %1569 = vmatprep.subr.bf16.mxu0 0
    %1570 = vmatpush1.bf16.msra.mxu0 0
    %1571 = vmatprep.subr.bf16.mxu0 0
    %1572 = vmatpush1.bf16.msra.mxu0 0
    %1573 = vmatprep.subr.bf16.mxu0 0
    %1574 = vmatpush1.bf16.msra.mxu0 0
    %1575 = vmatprep.subr.bf16.mxu0 0
    %1576 = vmatpush1.bf16.msra.mxu0 0
    %1577 = vmatprep.subr.bf16.mxu0 0
    %1578 = vmatpush1.bf16.msra.mxu0 0
    %1579 = vmatprep.subr.bf16.mxu0 0
    %1580 = vmatpush1.bf16.msra.mxu0 0
    %1581 = vmatprep.subr.bf16.mxu0 0
    %1582 = vmatpush1.bf16.msra.mxu0 0
    %1583 = vmatprep.subr.bf16.mxu0 0
    %1584 = vmatpush1.bf16.msra.mxu0 0
    %1585 = vmatprep.subr.bf16.mxu0 0
    %1586 = vmatpush1.bf16.msra.mxu0 0
    %1587 = vmatprep.subr.bf16.mxu0 0
    %1588 = vmatpush1.bf16.msra.mxu0 0
    %1589 = vmatprep.mubr.bf16.mxu0 0
    %1590 = vmatmul.mubr.bf16.gmra.mrb[0].mxu0 %v1555
    %v1591 = vpop.f32.mrb[0].mxu0
    %v1592 = vadd.f32 0.0, %v1591
    %v1593 = vpop.f32.mrb[0].mxu0
    %v1594 = vpop.f32.mrb[0].mxu0
    %v1595 = vadd.f32 0.0, %v1594
    %v1596 = vpop.f32.mrb[0].mxu0
    %1597 = vdwg.mxu0
    %v1598 = vadd.f32 %v1532, %v1592
    %v1599 = vadd.f32 %v1532, %v1595
    %v1600 = vld [vmem:[#allocation2 + $0x1] sm:$0xff]
    %v1601 = vld [vmem:[%s50 + $0x1] sm:$0xff]
    %v1602 = vpack.c.bf16 %v1601, %v1600
    %s1603 = scalar_lea.vmem [#allocation6], 368
    %v1604 = vld [vmem:[%s1603] sm:$0xf]
    %v1605 = vld [vmem:[%s1603 + $0x4] sm:$0xf]
    %v1606 = vld [vmem:[%s1603 + $0x8] sm:$0xf]
    %v1607 = vld [vmem:[%s1603 + $0xc] sm:$0xf]
    %v1612 = vunpack.c.l.b16 %v1604
    %v1613 = vunpack.c.l.b16 %v1605
    %v1614 = vunpack.c.l.b16 %v1606
    %v1615 = vunpack.c.l.b16 %v1607
    %v1616 = vpack.c.b16 %v1613, %v1612
    %v1617 = vpack.c.b16 %v1615, %v1614
    %v1621 = vsel %vm48, %v1602, 0
    %1623 = vmatprep.subr.bf16.mxu0 0
    %1624 = vmatpush1.bf16.msra.mxu0 %v1616
    %1625 = vmatprep.subr.bf16.mxu0 0
    %1626 = vmatpush1.bf16.msra.mxu0 %v1617
    %1627 = vmatprep.subr.bf16.mxu0 0
    %1628 = vmatpush1.bf16.msra.mxu0 0
    %1629 = vmatprep.subr.bf16.mxu0 0
    %1630 = vmatpush1.bf16.msra.mxu0 0
    %1631 = vmatprep.subr.bf16.mxu0 0
    %1632 = vmatpush1.bf16.msra.mxu0 0
    %1633 = vmatprep.subr.bf16.mxu0 0
    %1634 = vmatpush1.bf16.msra.mxu0 0
    %1635 = vmatprep.subr.bf16.mxu0 0
    %1636 = vmatpush1.bf16.msra.mxu0 0
    %1637 = vmatprep.subr.bf16.mxu0 0
    %1638 = vmatpush1.bf16.msra.mxu0 0
    %1639 = vmatprep.subr.bf16.mxu0 0
    %1640 = vmatpush1.bf16.msra.mxu0 0
    %1641 = vmatprep.subr.bf16.mxu0 0
    %1642 = vmatpush1.bf16.msra.mxu0 0
    %1643 = vmatprep.subr.bf16.mxu0 0
    %1644 = vmatpush1.bf16.msra.mxu0 0
    %1645 = vmatprep.subr.bf16.mxu0 0
    %1646 = vmatpush1.bf16.msra.mxu0 0
    %1647 = vmatprep.subr.bf16.mxu0 0
    %1648 = vmatpush1.bf16.msra.mxu0 0
    %1649 = vmatprep.subr.bf16.mxu0 0
    %1650 = vmatpush1.bf16.msra.mxu0 0
    %1651 = vmatprep.subr.bf16.mxu0 0
    %1652 = vmatpush1.bf16.msra.mxu0 0
    %1653 = vmatprep.subr.bf16.mxu0 0
    %1654 = vmatpush1.bf16.msra.mxu0 0
    %1655 = vmatprep.mubr.bf16.mxu0 0
    %1656 = vmatmul.mubr.bf16.gmra.mrb[0].mxu0 %v1621
    %v1657 = vpop.f32.mrb[0].mxu0
    %v1658 = vadd.f32 0.0, %v1657
    %v1659 = vpop.f32.mrb[0].mxu0
    %v1660 = vpop.f32.mrb[0].mxu0
    %v1661 = vadd.f32 0.0, %v1660
    %v1662 = vpop.f32.mrb[0].mxu0
    %1663 = vdwg.mxu0
    %v1664 = vadd.f32 %v1598, %v1658
    %v1665 = vadd.f32 %v1599, %v1661
    %v1666 = vld [vmem:[#allocation2 + $0x2] sm:$0xff]
    %v1667 = vld [vmem:[%s50 + $0x2] sm:$0xff]
    %v1668 = vpack.c.bf16 %v1667, %v1666
    %s1669 = scalar_lea.vmem [#allocation6], 384
    %v1670 = vld [vmem:[%s1669] sm:$0xf]
    %v1671 = vld [vmem:[%s1669 + $0x4] sm:$0xf]
    %v1672 = vld [vmem:[%s1669 + $0x8] sm:$0xf]
    %v1673 = vld [vmem:[%s1669 + $0xc] sm:$0xf]
    %v1678 = vunpack.c.l.b16 %v1670
    %v1679 = vunpack.c.l.b16 %v1671
    %v1680 = vunpack.c.l.b16 %v1672
    %v1681 = vunpack.c.l.b16 %v1673
    %v1682 = vpack.c.b16 %v1679, %v1678
    %v1683 = vpack.c.b16 %v1681, %v1680
    %v1687 = vsel %vm48, %v1668, 0
    %1689 = vmatprep.subr.bf16.mxu0 0
    %1690 = vmatpush1.bf16.msra.mxu0 %v1682
    %1691 = vmatprep.subr.bf16.mxu0 0
    %1692 = vmatpush1.bf16.msra.mxu0 %v1683
    %1693 = vmatprep.subr.bf16.mxu0 0
    %1694 = vmatpush1.bf16.msra.mxu0 0
    %1695 = vmatprep.subr.bf16.mxu0 0
    %1696 = vmatpush1.bf16.msra.mxu0 0
    %1697 = vmatprep.subr.bf16.mxu0 0
    %1698 = vmatpush1.bf16.msra.mxu0 0
    %1699 = vmatprep.subr.bf16.mxu0 0
    %1700 = vmatpush1.bf16.msra.mxu0 0
    %1701 = vmatprep.subr.bf16.mxu0 0
    %1702 = vmatpush1.bf16.msra.mxu0 0
    %1703 = vmatprep.subr.bf16.mxu0 0
    %1704 = vmatpush1.bf16.msra.mxu0 0
    %1705 = vmatprep.subr.bf16.mxu0 0
    %1706 = vmatpush1.bf16.msra.mxu0 0
    %1707 = vmatprep.subr.bf16.mxu0 0
    %1708 = vmatpush1.bf16.msra.mxu0 0
    %1709 = vmatprep.subr.bf16.mxu0 0
    %1710 = vmatpush1.bf16.msra.mxu0 0
    %1711 = vmatprep.subr.bf16.mxu0 0
    %1712 = vmatpush1.bf16.msra.mxu0 0
    %1713 = vmatprep.subr.bf16.mxu0 0
    %1714 = vmatpush1.bf16.msra.mxu0 0
    %1715 = vmatprep.subr.bf16.mxu0 0
    %1716 = vmatpush1.bf16.msra.mxu0 0
    %1717 = vmatprep.subr.bf16.mxu0 0
    %1718 = vmatpush1.bf16.msra.mxu0 0
    %1719 = vmatprep.subr.bf16.mxu0 0
    %1720 = vmatpush1.bf16.msra.mxu0 0
    %1721 = vmatprep.mubr.bf16.mxu0 0
    %1722 = vmatmul.mubr.bf16.gmra.mrb[0].mxu0 %v1687
    %v1723 = vpop.f32.mrb[0].mxu0
    %v1724 = vadd.f32 0.0, %v1723
    %v1725 = vpop.f32.mrb[0].mxu0
    %v1726 = vpop.f32.mrb[0].mxu0
    %v1727 = vadd.f32 0.0, %v1726
    %v1728 = vpop.f32.mrb[0].mxu0
    %1729 = vdwg.mxu0
    %v1730 = vadd.f32 %v1664, %v1724
    %v1731 = vadd.f32 %v1665, %v1727
    %v1732 = vld [vmem:[#allocation2 + $0x3] sm:$0xff]
    %v1733 = vld [vmem:[%s50 + $0x3] sm:$0xff]
    %v1734 = vpack.c.bf16 %v1733, %v1732
    %s1735 = scalar_lea.vmem [#allocation6], 400
    %v1736 = vld [vmem:[%s1735] sm:$0xf]
    %v1737 = vld [vmem:[%s1735 + $0x4] sm:$0xf]
    %v1738 = vld [vmem:[%s1735 + $0x8] sm:$0xf]
    %v1739 = vld [vmem:[%s1735 + $0xc] sm:$0xf]
    %v1744 = vunpack.c.l.b16 %v1736
    %v1745 = vunpack.c.l.b16 %v1737
    %v1746 = vunpack.c.l.b16 %v1738
    %v1747 = vunpack.c.l.b16 %v1739
    %v1748 = vpack.c.b16 %v1745, %v1744
    %v1749 = vpack.c.b16 %v1747, %v1746
    %v1753 = vsel %vm48, %v1734, 0
    %1755 = vmatprep.subr.bf16.mxu0 0
    %1756 = vmatpush1.bf16.msra.mxu0 %v1748
    %1757 = vmatprep.subr.bf16.mxu0 0
    %1758 = vmatpush1.bf16.msra.mxu0 %v1749
    %1759 = vmatprep.subr.bf16.mxu0 0
    %1760 = vmatpush1.bf16.msra.mxu0 0
    %1761 = vmatprep.subr.bf16.mxu0 0
    %1762 = vmatpush1.bf16.msra.mxu0 0
    %1763 = vmatprep.subr.bf16.mxu0 0
    %1764 = vmatpush1.bf16.msra.mxu0 0
    %1765 = vmatprep.subr.bf16.mxu0 0
    %1766 = vmatpush1.bf16.msra.mxu0 0
    %1767 = vmatprep.subr.bf16.mxu0 0
    %1768 = vmatpush1.bf16.msra.mxu0 0
    %1769 = vmatprep.subr.bf16.mxu0 0
    %1770 = vmatpush1.bf16.msra.mxu0 0
    %1771 = vmatprep.subr.bf16.mxu0 0
    %1772 = vmatpush1.bf16.msra.mxu0 0
    %1773 = vmatprep.subr.bf16.mxu0 0
    %1774 = vmatpush1.bf16.msra.mxu0 0
    %1775 = vmatprep.subr.bf16.mxu0 0
    %1776 = vmatpush1.bf16.msra.mxu0 0
    %1777 = vmatprep.subr.bf16.mxu0 0
    %1778 = vmatpush1.bf16.msra.mxu0 0
    %1779 = vmatprep.subr.bf16.mxu0 0
    %1780 = vmatpush1.bf16.msra.mxu0 0
    %1781 = vmatprep.subr.bf16.mxu0 0
    %1782 = vmatpush1.bf16.msra.mxu0 0
    %1783 = vmatprep.subr.bf16.mxu0 0
    %1784 = vmatpush1.bf16.msra.mxu0 0
    %1785 = vmatprep.subr.bf16.mxu0 0
    %1786 = vmatpush1.bf16.msra.mxu0 0
    %1787 = vmatprep.mubr.bf16.mxu0 0
    %1788 = vmatmul.mubr.bf16.gmra.mrb[0].mxu0 %v1753
    %v1789 = vpop.f32.mrb[0].mxu0
    %v1790 = vadd.f32 0.0, %v1789
    %v1791 = vpop.f32.mrb[0].mxu0
    %v1792 = vpop.f32.mrb[0].mxu0
    %v1793 = vadd.f32 0.0, %v1792
    %v1794 = vpop.f32.mrb[0].mxu0
    %1795 = vdwg.mxu0
    %v1796 = vadd.f32 %v1730, %v1790
    %v1797 = vadd.f32 %v1731, %v1793
    %v1798 = vld [vmem:[#allocation2 + $0x4] sm:$0xff]
    %v1799 = vld [vmem:[%s50 + $0x4] sm:$0xff]
    %v1800 = vpack.c.bf16 %v1799, %v1798
    %s1801 = scalar_lea.vmem [#allocation6], 416
    %v1802 = vld [vmem:[%s1801] sm:$0xf]
    %v1803 = vld [vmem:[%s1801 + $0x4] sm:$0xf]
    %v1804 = vld [vmem:[%s1801 + $0x8] sm:$0xf]
    %v1805 = vld [vmem:[%s1801 + $0xc] sm:$0xf]
    %v1810 = vunpack.c.l.b16 %v1802
    %v1811 = vunpack.c.l.b16 %v1803
    %v1812 = vunpack.c.l.b16 %v1804
    %v1813 = vunpack.c.l.b16 %v1805
    %v1814 = vpack.c.b16 %v1811, %v1810
    %v1815 = vpack.c.b16 %v1813, %v1812
    %v1819 = vsel %vm48, %v1800, 0
    %1821 = vmatprep.subr.bf16.mxu0 0
    %1822 = vmatpush1.bf16.msra.mxu0 %v1814
    %1823 = vmatprep.subr.bf16.mxu0 0
    %1824 = vmatpush1.bf16.msra.mxu0 %v1815
    %1825 = vmatprep.subr.bf16.mxu0 0
    %1826 = vmatpush1.bf16.msra.mxu0 0
    %1827 = vmatprep.subr.bf16.mxu0 0
    %1828 = vmatpush1.bf16.msra.mxu0 0
    %1829 = vmatprep.subr.bf16.mxu0 0
    %1830 = vmatpush1.bf16.msra.mxu0 0
    %1831 = vmatprep.subr.bf16.mxu0 0
    %1832 = vmatpush1.bf16.msra.mxu0 0
    %1833 = vmatprep.subr.bf16.mxu0 0
    %1834 = vmatpush1.bf16.msra.mxu0 0
    %1835 = vmatprep.subr.bf16.mxu0 0
    %1836 = vmatpush1.bf16.msra.mxu0 0
    %1837 = vmatprep.subr.bf16.mxu0 0
    %1838 = vmatpush1.bf16.msra.mxu0 0
    %1839 = vmatprep.subr.bf16.mxu0 0
    %1840 = vmatpush1.bf16.msra.mxu0 0
    %1841 = vmatprep.subr.bf16.mxu0 0
    %1842 = vmatpush1.bf16.msra.mxu0 0
    %1843 = vmatprep.subr.bf16.mxu0 0
    %1844 = vmatpush1.bf16.msra.mxu0 0
    %1845 = vmatprep.subr.bf16.mxu0 0
    %1846 = vmatpush1.bf16.msra.mxu0 0
    %1847 = vmatprep.subr.bf16.mxu0 0
    %1848 = vmatpush1.bf16.msra.mxu0 0
    %1849 = vmatprep.subr.bf16.mxu0 0
    %1850 = vmatpush1.bf16.msra.mxu0 0
    %1851 = vmatprep.subr.bf16.mxu0 0
    %1852 = vmatpush1.bf16.msra.mxu0 0
    %1853 = vmatprep.mubr.bf16.mxu0 0
    %1854 = vmatmul.mubr.bf16.gmra.mrb[0].mxu0 %v1819
    %v1855 = vpop.f32.mrb[0].mxu0
    %v1856 = vadd.f32 0.0, %v1855
    %v1857 = vpop.f32.mrb[0].mxu0
    %v1858 = vpop.f32.mrb[0].mxu0
    %v1859 = vadd.f32 0.0, %v1858
    %v1860 = vpop.f32.mrb[0].mxu0
    %1861 = vdwg.mxu0
    %v1862 = vadd.f32 %v1796, %v1856
    %v1863 = vadd.f32 %v1797, %v1859
    %v1864 = vld [vmem:[#allocation2 + $0x5] sm:$0xff]
    %v1865 = vld [vmem:[%s50 + $0x5] sm:$0xff]
    %v1866 = vpack.c.bf16 %v1865, %v1864
    %s1867 = scalar_lea.vmem [#allocation6], 432
    %v1868 = vld [vmem:[%s1867] sm:$0xf]
    %v1869 = vld [vmem:[%s1867 + $0x4] sm:$0xf]
    %v1870 = vld [vmem:[%s1867 + $0x8] sm:$0xf]
    %v1871 = vld [vmem:[%s1867 + $0xc] sm:$0xf]
    %v1876 = vunpack.c.l.b16 %v1868
    %v1877 = vunpack.c.l.b16 %v1869
    %v1878 = vunpack.c.l.b16 %v1870
    %v1879 = vunpack.c.l.b16 %v1871
    %v1880 = vpack.c.b16 %v1877, %v1876
    %v1881 = vpack.c.b16 %v1879, %v1878
    %v1885 = vsel %vm48, %v1866, 0
    %1887 = vmatprep.subr.bf16.mxu0 0
    %1888 = vmatpush1.bf16.msra.mxu0 %v1880
    %1889 = vmatprep.subr.bf16.mxu0 0
    %1890 = vmatpush1.bf16.msra.mxu0 %v1881
    %1891 = vmatprep.subr.bf16.mxu0 0
    %1892 = vmatpush1.bf16.msra.mxu0 0
    %1893 = vmatprep.subr.bf16.mxu0 0
    %1894 = vmatpush1.bf16.msra.mxu0 0
    %1895 = vmatprep.subr.bf16.mxu0 0
    %1896 = vmatpush1.bf16.msra.mxu0 0
    %1897 = vmatprep.subr.bf16.mxu0 0
    %1898 = vmatpush1.bf16.msra.mxu0 0
    %1899 = vmatprep.subr.bf16.mxu0 0
    %1900 = vmatpush1.bf16.msra.mxu0 0
    %1901 = vmatprep.subr.bf16.mxu0 0
    %1902 = vmatpush1.bf16.msra.mxu0 0
    %1903 = vmatprep.subr.bf16.mxu0 0
    %1904 = vmatpush1.bf16.msra.mxu0 0
    %1905 = vmatprep.subr.bf16.mxu0 0
    %1906 = vmatpush1.bf16.msra.mxu0 0
    %1907 = vmatprep.subr.bf16.mxu0 0
    %1908 = vmatpush1.bf16.msra.mxu0 0
    %1909 = vmatprep.subr.bf16.mxu0 0
    %1910 = vmatpush1.bf16.msra.mxu0 0
    %1911 = vmatprep.subr.bf16.mxu0 0
    %1912 = vmatpush1.bf16.msra.mxu0 0
    %1913 = vmatprep.subr.bf16.mxu0 0
    %1914 = vmatpush1.bf16.msra.mxu0 0
    %1915 = vmatprep.subr.bf16.mxu0 0
    %1916 = vmatpush1.bf16.msra.mxu0 0
    %1917 = vmatprep.subr.bf16.mxu0 0
    %1918 = vmatpush1.bf16.msra.mxu0 0
    %1919 = vmatprep.mubr.bf16.mxu0 0
    %1920 = vmatmul.mubr.bf16.gmra.mrb[0].mxu0 %v1885
    %v1921 = vpop.f32.mrb[0].mxu0
    %v1922 = vadd.f32 0.0, %v1921
    %v1923 = vpop.f32.mrb[0].mxu0
    %v1924 = vpop.f32.mrb[0].mxu0
    %v1925 = vadd.f32 0.0, %v1924
    %v1926 = vpop.f32.mrb[0].mxu0
    %1927 = vdwg.mxu0
    %v1928 = vadd.f32 %v1862, %v1922
    %v1929 = vadd.f32 %v1863, %v1925
    %v1930 = vld [vmem:[#allocation2 + $0x6] sm:$0xff]
    %v1931 = vld [vmem:[%s50 + $0x6] sm:$0xff]
    %v1932 = vpack.c.bf16 %v1931, %v1930
    %s1933 = scalar_lea.vmem [#allocation6], 448
    %v1934 = vld [vmem:[%s1933] sm:$0xf]
    %v1935 = vld [vmem:[%s1933 + $0x4] sm:$0xf]
    %v1936 = vld [vmem:[%s1933 + $0x8] sm:$0xf]
    %v1937 = vld [vmem:[%s1933 + $0xc] sm:$0xf]
    %v1942 = vunpack.c.l.b16 %v1934
    %v1943 = vunpack.c.l.b16 %v1935
    %v1944 = vunpack.c.l.b16 %v1936
    %v1945 = vunpack.c.l.b16 %v1937
    %v1946 = vpack.c.b16 %v1943, %v1942
    %v1947 = vpack.c.b16 %v1945, %v1944
    %v1951 = vsel %vm48, %v1932, 0
    %1953 = vmatprep.subr.bf16.mxu0 0
    %1954 = vmatpush1.bf16.msra.mxu0 %v1946
    %1955 = vmatprep.subr.bf16.mxu0 0
    %1956 = vmatpush1.bf16.msra.mxu0 %v1947
    %1957 = vmatprep.subr.bf16.mxu0 0
    %1958 = vmatpush1.bf16.msra.mxu0 0
    %1959 = vmatprep.subr.bf16.mxu0 0
    %1960 = vmatpush1.bf16.msra.mxu0 0
    %1961 = vmatprep.subr.bf16.mxu0 0
    %1962 = vmatpush1.bf16.msra.mxu0 0
    %1963 = vmatprep.subr.bf16.mxu0 0
    %1964 = vmatpush1.bf16.msra.mxu0 0
    %1965 = vmatprep.subr.bf16.mxu0 0
    %1966 = vmatpush1.bf16.msra.mxu0 0
    %1967 = vmatprep.subr.bf16.mxu0 0
    %1968 = vmatpush1.bf16.msra.mxu0 0
    %1969 = vmatprep.subr.bf16.mxu0 0
    %1970 = vmatpush1.bf16.msra.mxu0 0
    %1971 = vmatprep.subr.bf16.mxu0 0
    %1972 = vmatpush1.bf16.msra.mxu0 0
    %1973 = vmatprep.subr.bf16.mxu0 0
    %1974 = vmatpush1.bf16.msra.mxu0 0
    %1975 = vmatprep.subr.bf16.mxu0 0
    %1976 = vmatpush1.bf16.msra.mxu0 0
    %1977 = vmatprep.subr.bf16.mxu0 0
    %1978 = vmatpush1.bf16.msra.mxu0 0
    %1979 = vmatprep.subr.bf16.mxu0 0
    %1980 = vmatpush1.bf16.msra.mxu0 0
    %1981 = vmatprep.subr.bf16.mxu0 0
    %1982 = vmatpush1.bf16.msra.mxu0 0
    %1983 = vmatprep.subr.bf16.mxu0 0
    %1984 = vmatpush1.bf16.msra.mxu0 0
    %1985 = vmatprep.mubr.bf16.mxu0 0
    %1986 = vmatmul.mubr.bf16.gmra.mrb[0].mxu0 %v1951
    %v1987 = vpop.f32.mrb[0].mxu0
    %v1988 = vadd.f32 0.0, %v1987
    %v1989 = vpop.f32.mrb[0].mxu0
    %v1990 = vpop.f32.mrb[0].mxu0
    %v1991 = vadd.f32 0.0, %v1990
    %v1992 = vpop.f32.mrb[0].mxu0
    %1993 = vdwg.mxu0
    %v1994 = vadd.f32 %v1928, %v1988
    %v1995 = vadd.f32 %v1929, %v1991
    %v1996 = vld [vmem:[#allocation2 + $0x7] sm:$0xff]
    %v1997 = vld [vmem:[%s50 + $0x7] sm:$0xff]
    %v1998 = vpack.c.bf16 %v1997, %v1996
    %s1999 = scalar_lea.vmem [#allocation6], 464
    %v2000 = vld [vmem:[%s1999] sm:$0xf]
    %v2001 = vld [vmem:[%s1999 + $0x4] sm:$0xf]
    %v2002 = vld [vmem:[%s1999 + $0x8] sm:$0xf]
    %v2003 = vld [vmem:[%s1999 + $0xc] sm:$0xf]
    %v2008 = vunpack.c.l.b16 %v2000
    %v2009 = vunpack.c.l.b16 %v2001
    %v2010 = vunpack.c.l.b16 %v2002
    %v2011 = vunpack.c.l.b16 %v2003
    %v2012 = vpack.c.b16 %v2009, %v2008
    %v2013 = vpack.c.b16 %v2011, %v2010
    %v2017 = vsel %vm48, %v1998, 0
    %2019 = vmatprep.subr.bf16.mxu0 0
    %2020 = vmatpush1.bf16.msra.mxu0 %v2012
    %2021 = vmatprep.subr.bf16.mxu0 0
    %2022 = vmatpush1.bf16.msra.mxu0 %v2013
    %2023 = vmatprep.subr.bf16.mxu0 0
    %2024 = vmatpush1.bf16.msra.mxu0 0
    %2025 = vmatprep.subr.bf16.mxu0 0
    %2026 = vmatpush1.bf16.msra.mxu0 0
    %2027 = vmatprep.subr.bf16.mxu0 0
    %2028 = vmatpush1.bf16.msra.mxu0 0
    %2029 = vmatprep.subr.bf16.mxu0 0
    %2030 = vmatpush1.bf16.msra.mxu0 0
    %2031 = vmatprep.subr.bf16.mxu0 0
    %2032 = vmatpush1.bf16.msra.mxu0 0
    %2033 = vmatprep.subr.bf16.mxu0 0
    %2034 = vmatpush1.bf16.msra.mxu0 0
    %2035 = vmatprep.subr.bf16.mxu0 0
    %2036 = vmatpush1.bf16.msra.mxu0 0
    %2037 = vmatprep.subr.bf16.mxu0 0
    %2038 = vmatpush1.bf16.msra.mxu0 0
    %2039 = vmatprep.subr.bf16.mxu0 0
    %2040 = vmatpush1.bf16.msra.mxu0 0
    %2041 = vmatprep.subr.bf16.mxu0 0
    %2042 = vmatpush1.bf16.msra.mxu0 0
    %2043 = vmatprep.subr.bf16.mxu0 0
    %2044 = vmatpush1.bf16.msra.mxu0 0
    %2045 = vmatprep.subr.bf16.mxu0 0
    %2046 = vmatpush1.bf16.msra.mxu0 0
    %2047 = vmatprep.subr.bf16.mxu0 0
    %2048 = vmatpush1.bf16.msra.mxu0 0
    %2049 = vmatprep.subr.bf16.mxu0 0
    %2050 = vmatpush1.bf16.msra.mxu0 0
    %2051 = vmatprep.mubr.bf16.mxu0 0
    %2052 = vmatmul.mubr.bf16.gmra.mrb[0].mxu0 %v2017
    %v2053 = vpop.f32.mrb[0].mxu0
    %v2054 = vadd.f32 0.0, %v2053
    %v2055 = vpop.f32.mrb[0].mxu0
    %v2056 = vpop.f32.mrb[0].mxu0
    %v2057 = vadd.f32 0.0, %v2056
    %v2058 = vpop.f32.mrb[0].mxu0
    %2059 = vdwg.mxu0
    %v2060 = vadd.f32 %v1994, %v2054
    %v2061 = vadd.f32 %v1995, %v2057
    %v2062 = vld [vmem:[#allocation2 + $0x8] sm:$0xff]
    %v2063 = vld [vmem:[%s50 + $0x8] sm:$0xff]
    %v2064 = vpack.c.bf16 %v2063, %v2062
    %s2065 = scalar_lea.vmem [#allocation6], 480
    %v2066 = vld [vmem:[%s2065] sm:$0xf]
    %v2067 = vld [vmem:[%s2065 + $0x4] sm:$0xf]
    %v2068 = vld [vmem:[%s2065 + $0x8] sm:$0xf]
    %v2069 = vld [vmem:[%s2065 + $0xc] sm:$0xf]
    %v2074 = vunpack.c.l.b16 %v2066
    %v2075 = vunpack.c.l.b16 %v2067
    %v2076 = vunpack.c.l.b16 %v2068
    %v2077 = vunpack.c.l.b16 %v2069
    %v2078 = vpack.c.b16 %v2075, %v2074
    %v2079 = vpack.c.b16 %v2077, %v2076
    %v2083 = vsel %vm48, %v2064, 0
    %2085 = vmatprep.subr.bf16.mxu0 0
    %2086 = vmatpush1.bf16.msra.mxu0 %v2078
    %2087 = vmatprep.subr.bf16.mxu0 0
    %2088 = vmatpush1.bf16.msra.mxu0 %v2079
    %2089 = vmatprep.subr.bf16.mxu0 0
    %2090 = vmatpush1.bf16.msra.mxu0 0
    %2091 = vmatprep.subr.bf16.mxu0 0
    %2092 = vmatpush1.bf16.msra.mxu0 0
    %2093 = vmatprep.subr.bf16.mxu0 0
    %2094 = vmatpush1.bf16.msra.mxu0 0
    %2095 = vmatprep.subr.bf16.mxu0 0
    %2096 = vmatpush1.bf16.msra.mxu0 0
    %2097 = vmatprep.subr.bf16.mxu0 0
    %2098 = vmatpush1.bf16.msra.mxu0 0
    %2099 = vmatprep.subr.bf16.mxu0 0
    %2100 = vmatpush1.bf16.msra.mxu0 0
    %2101 = vmatprep.subr.bf16.mxu0 0
    %2102 = vmatpush1.bf16.msra.mxu0 0
    %2103 = vmatprep.subr.bf16.mxu0 0
    %2104 = vmatpush1.bf16.msra.mxu0 0
    %2105 = vmatprep.subr.bf16.mxu0 0
    %2106 = vmatpush1.bf16.msra.mxu0 0
    %2107 = vmatprep.subr.bf16.mxu0 0
    %2108 = vmatpush1.bf16.msra.mxu0 0
    %2109 = vmatprep.subr.bf16.mxu0 0
    %2110 = vmatpush1.bf16.msra.mxu0 0
    %2111 = vmatprep.subr.bf16.mxu0 0
    %2112 = vmatpush1.bf16.msra.mxu0 0
    %2113 = vmatprep.subr.bf16.mxu0 0
    %2114 = vmatpush1.bf16.msra.mxu0 0
    %2115 = vmatprep.subr.bf16.mxu0 0
    %2116 = vmatpush1.bf16.msra.mxu0 0
    %2117 = vmatprep.mubr.bf16.mxu0 0
    %2118 = vmatmul.mubr.bf16.gmra.mrb[0].mxu0 %v2083
    %v2119 = vpop.f32.mrb[0].mxu0
    %v2120 = vadd.f32 0.0, %v2119
    %v2121 = vpop.f32.mrb[0].mxu0
    %v2122 = vpop.f32.mrb[0].mxu0
    %v2123 = vadd.f32 0.0, %v2122
    %v2124 = vpop.f32.mrb[0].mxu0
    %2125 = vdwg.mxu0
    %v2126 = vadd.f32 %v2060, %v2120
    %v2127 = vadd.f32 %v2061, %v2123
    %v2128 = vld [vmem:[#allocation2 + $0x9] sm:$0xff]
    %v2129 = vld [vmem:[%s50 + $0x9] sm:$0xff]
    %v2130 = vpack.c.bf16 %v2129, %v2128
    %s2131 = scalar_lea.vmem [#allocation6], 496
    %v2132 = vld [vmem:[%s2131] sm:$0xf]
    %v2133 = vld [vmem:[%s2131 + $0x4] sm:$0xf]
    %v2134 = vld [vmem:[%s2131 + $0x8] sm:$0xf]
    %v2135 = vld [vmem:[%s2131 + $0xc] sm:$0xf]
    %v2140 = vunpack.c.l.b16 %v2132
    %v2141 = vunpack.c.l.b16 %v2133
    %v2142 = vunpack.c.l.b16 %v2134
    %v2143 = vunpack.c.l.b16 %v2135
    %v2144 = vpack.c.b16 %v2141, %v2140
    %v2145 = vpack.c.b16 %v2143, %v2142
    %v2149 = vsel %vm48, %v2130, 0
    %2151 = vmatprep.subr.bf16.mxu0 0
    %2152 = vmatpush1.bf16.msra.mxu0 %v2144
    %2153 = vmatprep.subr.bf16.mxu0 0
    %2154 = vmatpush1.bf16.msra.mxu0 %v2145
    %2155 = vmatprep.subr.bf16.mxu0 0
    %2156 = vmatpush1.bf16.msra.mxu0 0
    %2157 = vmatprep.subr.bf16.mxu0 0
    %2158 = vmatpush1.bf16.msra.mxu0 0
    %2159 = vmatprep.subr.bf16.mxu0 0
    %2160 = vmatpush1.bf16.msra.mxu0 0
    %2161 = vmatprep.subr.bf16.mxu0 0
    %2162 = vmatpush1.bf16.msra.mxu0 0
    %2163 = vmatprep.subr.bf16.mxu0 0
    %2164 = vmatpush1.bf16.msra.mxu0 0
    %2165 = vmatprep.subr.bf16.mxu0 0
    %2166 = vmatpush1.bf16.msra.mxu0 0
    %2167 = vmatprep.subr.bf16.mxu0 0
    %2168 = vmatpush1.bf16.msra.mxu0 0
    %2169 = vmatprep.subr.bf16.mxu0 0
    %2170 = vmatpush1.bf16.msra.mxu0 0
    %2171 = vmatprep.subr.bf16.mxu0 0
    %2172 = vmatpush1.bf16.msra.mxu0 0
    %2173 = vmatprep.subr.bf16.mxu0 0
    %2174 = vmatpush1.bf16.msra.mxu0 0
    %2175 = vmatprep.subr.bf16.mxu0 0
    %2176 = vmatpush1.bf16.msra.mxu0 0
    %2177 = vmatprep.subr.bf16.mxu0 0
    %2178 = vmatpush1.bf16.msra.mxu0 0
    %2179 = vmatprep.subr.bf16.mxu0 0
    %2180 = vmatpush1.bf16.msra.mxu0 0
    %2181 = vmatprep.subr.bf16.mxu0 0
    %2182 = vmatpush1.bf16.msra.mxu0 0
    %2183 = vmatprep.mubr.bf16.mxu0 0
    %2184 = vmatmul.mubr.bf16.gmra.mrb[0].mxu0 %v2149
    %v2185 = vpop.f32.mrb[0].mxu0
    %v2186 = vadd.f32 0.0, %v2185
    %v2187 = vpop.f32.mrb[0].mxu0
    %v2188 = vpop.f32.mrb[0].mxu0
    %v2189 = vadd.f32 0.0, %v2188
    %v2190 = vpop.f32.mrb[0].mxu0
    %2191 = vdwg.mxu0
    %v2192 = vadd.f32 %v2126, %v2186
    %v2193 = vadd.f32 %v2127, %v2189
    %v2194 = vld [vmem:[#allocation2 + $0xa] sm:$0xff]
    %v2195 = vld [vmem:[%s50 + $0xa] sm:$0xff]
    %v2196 = vpack.c.bf16 %v2195, %v2194
    %s2197 = scalar_lea.vmem [#allocation6], 512
    %v2198 = vld [vmem:[%s2197] sm:$0xf]
    %v2199 = vld [vmem:[%s2197 + $0x4] sm:$0xf]
    %v2200 = vld [vmem:[%s2197 + $0x8] sm:$0xf]
    %v2201 = vld [vmem:[%s2197 + $0xc] sm:$0xf]
    %v2206 = vunpack.c.l.b16 %v2198
    %v2207 = vunpack.c.l.b16 %v2199
    %v2208 = vunpack.c.l.b16 %v2200
    %v2209 = vunpack.c.l.b16 %v2201
    %v2210 = vpack.c.b16 %v2207, %v2206
    %v2211 = vpack.c.b16 %v2209, %v2208
    %v2215 = vsel %vm48, %v2196, 0
    %2217 = vmatprep.subr.bf16.mxu0 0
    %2218 = vmatpush1.bf16.msra.mxu0 %v2210
    %2219 = vmatprep.subr.bf16.mxu0 0
    %2220 = vmatpush1.bf16.msra.mxu0 %v2211
    %2221 = vmatprep.subr.bf16.mxu0 0
    %2222 = vmatpush1.bf16.msra.mxu0 0
    %2223 = vmatprep.subr.bf16.mxu0 0
    %2224 = vmatpush1.bf16.msra.mxu0 0
    %2225 = vmatprep.subr.bf16.mxu0 0
    %2226 = vmatpush1.bf16.msra.mxu0 0
    %2227 = vmatprep.subr.bf16.mxu0 0
    %2228 = vmatpush1.bf16.msra.mxu0 0
    %2229 = vmatprep.subr.bf16.mxu0 0
    %2230 = vmatpush1.bf16.msra.mxu0 0
    %2231 = vmatprep.subr.bf16.mxu0 0
    %2232 = vmatpush1.bf16.msra.mxu0 0
    %2233 = vmatprep.subr.bf16.mxu0 0
    %2234 = vmatpush1.bf16.msra.mxu0 0
    %2235 = vmatprep.subr.bf16.mxu0 0
    %2236 = vmatpush1.bf16.msra.mxu0 0
    %2237 = vmatprep.subr.bf16.mxu0 0
    %2238 = vmatpush1.bf16.msra.mxu0 0
    %2239 = vmatprep.subr.bf16.mxu0 0
    %2240 = vmatpush1.bf16.msra.mxu0 0
    %2241 = vmatprep.subr.bf16.mxu0 0
    %2242 = vmatpush1.bf16.msra.mxu0 0
    %2243 = vmatprep.subr.bf16.mxu0 0
    %2244 = vmatpush1.bf16.msra.mxu0 0
    %2245 = vmatprep.subr.bf16.mxu0 0
    %2246 = vmatpush1.bf16.msra.mxu0 0
    %2247 = vmatprep.subr.bf16.mxu0 0
    %2248 = vmatpush1.bf16.msra.mxu0 0
    %2249 = vmatprep.mubr.bf16.mxu0 0
    %2250 = vmatmul.mubr.bf16.gmra.mrb[0].mxu0 %v2215
    %v2251 = vpop.f32.mrb[0].mxu0
    %v2252 = vadd.f32 0.0, %v2251
    %v2253 = vpop.f32.mrb[0].mxu0
    %v2254 = vpop.f32.mrb[0].mxu0
    %v2255 = vadd.f32 0.0, %v2254
    %v2256 = vpop.f32.mrb[0].mxu0
    %2257 = vdwg.mxu0
    %v2258 = vadd.f32 %v2192, %v2252
    %v2259 = vadd.f32 %v2193, %v2255
    %2260 = vst [vmem:[#allocation8] sm:$0xff] %v2258
    %s2261 = scalar_lea.vmem [#allocation8], 8
    %2262 = vst [vmem:[%s2261] sm:$0xff] %v2259
    // Predicated region
    $region22: #{landmark_embedding.1} parent=1 // pred_check
      _
    $region23: #{landmark_embedding.1} parent=1 // pred_check_branch
      %2264 = sbr.rel (0) target = $region25
    $region24: #{landmark_embedding.1} parent=1 // pred_region
      %s2266 = ssub.s32 256, 256
      %2267 = vsyncadd [#allocation5], %s2266
      %s2268 = sshll.u32 [#allocation8], 4
      %s2269 = int_to_ptr.vmem [resolvable:$true] %s2268
      %2274 = dma.vmem_to_hbm [thread:$0]  %s2269, 256, %s3, [#allocation5], 128, 128, 8
    $region25: #{landmark_embedding.1} parent=1 // pred_fallthru
      _
    // Predicated region
    $region26: #{landmark_embedding.1} parent=1 // pred_check
      _
    $region27: #{landmark_embedding.1} parent=1 // pred_check_branch
      %2276 = sbr.rel (0) target = $region29
    $region28: #{landmark_embedding.1} parent=1 // pred_region
      %2277 = dma.done [#allocation5], 256
    $region29: #{landmark_embedding.1} parent=1 // pred_fallthru
      _
    %2278 = vsyncpa [#allocation4], 1
    %2279 = vsyncpa [#allocation7], 1
    %2280 = vsyncpa [#allocation5], 1

</llo_original>
